<compile_context>
chip_gen: v5e
topology: v5e:2x2
jax: 0.10.0
libtpu: 0.0.40
codegen_flags: <defaults>
</compile_context>

<pallas_src>
import math
from functools import partial

import jax
import jax.numpy as jnp
from jax import lax
from jax.experimental import pallas as pl
from jax.experimental.pallas import tpu as pltpu

VMEM_LIMIT = 48 * 1024 * 1024   # explicit VMEM budget: fits v7x (64 MiB) as well as v5e/v6e
NEG_INF = -1e30                 # finite mask value (avoids exp(-inf)/0 NaNs on masked rows)


# ----------------------------- in-kernel helpers ----------------------------

def _layernorm(x, w, b, eps=1e-5):
    # x: (S, D) f32, w/b: (1, D) f32
    mu = jnp.mean(x, axis=-1, keepdims=True)
    xc = x - mu
    var = jnp.mean(xc * xc, axis=-1, keepdims=True)
    return xc * lax.rsqrt(var + eps) * w + b


def _gelu_exact(x):
    # nn.GELU(approximate='none')
    return 0.5 * x * (1.0 + lax.erf(x * (1.0 / math.sqrt(2.0))))


def _tile(n, target):
    # largest divisor of n that is <= target
    t = min(n, target)
    while n % t:
        t -= 1
    return t


# ------------------------------- Pallas kernels ------------------------------

def qkv_proj_kernel(x_ref, ln1w_ref, ln1b_ref, wqkv_ref, bqkv_ref,
                    q_ref, k_ref, v_ref):
    # x_ref: (1, ts, D) f32 ; wqkv_ref: (D, 3D) bf16 ; q/k/v_ref: (1, H, ts, dh) bf16
    x = x_ref[0]
    ts, D = x.shape
    n_heads, dh = q_ref.shape[1], q_ref.shape[3]

    a = _layernorm(x, ln1w_ref[...], ln1b_ref[...]).astype(jnp.bfloat16)
    qkv = jnp.dot(a, wqkv_ref[...], preferred_element_type=jnp.float32) + bqkv_ref[...]

    # split into head-major q/k/v with static lane slices (no in-kernel reshape/transpose)
    for h in range(n_heads):
        q_ref[0, h] = qkv[:, h * dh:(h + 1) * dh].astype(q_ref.dtype)
        k_ref[0, h] = qkv[:, D + h * dh:D + (h + 1) * dh].astype(k_ref.dtype)
        v_ref[0, h] = qkv[:, 2 * D + h * dh:2 * D + (h + 1) * dh].astype(v_ref.dtype)


def flash_attn_kernel(q_ref, k_ref, v_ref, o_ref, m_sc, l_sc, acc_sc):
    # q_ref: (1, H, tq, dh) bf16 ; k/v_ref: (1, H, tkv, dh) bf16 ; o_ref: (1, tq, D) bf16
    # Requires tq == tkv; kv blocks with ki > qi are fully masked by causality and are skipped.
    qi = pl.program_id(1)
    ki = pl.program_id(2)

    @pl.when(ki == 0)
    def _():
        m_sc[...] = jnp.full_like(m_sc, -jnp.inf)
        l_sc[...] = jnp.zeros_like(l_sc)
        acc_sc[...] = jnp.zeros_like(acc_sc)

    @pl.when(ki <= qi)          # skip fully-masked (above-diagonal) kv blocks entirely
    def _():
        qh = q_ref[0]                       # (H, tq, dh)  (1/sqrt(dh) already folded in)
        kh = k_ref[0]                       # (H, tkv, dh)
        vh = v_ref[0]
        n_heads, tq, dh = qh.shape
        tkv = kh.shape[1]

        # batched-head scores on the MXU, f32 accumulation
        s = jnp.einsum('hqd,hkd->hqk', qh, kh, preferred_element_type=jnp.float32)

        # causal mask generated in-kernel (only bites on the diagonal block ki == qi)
        q_pos = qi * tq + lax.broadcasted_iota(jnp.int32, (1, tq, tkv), 1)
        k_pos = ki * tkv + lax.broadcasted_iota(jnp.int32, (1, tq, tkv), 2)
        s = jnp.where(k_pos > q_pos, NEG_INF, s)

        # online softmax update
        m_prev = m_sc[...]                                         # (H, tq, 1)
        m_new = jnp.maximum(m_prev, jnp.max(s, axis=-1, keepdims=True))
        alpha = jnp.exp(m_prev - m_new)
        p = jnp.exp(s - m_new)                                     # (H, tq, tkv) f32
        l_sc[...] = alpha * l_sc[...] + jnp.sum(p, axis=-1, keepdims=True)
        acc_sc[...] = alpha * acc_sc[...] + jnp.einsum(
            'hqk,hkd->hqd', p.astype(vh.dtype), vh, preferred_element_type=jnp.float32)
        m_sc[...] = m_new

    @pl.when(ki == pl.num_programs(2) - 1)
    def _():
        n_heads, _, dh = acc_sc.shape
        out = acc_sc[...] * pl.reciprocal(l_sc[...], approx=True)   # (H, tq, dh) f32
        for h in range(n_heads):
            o_ref[0, :, h * dh:(h + 1) * dh] = out[h].astype(o_ref.dtype)


def gpt_post_kernel(x_ref, attn_ref, wo_ref, bo_ref, ln2w_ref, ln2b_ref,
                    wup_ref, bup_ref, wdn_ref, bdn_ref, out_ref):
    # x_ref: (1, ts, D) f32 residual stream ; attn_ref: (1, ts, D) bf16
    x = x_ref[0]
    attn = attn_ref[0]

    proj = jnp.dot(attn, wo_ref[...], preferred_element_type=jnp.float32) + bo_ref[...]
    x1 = x + proj                        # resid_attn_dropout is identity (p=0)

    m = _layernorm(x1, ln2w_ref[...], ln2b_ref[...]).astype(jnp.bfloat16)
    h = jnp.dot(m, wup_ref[...], preferred_element_type=jnp.float32) + bup_ref[...]
    h = _gelu_exact(h).astype(jnp.bfloat16)
    n = jnp.dot(h, wdn_ref[...], preferred_element_type=jnp.float32) + bdn_ref[...]

    out_ref[0] = x1 + n                  # resid_mlp_dropout is identity (p=0)


def lm_head_kernel(x_ref, lnfw_ref, lnfb_ref, wte_t_ref, out_ref):
    # x_ref: (1, ts, D) f32 ; wte_t_ref: (D, tv) bf16 ; out_ref: (1, ts, tv) f32
    x = x_ref[0]
    h = _layernorm(x, lnfw_ref[...], lnfb_ref[...]).astype(jnp.bfloat16)
    out_ref[0] = jnp.dot(h, wte_t_ref[...], preferred_element_type=jnp.float32)


# --------------------------------- wrappers ----------------------------------

def run_qkv_proj(x, ln1w, ln1b, wqkv, bqkv, *, n_heads, ts):
    B, S, D = x.shape
    dh = D // n_heads
    head_spec = pl.BlockSpec((1, n_heads, ts, dh), lambda b, s: (b, 0, s, 0))
    head_shape = jax.ShapeDtypeStruct((B, n_heads, S, dh), jnp.bfloat16)
    return pl.pallas_call(
        qkv_proj_kernel,
        grid=(B, S // ts),
        in_specs=[pl.BlockSpec((1, ts, D), lambda b, s: (b, s, 0)),
                  pl.BlockSpec((1, D), lambda b, s: (0, 0)),
                  pl.BlockSpec((1, D), lambda b, s: (0, 0)),
                  pl.BlockSpec((D, 3 * D), lambda b, s: (0, 0)),
                  pl.BlockSpec((1, 3 * D), lambda b, s: (0, 0))],
        out_specs=(head_spec, head_spec, head_spec),
        out_shape=(head_shape, head_shape, head_shape),
        compiler_params=pltpu.CompilerParams(
            dimension_semantics=("parallel", "parallel"),
            vmem_limit_bytes=VMEM_LIMIT),
    )(x, ln1w, ln1b, wqkv, bqkv)


def run_attention(q, k, v, *, d_model, tile):
    # tile is used for both q and kv blocks (required by the causal block-skip logic).
    B, H, S, dh = q.shape
    nt = S // tile

    # Fully-masked kv blocks (ki > qi) reuse the previously fetched block -> no wasted DMA.
    kv_map = lambda b, qi, ki: (b, 0, jnp.minimum(ki, qi), 0)

    return pl.pallas_call(
        flash_attn_kernel,
        grid=(B, nt, nt),
        in_specs=[pl.BlockSpec((1, H, tile, dh), lambda b, qi, ki: (b, 0, qi, 0)),
                  pl.BlockSpec((1, H, tile, dh), kv_map),
                  pl.BlockSpec((1, H, tile, dh), kv_map)],
        out_specs=pl.BlockSpec((1, tile, d_model), lambda b, qi, ki: (b, qi, 0)),
        out_shape=jax.ShapeDtypeStruct((B, S, d_model), jnp.bfloat16),
        scratch_shapes=[pltpu.VMEM((H, tile, 1), jnp.float32),    # m (running max)
                        pltpu.VMEM((H, tile, 1), jnp.float32),    # l (running denom)
                        pltpu.VMEM((H, tile, dh), jnp.float32)],  # acc
        compiler_params=pltpu.CompilerParams(
            dimension_semantics=("parallel", "parallel", "arbitrary"),
            vmem_limit_bytes=VMEM_LIMIT),
    )(q, k, v)


def run_post(x, attn, wo, bo, ln2w, ln2b, wup, bup, wdn, bdn, *, ts):
    B, S, D = x.shape
    RD = wup.shape[1]
    return pl.pallas_call(
        gpt_post_kernel,
        grid=(B, S // ts),
        in_specs=[pl.BlockSpec((1, ts, D), lambda b, s: (b, s, 0)),
                  pl.BlockSpec((1, ts, D), lambda b, s: (b, s, 0)),
                  pl.BlockSpec((D, D), lambda b, s: (0, 0)),
                  pl.BlockSpec((1, D), lambda b, s: (0, 0)),
                  pl.BlockSpec((1, D), lambda b, s: (0, 0)),
                  pl.BlockSpec((1, D), lambda b, s: (0, 0)),
                  pl.BlockSpec((D, RD), lambda b, s: (0, 0)),
                  pl.BlockSpec((1, RD), lambda b, s: (0, 0)),
                  pl.BlockSpec((RD, D), lambda b, s: (0, 0)),
                  pl.BlockSpec((1, D), lambda b, s: (0, 0))],
        out_specs=pl.BlockSpec((1, ts, D), lambda b, s: (b, s, 0)),
        out_shape=jax.ShapeDtypeStruct((B, S, D), jnp.float32),
        compiler_params=pltpu.CompilerParams(
            dimension_semantics=("parallel", "parallel"),
            vmem_limit_bytes=VMEM_LIMIT),
    )(x, attn, wo, bo, ln2w, ln2b, wup, bup, wdn, bdn)


def run_lm_head(x, lnfw, lnfb, wte_t, *, ts, tv):
    B, S, D = x.shape
    V = wte_t.shape[1]
    return pl.pallas_call(
        lm_head_kernel,
        grid=(B, S // ts, V // tv),
        in_specs=[pl.BlockSpec((1, ts, D), lambda b, s, vi: (b, s, 0)),
                  pl.BlockSpec((1, D), lambda b, s, vi: (0, 0)),
                  pl.BlockSpec((1, D), lambda b, s, vi: (0, 0)),
                  pl.BlockSpec((D, tv), lambda b, s, vi: (0, vi))],
        out_specs=pl.BlockSpec((1, ts, tv), lambda b, s, vi: (b, s, vi)),
        out_shape=jax.ShapeDtypeStruct((B, S, V), jnp.float32),
        compiler_params=pltpu.CompilerParams(
            dimension_semantics=("parallel", "parallel", "parallel"),
            vmem_limit_bytes=VMEM_LIMIT),
    )(x, lnfw, lnfb, wte_t)


# ----------------------------- parameter init --------------------------------

def init_params(key, cfg):
    D, L, H = cfg["d_model"], cfg["n_layers"], cfg["n_heads"]
    V, MS, R = cfg["vocab_size"], cfg["max_seq_len"], cfg["mlp_ratio"]
    std = cfg["init_std"]
    resid_std = std / math.sqrt(2 * L)           # _is_residual modules (out_proj, mlp_down)
    dh = D // H
    scale = 1.0 / math.sqrt(dh)                  # torch MHA q-scaling, folded into the weights

    keys = jax.random.split(key, 2 + L)
    wte = (std * jax.random.normal(keys[0], (V, D), jnp.float32)).astype(jnp.bfloat16)
    wpe = (std * jax.random.normal(keys[1], (MS, D), jnp.float32)).astype(jnp.bfloat16)

    blocks = []
    for l in range(L):
        k1, k2, k3, k4 = jax.random.split(keys[2 + l], 4)
        wqkv = std * jax.random.normal(k1, (3 * D, D), jnp.float32)        # in_proj_weight
        wo = resid_std * jax.random.normal(k2, (D, D), jnp.float32)        # out_proj (residual)
        wup = std * jax.random.normal(k3, (R * D, D), jnp.float32)         # mlp_up
        wdn = resid_std * jax.random.normal(k4, (D, R * D), jnp.float32)   # mlp_down (residual)

        wqkv_t = wqkv.T                                                     # (D, 3D): x @ W
        bqkv = jnp.zeros((1, 3 * D), jnp.float32)
        wqkv_t = wqkv_t.at[:, :D].multiply(scale)    # fold 1/sqrt(dh) into the Q projection
        bqkv = bqkv.at[:, :D].multiply(scale)

        blocks.append((
            jnp.ones((1, D), jnp.float32), jnp.zeros((1, D), jnp.float32),      # ln_1 w, b
            wqkv_t.astype(jnp.bfloat16), bqkv,                                   # qkv (pre-T, bf16)
            wo.T.astype(jnp.bfloat16), jnp.zeros((1, D), jnp.float32),           # out proj
            jnp.ones((1, D), jnp.float32), jnp.zeros((1, D), jnp.float32),      # ln_2 w, b
            wup.T.astype(jnp.bfloat16), jnp.zeros((1, R * D), jnp.float32),      # mlp_up
            wdn.T.astype(jnp.bfloat16), jnp.zeros((1, D), jnp.float32),          # mlp_down
        ))
    lnfw = jnp.ones((1, D), jnp.float32)
    lnfb = jnp.zeros((1, D), jnp.float32)
    wte_t = wte.T                                    # tied LM head weight, (D, V) bf16
    return wte, wpe, blocks, lnfw, lnfb, wte_t


# -------------------------------- full forward --------------------------------

def mosaic_gpt_forward(input_ids, params, *, n_heads):
    wte, wpe, blocks, lnfw, lnfb, wte_t = params
    B, S = input_ids.shape
    D = wte.shape[1]

    # Glue: token + learned position embeddings (alibi=False). emb_drop is identity (p=0).
    x = (wte[input_ids].astype(jnp.float32) +
         wpe[jnp.arange(S)][None, :, :].astype(jnp.float32))

    ts = _tile(S, 256)               # sequence tile for projections / MLP / LM head
    ta = _tile(S, 128)               # q / kv tile for flash attention (must be equal for skip)
    tv = _tile(wte_t.shape[1], 2048)  # vocab tile for the LM head

    for blk in blocks:
        (ln1w, ln1b, wqkv, bqkv, wo, bo, ln2w, ln2b, wup, bup, wdn, bdn) = blk
        q, k, v = run_qkv_proj(x, ln1w, ln1b, wqkv, bqkv, n_heads=n_heads, ts=ts)
        attn = run_attention(q, k, v, d_model=D, tile=ta)
        x = run_post(x, attn, wo, bo, ln2w, ln2b, wup, bup, wdn, bdn, ts=ts)

    # ln_f + tied-embedding LM head (logits = ln_f(x) @ wte.T), vocab-tiled
    return run_lm_head(x, lnfw, lnfb, wte_t, ts=ts, tv=tv)


# ------------------------------------ main ------------------------------------

if __name__ == "__main__":
    cfg = dict(d_model=32, n_heads=4, n_layers=2, vocab_size=128,
               max_seq_len=16, mlp_ratio=4, init_std=0.02)

    key = jax.random.PRNGKey(0)
    pkey, dkey = jax.random.split(key)
    params = init_params(pkey, cfg)

    B, S = 2, 8
    input_ids = jax.random.randint(dkey, (B, S), 0, cfg["vocab_size"], dtype=jnp.int32)

    # TODO(synk): flash/triton attn_impl variants, alibi bias, key_padding_mask handling, and
    # nonzero dropout paths are not modeled (reference config: attn_impl='torch', alibi=False,
    # all dropout p=0, no padding).
    fwd = jax.jit(partial(mosaic_gpt_forward, n_heads=cfg["n_heads"]))
    logits = fwd(input_ids, params)
    jax.block_until_ready(logits)

    assert logits.shape == (B, S, cfg["vocab_size"]), logits.shape
    assert bool(jnp.all(jnp.isfinite(logits)))
    print("KERNEL_OK")
</pallas_src>

<mosaic_0001>
module attributes {stable_mosaic.version = 11 : i64} {
  func.func @lm_head_kernel(%arg0: i32, %arg1: i32, %arg2: i32, %arg3: memref<1x8x32xf32, #tpu.memory_space<vmem>>, %arg4: memref<1x32xf32, #tpu.memory_space<vmem>>, %arg5: memref<1x32xf32, #tpu.memory_space<vmem>>, %arg6: memref<32x128xbf16, #tpu.memory_space<vmem>>, %arg7: memref<1x8x128xf32, #tpu.memory_space<vmem>>) attributes {dimension_semantics = [#tpu.dimension_semantics<parallel>, #tpu.dimension_semantics<parallel>, #tpu.dimension_semantics<parallel>], iteration_bounds = array<i64: 2, 1, 1>, scalar_prefetch = 0 : i64, scratch_operands = 0 : i64, tpu.core_type = #tpu.core_type<tc>, window_params = [{transform_indices = @transform_0, window_bounds = array<i64: 1, 8, 32>}, {pipeline_mode = #tpu.pipeline_mode<synchronous>, transform_indices = @transform_1, window_bounds = array<i64: 1, 32>}, {pipeline_mode = #tpu.pipeline_mode<synchronous>, transform_indices = @transform_2, window_bounds = array<i64: 1, 32>}, {transform_indices = @transform_3, window_bounds = array<i64: 32, 128>}, {transform_indices = @transform_4, window_bounds = array<i64: 1, 8, 128>}]} {
    %c0 = arith.constant 0 : index
    %c0_0 = arith.constant 0 : index
    %c0_1 = arith.constant 0 : index
    %0 = vector.load %arg3[%c0, %c0_0, %c0_1] : memref<1x8x32xf32, #tpu.memory_space<vmem>>, vector<1x8x32xf32>
    %1 = vector.shape_cast %0 : vector<1x8x32xf32> to vector<8x32xf32>
    %c0_2 = arith.constant 0 : index
    %c0_3 = arith.constant 0 : index
    %2 = vector.load %arg4[%c0_2, %c0_3] : memref<1x32xf32, #tpu.memory_space<vmem>>, vector<1x32xf32>
    %c0_4 = arith.constant 0 : index
    %c0_5 = arith.constant 0 : index
    %3 = vector.load %arg5[%c0_4, %c0_5] : memref<1x32xf32, #tpu.memory_space<vmem>>, vector<1x32xf32>
    %cst = arith.constant dense<0.000000e+00> : vector<8xf32>
    %4 = vector.multi_reduction <add>, %1, %cst [1] : vector<8x32xf32> to vector<8xf32>
    %5 = vector.shape_cast %4 : vector<8xf32> to vector<8x1xf32>
    %cst_6 = arith.constant 3.200000e+01 : f32
    %6 = vector.broadcast %cst_6 : f32 to vector<8x1xf32>
    %7 = arith.divf %5, %6 : vector<8x1xf32>
    %8 = vector.broadcast %7 : vector<8x1xf32> to vector<8x32xf32>
    %9 = arith.subf %1, %8 : vector<8x32xf32>
    %10 = arith.mulf %9, %9 : vector<8x32xf32>
    %cst_7 = arith.constant dense<0.000000e+00> : vector<8xf32>
    %11 = vector.multi_reduction <add>, %10, %cst_7 [1] : vector<8x32xf32> to vector<8xf32>
    %12 = vector.shape_cast %11 : vector<8xf32> to vector<8x1xf32>
    %cst_8 = arith.constant 3.200000e+01 : f32
    %13 = vector.broadcast %cst_8 : f32 to vector<8x1xf32>
    %14 = arith.divf %12, %13 : vector<8x1xf32>
    %cst_9 = arith.constant 9.99999974E-6 : f32
    %15 = vector.broadcast %cst_9 : f32 to vector<8x1xf32>
    %16 = arith.addf %14, %15 : vector<8x1xf32>
    %17 = math.rsqrt %16 : vector<8x1xf32>
    %18 = vector.broadcast %17 : vector<8x1xf32> to vector<8x32xf32>
    %19 = arith.mulf %9, %18 : vector<8x32xf32>
    %20 = vector.broadcast %2 : vector<1x32xf32> to vector<8x32xf32>
    %21 = arith.mulf %19, %20 : vector<8x32xf32>
    %22 = vector.broadcast %3 : vector<1x32xf32> to vector<8x32xf32>
    %23 = arith.addf %21, %22 : vector<8x32xf32>
    %24 = arith.truncf %23 : vector<8x32xf32> to vector<8x32xbf16>
    %c0_10 = arith.constant 0 : index
    %c0_11 = arith.constant 0 : index
    %25 = vector.load %arg6[%c0_10, %c0_11] : memref<32x128xbf16, #tpu.memory_space<vmem>>, vector<32x128xbf16>
    %cst_12 = arith.constant dense<0.000000e+00> : vector<8x128xf32>
    %26 = tpu.matmul %24, %25, %cst_12 {dimension_numbers = #tpu.dot_dimension_numbers<[1], [0], [0], [1], [0, 0, 1, 1], [], []>} : vector<8x32xbf16>, vector<32x128xbf16>, vector<8x128xf32> -> vector<8x128xf32>
    %c0_13 = arith.constant 0 : index
    %c0_14 = arith.constant 0 : index
    %c0_15 = arith.constant 0 : index
    %27 = vector.load %arg7[%c0_13, %c0_14, %c0_15] : memref<1x8x128xf32, #tpu.memory_space<vmem>>, vector<1x8x128xf32>
    %28 = vector.shape_cast %27 : vector<1x8x128xf32> to vector<8x128xf32>
    %29 = vector.shape_cast %26 : vector<8x128xf32> to vector<1x8x128xf32>
    tpu.vector_store %arg7[%c0_13, %c0_14, %c0_15], %29 {strides = array<i32>} : memref<1x8x128xf32, #tpu.memory_space<vmem>>, vector<1x8x128xf32>,
    return
  }
  func.func @transform_0(%arg0: i32, %arg1: i32, %arg2: i32) -> (i32, i32, i32) {
    %c0_i32 = arith.constant 0 : i32
    %c0_i32_0 = arith.constant 0 : i32
    return %arg0, %arg1, %c0_i32 : i32, i32, i32
  }
  func.func @transform_1(%arg0: i32, %arg1: i32, %arg2: i32) -> (i32, i32) {
    %c0_i32 = arith.constant 0 : i32
    %c0_i32_0 = arith.constant 0 : i32
    %c0_i32_1 = arith.constant 0 : i32
    return %c0_i32, %c0_i32_0 : i32, i32
  }
  func.func @transform_2(%arg0: i32, %arg1: i32, %arg2: i32) -> (i32, i32) {
    %c0_i32 = arith.constant 0 : i32
    %c0_i32_0 = arith.constant 0 : i32
    %c0_i32_1 = arith.constant 0 : i32
    return %c0_i32, %c0_i32_0 : i32, i32
  }
  func.func @transform_3(%arg0: i32, %arg1: i32, %arg2: i32) -> (i32, i32) {
    %c0_i32 = arith.constant 0 : i32
    %c0_i32_0 = arith.constant 0 : i32
    return %c0_i32, %arg2 : i32, i32
  }
  func.func @transform_4(%arg0: i32, %arg1: i32, %arg2: i32) -> (i32, i32, i32) {
    %c0_i32 = arith.constant 0 : i32
    return %arg0, %arg1, %arg2 : i32, i32, i32
  }
}

module attributes {stable_mosaic.version = 11 : i64} {
  func.func @gpt_post_kernel(%arg0: i32, %arg1: i32, %arg2: memref<1x8x32xf32, #tpu.memory_space<vmem>>, %arg3: memref<1x8x32xbf16, #tpu.memory_space<vmem>>, %arg4: memref<32x32xbf16, #tpu.memory_space<vmem>>, %arg5: memref<1x32xf32, #tpu.memory_space<vmem>>, %arg6: memref<1x32xf32, #tpu.memory_space<vmem>>, %arg7: memref<1x32xf32, #tpu.memory_space<vmem>>, %arg8: memref<32x128xbf16, #tpu.memory_space<vmem>>, %arg9: memref<1x128xf32, #tpu.memory_space<vmem>>, %arg10: memref<128x32xbf16, #tpu.memory_space<vmem>>, %arg11: memref<1x32xf32, #tpu.memory_space<vmem>>, %arg12: memref<1x8x32xf32, #tpu.memory_space<vmem>>) attributes {dimension_semantics = [#tpu.dimension_semantics<parallel>, #tpu.dimension_semantics<parallel>], iteration_bounds = array<i64: 2, 1>, scalar_prefetch = 0 : i64, scratch_operands = 0 : i64, tpu.core_type = #tpu.core_type<tc>, window_params = [{transform_indices = @transform_0, window_bounds = array<i64: 1, 8, 32>}, {transform_indices = @transform_1, window_bounds = array<i64: 1, 8, 32>}, {pipeline_mode = #tpu.pipeline_mode<synchronous>, transform_indices = @transform_2, window_bounds = array<i64: 32, 32>}, {pipeline_mode = #tpu.pipeline_mode<synchronous>, transform_indices = @transform_3, window_bounds = array<i64: 1, 32>}, {pipeline_mode = #tpu.pipeline_mode<synchronous>, transform_indices = @transform_4, window_bounds = array<i64: 1, 32>}, {pipeline_mode = #tpu.pipeline_mode<synchronous>, transform_indices = @transform_5, window_bounds = array<i64: 1, 32>}, {pipeline_mode = #tpu.pipeline_mode<synchronous>, transform_indices = @transform_6, window_bounds = array<i64: 32, 128>}, {pipeline_mode = #tpu.pipeline_mode<synchronous>, transform_indices = @transform_7, window_bounds = array<i64: 1, 128>}, {pipeline_mode = #tpu.pipeline_mode<synchronous>, transform_indices = @transform_8, window_bounds = array<i64: 128, 32>}, {pipeline_mode = #tpu.pipeline_mode<synchronous>, transform_indices = @transform_9, window_bounds = array<i64: 1, 32>}, {transform_indices = @transform_10, window_bounds = array<i64: 1, 8, 32>}]} {
    %c0 = arith.constant 0 : index
    %c0_0 = arith.constant 0 : index
    %c0_1 = arith.constant 0 : index
    %0 = vector.load %arg2[%c0, %c0_0, %c0_1] : memref<1x8x32xf32, #tpu.memory_space<vmem>>, vector<1x8x32xf32>
    %1 = vector.shape_cast %0 : vector<1x8x32xf32> to vector<8x32xf32>
    %c0_2 = arith.constant 0 : index
    %c0_3 = arith.constant 0 : index
    %c0_4 = arith.constant 0 : index
    %2 = vector.load %arg3[%c0_2, %c0_3, %c0_4] : memref<1x8x32xbf16, #tpu.memory_space<vmem>>, vector<1x8x32xbf16>
    %3 = vector.shape_cast %2 : vector<1x8x32xbf16> to vector<8x32xbf16>
    %c0_5 = arith.constant 0 : index
    %c0_6 = arith.constant 0 : index
    %4 = vector.load %arg4[%c0_5, %c0_6] : memref<32x32xbf16, #tpu.memory_space<vmem>>, vector<32x32xbf16>
    %cst = arith.constant dense<0.000000e+00> : vector<8x32xf32>
    %5 = tpu.matmul %3, %4, %cst {dimension_numbers = #tpu.dot_dimension_numbers<[1], [0], [0], [1], [0, 0, 1, 1], [], []>} : vector<8x32xbf16>, vector<32x32xbf16>, vector<8x32xf32> -> vector<8x32xf32>
    %c0_7 = arith.constant 0 : index
    %c0_8 = arith.constant 0 : index
    %6 = vector.load %arg5[%c0_7, %c0_8] : memref<1x32xf32, #tpu.memory_space<vmem>>, vector<1x32xf32>
    %7 = vector.broadcast %6 : vector<1x32xf32> to vector<8x32xf32>
    %8 = arith.addf %5, %7 : vector<8x32xf32>
    %9 = arith.addf %1, %8 : vector<8x32xf32>
    %c0_9 = arith.constant 0 : index
    %c0_10 = arith.constant 0 : index
    %10 = vector.load %arg6[%c0_9, %c0_10] : memref<1x32xf32, #tpu.memory_space<vmem>>, vector<1x32xf32>
    %c0_11 = arith.constant 0 : index
    %c0_12 = arith.constant 0 : index
    %11 = vector.load %arg7[%c0_11, %c0_12] : memref<1x32xf32, #tpu.memory_space<vmem>>, vector<1x32xf32>
    %cst_13 = arith.constant dense<0.000000e+00> : vector<8xf32>
    %12 = vector.multi_reduction <add>, %9, %cst_13 [1] : vector<8x32xf32> to vector<8xf32>
    %13 = vector.shape_cast %12 : vector<8xf32> to vector<8x1xf32>
    %cst_14 = arith.constant 3.200000e+01 : f32
    %14 = vector.broadcast %cst_14 : f32 to vector<8x1xf32>
    %15 = arith.divf %13, %14 : vector<8x1xf32>
    %16 = vector.broadcast %15 : vector<8x1xf32> to vector<8x32xf32>
    %17 = arith.subf %9, %16 : vector<8x32xf32>
    %18 = arith.mulf %17, %17 : vector<8x32xf32>
    %cst_15 = arith.constant dense<0.000000e+00> : vector<8xf32>
    %19 = vector.multi_reduction <add>, %18, %cst_15 [1] : vector<8x32xf32> to vector<8xf32>
    %20 = vector.shape_cast %19 : vector<8xf32> to vector<8x1xf32>
    %cst_16 = arith.constant 3.200000e+01 : f32
    %21 = vector.broadcast %cst_16 : f32 to vector<8x1xf32>
    %22 = arith.divf %20, %21 : vector<8x1xf32>
    %cst_17 = arith.constant 9.99999974E-6 : f32
    %23 = vector.broadcast %cst_17 : f32 to vector<8x1xf32>
    %24 = arith.addf %22, %23 : vector<8x1xf32>
    %25 = math.rsqrt %24 : vector<8x1xf32>
    %26 = vector.broadcast %25 : vector<8x1xf32> to vector<8x32xf32>
    %27 = arith.mulf %17, %26 : vector<8x32xf32>
    %28 = vector.broadcast %10 : vector<1x32xf32> to vector<8x32xf32>
    %29 = arith.mulf %27, %28 : vector<8x32xf32>
    %30 = vector.broadcast %11 : vector<1x32xf32> to vector<8x32xf32>
    %31 = arith.addf %29, %30 : vector<8x32xf32>
    %32 = arith.truncf %31 : vector<8x32xf32> to vector<8x32xbf16>
    %c0_18 = arith.constant 0 : index
    %c0_19 = arith.constant 0 : index
    %33 = vector.load %arg8[%c0_18, %c0_19] : memref<32x128xbf16, #tpu.memory_space<vmem>>, vector<32x128xbf16>
    %cst_20 = arith.constant dense<0.000000e+00> : vector<8x128xf32>
    %34 = tpu.matmul %32, %33, %cst_20 {dimension_numbers = #tpu.dot_dimension_numbers<[1], [0], [0], [1], [0, 0, 1, 1], [], []>} : vector<8x32xbf16>, vector<32x128xbf16>, vector<8x128xf32> -> vector<8x128xf32>
    %c0_21 = arith.constant 0 : index
    %c0_22 = arith.constant 0 : index
    %35 = vector.load %arg9[%c0_21, %c0_22] : memref<1x128xf32, #tpu.memory_space<vmem>>, vector<1x128xf32>
    %36 = vector.broadcast %35 : vector<1x128xf32> to vector<8x128xf32>
    %37 = arith.addf %34, %36 : vector<8x128xf32>
    %cst_23 = arith.constant 5.000000e-01 : f32
    %38 = vector.broadcast %cst_23 : f32 to vector<8x128xf32>
    %39 = arith.mulf %38, %37 : vector<8x128xf32>
    %cst_24 = arith.constant 0.707106769 : f32
    %40 = vector.broadcast %cst_24 : f32 to vector<8x128xf32>
    %41 = arith.mulf %37, %40 : vector<8x128xf32>
    %42 = math.erf %41 : vector<8x128xf32>
    %cst_25 = arith.constant 1.000000e+00 : f32
    %43 = vector.broadcast %cst_25 : f32 to vector<8x128xf32>
    %44 = arith.addf %43, %42 : vector<8x128xf32>
    %45 = arith.mulf %39, %44 : vector<8x128xf32>
    %46 = arith.truncf %45 : vector<8x128xf32> to vector<8x128xbf16>
    %c0_26 = arith.constant 0 : index
    %c0_27 = arith.constant 0 : index
    %47 = vector.load %arg10[%c0_26, %c0_27] : memref<128x32xbf16, #tpu.memory_space<vmem>>, vector<128x32xbf16>
    %cst_28 = arith.constant dense<0.000000e+00> : vector<8x32xf32>
    %48 = tpu.matmul %46, %47, %cst_28 {dimension_numbers = #tpu.dot_dimension_numbers<[1], [0], [0], [1], [0, 0, 1, 1], [], []>} : vector<8x128xbf16>, vector<128x32xbf16>, vector<8x32xf32> -> vector<8x32xf32>
    %c0_29 = arith.constant 0 : index
    %c0_30 = arith.constant 0 : index
    %49 = vector.load %arg11[%c0_29, %c0_30] : memref<1x32xf32, #tpu.memory_space<vmem>>, vector<1x32xf32>
    %50 = vector.broadcast %49 : vector<1x32xf32> to vector<8x32xf32>
    %51 = arith.addf %48, %50 : vector<8x32xf32>
    %52 = arith.addf %9, %51 : vector<8x32xf32>
    %c0_31 = arith.constant 0 : index
    %c0_32 = arith.constant 0 : index
    %c0_33 = arith.constant 0 : index
    %53 = vector.load %arg12[%c0_31, %c0_32, %c0_33] : memref<1x8x32xf32, #tpu.memory_space<vmem>>, vector<1x8x32xf32>
    %54 = vector.shape_cast %53 : vector<1x8x32xf32> to vector<8x32xf32>
    %55 = vector.shape_cast %52 : vector<8x32xf32> to vector<1x8x32xf32>
    tpu.vector_store %arg12[%c0_31, %c0_32, %c0_33], %55 {strides = array<i32>} : memref<1x8x32xf32, #tpu.memory_space<vmem>>, vector<1x8x32xf32>,
    return
  }
  func.func @transform_0(%arg0: i32, %arg1: i32) -> (i32, i32, i32) {
    %c0_i32 = arith.constant 0 : i32
    %c0_i32_0 = arith.constant 0 : i32
    return %arg0, %arg1, %c0_i32 : i32, i32, i32
  }
  func.func @transform_1(%arg0: i32, %arg1: i32) -> (i32, i32, i32) {
    %c0_i32 = arith.constant 0 : i32
    %c0_i32_0 = arith.constant 0 : i32
    return %arg0, %arg1, %c0_i32 : i32, i32, i32
  }
  func.func @transform_2(%arg0: i32, %arg1: i32) -> (i32, i32) {
    %c0_i32 = arith.constant 0 : i32
    %c0_i32_0 = arith.constant 0 : i32
    %c0_i32_1 = arith.constant 0 : i32
    return %c0_i32, %c0_i32_0 : i32, i32
  }
  func.func @transform_3(%arg0: i32, %arg1: i32) -> (i32, i32) {
    %c0_i32 = arith.constant 0 : i32
    %c0_i32_0 = arith.constant 0 : i32
    %c0_i32_1 = arith.constant 0 : i32
    return %c0_i32, %c0_i32_0 : i32, i32
  }
  func.func @transform_4(%arg0: i32, %arg1: i32) -> (i32, i32) {
    %c0_i32 = arith.constant 0 : i32
    %c0_i32_0 = arith.constant 0 : i32
    %c0_i32_1 = arith.constant 0 : i32
    return %c0_i32, %c0_i32_0 : i32, i32
  }
  func.func @transform_5(%arg0: i32, %arg1: i32) -> (i32, i32) {
    %c0_i32 = arith.constant 0 : i32
    %c0_i32_0 = arith.constant 0 : i32
    %c0_i32_1 = arith.constant 0 : i32
    return %c0_i32, %c0_i32_0 : i32, i32
  }
  func.func @transform_6(%arg0: i32, %arg1: i32) -> (i32, i32) {
    %c0_i32 = arith.constant 0 : i32
    %c0_i32_0 = arith.constant 0 : i32
    %c0_i32_1 = arith.constant 0 : i32
    return %c0_i32, %c0_i32_0 : i32, i32
  }
  func.func @transform_7(%arg0: i32, %arg1: i32) -> (i32, i32) {
    %c0_i32 = arith.constant 0 : i32
    %c0_i32_0 = arith.constant 0 : i32
    %c0_i32_1 = arith.constant 0 : i32
    return %c0_i32, %c0_i32_0 : i32, i32
  }
  func.func @transform_8(%arg0: i32, %arg1: i32) -> (i32, i32) {
    %c0_i32 = arith.constant 0 : i32
    %c0_i32_0 = arith.constant 0 : i32
    %c0_i32_1 = arith.constant 0 : i32
    return %c0_i32, %c0_i32_0 : i32, i32
  }
  func.func @transform_9(%arg0: i32, %arg1: i32) -> (i32, i32) {
    %c0_i32 = arith.constant 0 : i32
    %c0_i32_0 = arith.constant 0 : i32
    %c0_i32_1 = arith.constant 0 : i32
    return %c0_i32, %c0_i32_0 : i32, i32
  }
  func.func @transform_10(%arg0: i32, %arg1: i32) -> (i32, i32, i32) {
    %c0_i32 = arith.constant 0 : i32
    %c0_i32_0 = arith.constant 0 : i32
    return %arg0, %arg1, %c0_i32 : i32, i32, i32
  }
}

module attributes {stable_mosaic.version = 11 : i64} {
  func.func @qkv_proj_kernel(%arg0: i32, %arg1: i32, %arg2: memref<1x8x32xf32, #tpu.memory_space<vmem>>, %arg3: memref<1x32xf32, #tpu.memory_space<vmem>>, %arg4: memref<1x32xf32, #tpu.memory_space<vmem>>, %arg5: memref<32x96xbf16, #tpu.memory_space<vmem>>, %arg6: memref<1x96xf32, #tpu.memory_space<vmem>>, %arg7: memref<1x4x8x8xbf16, #tpu.memory_space<vmem>>, %arg8: memref<1x4x8x8xbf16, #tpu.memory_space<vmem>>, %arg9: memref<1x4x8x8xbf16, #tpu.memory_space<vmem>>) attributes {dimension_semantics = [#tpu.dimension_semantics<parallel>, #tpu.dimension_semantics<parallel>], iteration_bounds = array<i64: 2, 1>, scalar_prefetch = 0 : i64, scratch_operands = 0 : i64, tpu.core_type = #tpu.core_type<tc>, window_params = [{transform_indices = @transform_0, window_bounds = array<i64: 1, 8, 32>}, {pipeline_mode = #tpu.pipeline_mode<synchronous>, transform_indices = @transform_1, window_bounds = array<i64: 1, 32>}, {pipeline_mode = #tpu.pipeline_mode<synchronous>, transform_indices = @transform_2, window_bounds = array<i64: 1, 32>}, {pipeline_mode = #tpu.pipeline_mode<synchronous>, transform_indices = @transform_3, window_bounds = array<i64: 32, 96>}, {pipeline_mode = #tpu.pipeline_mode<synchronous>, transform_indices = @transform_4, window_bounds = array<i64: 1, 96>}, {transform_indices = @transform_5, window_bounds = array<i64: 1, 4, 8, 8>}, {transform_indices = @transform_6, window_bounds = array<i64: 1, 4, 8, 8>}, {transform_indices = @transform_7, window_bounds = array<i64: 1, 4, 8, 8>}]} {
    %c0 = arith.constant 0 : index
    %c0_0 = arith.constant 0 : index
    %c0_1 = arith.constant 0 : index
    %0 = vector.load %arg2[%c0, %c0_0, %c0_1] : memref<1x8x32xf32, #tpu.memory_space<vmem>>, vector<1x8x32xf32>
    %1 = vector.shape_cast %0 : vector<1x8x32xf32> to vector<8x32xf32>
    %c0_2 = arith.constant 0 : index
    %c0_3 = arith.constant 0 : index
    %2 = vector.load %arg3[%c0_2, %c0_3] : memref<1x32xf32, #tpu.memory_space<vmem>>, vector<1x32xf32>
    %c0_4 = arith.constant 0 : index
    %c0_5 = arith.constant 0 : index
    %3 = vector.load %arg4[%c0_4, %c0_5] : memref<1x32xf32, #tpu.memory_space<vmem>>, vector<1x32xf32>
    %cst = arith.constant dense<0.000000e+00> : vector<8xf32>
    %4 = vector.multi_reduction <add>, %1, %cst [1] : vector<8x32xf32> to vector<8xf32>
    %5 = vector.shape_cast %4 : vector<8xf32> to vector<8x1xf32>
    %cst_6 = arith.constant 3.200000e+01 : f32
    %6 = vector.broadcast %cst_6 : f32 to vector<8x1xf32>
    %7 = arith.divf %5, %6 : vector<8x1xf32>
    %8 = vector.broadcast %7 : vector<8x1xf32> to vector<8x32xf32>
    %9 = arith.subf %1, %8 : vector<8x32xf32>
    %10 = arith.mulf %9, %9 : vector<8x32xf32>
    %cst_7 = arith.constant dense<0.000000e+00> : vector<8xf32>
    %11 = vector.multi_reduction <add>, %10, %cst_7 [1] : vector<8x32xf32> to vector<8xf32>
    %12 = vector.shape_cast %11 : vector<8xf32> to vector<8x1xf32>
    %cst_8 = arith.constant 3.200000e+01 : f32
    %13 = vector.broadcast %cst_8 : f32 to vector<8x1xf32>
    %14 = arith.divf %12, %13 : vector<8x1xf32>
    %cst_9 = arith.constant 9.99999974E-6 : f32
    %15 = vector.broadcast %cst_9 : f32 to vector<8x1xf32>
    %16 = arith.addf %14, %15 : vector<8x1xf32>
    %17 = math.rsqrt %16 : vector<8x1xf32>
    %18 = vector.broadcast %17 : vector<8x1xf32> to vector<8x32xf32>
    %19 = arith.mulf %9, %18 : vector<8x32xf32>
    %20 = vector.broadcast %2 : vector<1x32xf32> to vector<8x32xf32>
    %21 = arith.mulf %19, %20 : vector<8x32xf32>
    %22 = vector.broadcast %3 : vector<1x32xf32> to vector<8x32xf32>
    %23 = arith.addf %21, %22 : vector<8x32xf32>
    %24 = arith.truncf %23 : vector<8x32xf32> to vector<8x32xbf16>
    %c0_10 = arith.constant 0 : index
    %c0_11 = arith.constant 0 : index
    %25 = vector.load %arg5[%c0_10, %c0_11] : memref<32x96xbf16, #tpu.memory_space<vmem>>, vector<32x96xbf16>
    %cst_12 = arith.constant dense<0.000000e+00> : vector<8x96xf32>
    %26 = tpu.matmul %24, %25, %cst_12 {dimension_numbers = #tpu.dot_dimension_numbers<[1], [0], [0], [1], [0, 0, 1, 1], [], []>} : vector<8x32xbf16>, vector<32x96xbf16>, vector<8x96xf32> -> vector<8x96xf32>
    %c0_13 = arith.constant 0 : index
    %c0_14 = arith.constant 0 : index
    %27 = vector.load %arg6[%c0_13, %c0_14] : memref<1x96xf32, #tpu.memory_space<vmem>>, vector<1x96xf32>
    %28 = vector.broadcast %27 : vector<1x96xf32> to vector<8x96xf32>
    %29 = arith.addf %26, %28 : vector<8x96xf32>
    %30 = vector.extract_strided_slice %29 {offsets = [0, 0], sizes = [8, 8], strides = [1, 1]} : vector<8x96xf32> to vector<8x8xf32>
    %31 = arith.truncf %30 : vector<8x8xf32> to vector<8x8xbf16>
    %c0_15 = arith.constant 0 : index
    %c0_16 = arith.constant 0 : index
    %c0_17 = arith.constant 0 : index
    %c0_18 = arith.constant 0 : index
    %32 = vector.load %arg7[%c0_15, %c0_16, %c0_17, %c0_18] : memref<1x4x8x8xbf16, #tpu.memory_space<vmem>>, vector<1x1x8x8xbf16>
    %33 = vector.shape_cast %32 : vector<1x1x8x8xbf16> to vector<8x8xbf16>
    %34 = vector.shape_cast %31 : vector<8x8xbf16> to vector<1x1x8x8xbf16>
    tpu.vector_store %arg7[%c0_15, %c0_16, %c0_17, %c0_18], %34 {strides = array<i32>} : memref<1x4x8x8xbf16, #tpu.memory_space<vmem>>, vector<1x1x8x8xbf16>,
    %35 = vector.extract_strided_slice %29 {offsets = [0, 32], sizes = [8, 8], strides = [1, 1]} : vector<8x96xf32> to vector<8x8xf32>
    %36 = arith.truncf %35 : vector<8x8xf32> to vector<8x8xbf16>
    %c0_19 = arith.constant 0 : index
    %c0_20 = arith.constant 0 : index
    %c0_21 = arith.constant 0 : index
    %c0_22 = arith.constant 0 : index
    %37 = vector.load %arg8[%c0_19, %c0_20, %c0_21, %c0_22] : memref<1x4x8x8xbf16, #tpu.memory_space<vmem>>, vector<1x1x8x8xbf16>
    %38 = vector.shape_cast %37 : vector<1x1x8x8xbf16> to vector<8x8xbf16>
    %39 = vector.shape_cast %36 : vector<8x8xbf16> to vector<1x1x8x8xbf16>
    tpu.vector_store %arg8[%c0_19, %c0_20, %c0_21, %c0_22], %39 {strides = array<i32>} : memref<1x4x8x8xbf16, #tpu.memory_space<vmem>>, vector<1x1x8x8xbf16>,
    %40 = vector.extract_strided_slice %29 {offsets = [0, 64], sizes = [8, 8], strides = [1, 1]} : vector<8x96xf32> to vector<8x8xf32>
    %41 = arith.truncf %40 : vector<8x8xf32> to vector<8x8xbf16>
    %c0_23 = arith.constant 0 : index
    %c0_24 = arith.constant 0 : index
    %c0_25 = arith.constant 0 : index
    %c0_26 = arith.constant 0 : index
    %42 = vector.load %arg9[%c0_23, %c0_24, %c0_25, %c0_26] : memref<1x4x8x8xbf16, #tpu.memory_space<vmem>>, vector<1x1x8x8xbf16>
    %43 = vector.shape_cast %42 : vector<1x1x8x8xbf16> to vector<8x8xbf16>
    %44 = vector.shape_cast %41 : vector<8x8xbf16> to vector<1x1x8x8xbf16>
    tpu.vector_store %arg9[%c0_23, %c0_24, %c0_25, %c0_26], %44 {strides = array<i32>} : memref<1x4x8x8xbf16, #tpu.memory_space<vmem>>, vector<1x1x8x8xbf16>,
    %45 = vector.extract_strided_slice %29 {offsets = [0, 8], sizes = [8, 8], strides = [1, 1]} : vector<8x96xf32> to vector<8x8xf32>
    %46 = arith.truncf %45 : vector<8x8xf32> to vector<8x8xbf16>
    %c0_27 = arith.constant 0 : index
    %c1 = arith.constant 1 : index
    %c0_28 = arith.constant 0 : index
    %c0_29 = arith.constant 0 : index
    %47 = vector.load %arg7[%c0_27, %c1, %c0_28, %c0_29] : memref<1x4x8x8xbf16, #tpu.memory_space<vmem>>, vector<1x1x8x8xbf16>
    %48 = vector.shape_cast %47 : vector<1x1x8x8xbf16> to vector<8x8xbf16>
    %49 = vector.shape_cast %46 : vector<8x8xbf16> to vector<1x1x8x8xbf16>
    tpu.vector_store %arg7[%c0_27, %c1, %c0_28, %c0_29], %49 {strides = array<i32>} : memref<1x4x8x8xbf16, #tpu.memory_space<vmem>>, vector<1x1x8x8xbf16>,
    %50 = vector.extract_strided_slice %29 {offsets = [0, 40], sizes = [8, 8], strides = [1, 1]} : vector<8x96xf32> to vector<8x8xf32>
    %51 = arith.truncf %50 : vector<8x8xf32> to vector<8x8xbf16>
    %c0_30 = arith.constant 0 : index
    %c1_31 = arith.constant 1 : index
    %c0_32 = arith.constant 0 : index
    %c0_33 = arith.constant 0 : index
    %52 = vector.load %arg8[%c0_30, %c1_31, %c0_32, %c0_33] : memref<1x4x8x8xbf16, #tpu.memory_space<vmem>>, vector<1x1x8x8xbf16>
    %53 = vector.shape_cast %52 : vector<1x1x8x8xbf16> to vector<8x8xbf16>
    %54 = vector.shape_cast %51 : vector<8x8xbf16> to vector<1x1x8x8xbf16>
    tpu.vector_store %arg8[%c0_30, %c1_31, %c0_32, %c0_33], %54 {strides = array<i32>} : memref<1x4x8x8xbf16, #tpu.memory_space<vmem>>, vector<1x1x8x8xbf16>,
    %55 = vector.extract_strided_slice %29 {offsets = [0, 72], sizes = [8, 8], strides = [1, 1]} : vector<8x96xf32> to vector<8x8xf32>
    %56 = arith.truncf %55 : vector<8x8xf32> to vector<8x8xbf16>
    %c0_34 = arith.constant 0 : index
    %c1_35 = arith.constant 1 : index
    %c0_36 = arith.constant 0 : index
    %c0_37 = arith.constant 0 : index
    %57 = vector.load %arg9[%c0_34, %c1_35, %c0_36, %c0_37] : memref<1x4x8x8xbf16, #tpu.memory_space<vmem>>, vector<1x1x8x8xbf16>
    %58 = vector.shape_cast %57 : vector<1x1x8x8xbf16> to vector<8x8xbf16>
    %59 = vector.shape_cast %56 : vector<8x8xbf16> to vector<1x1x8x8xbf16>
    tpu.vector_store %arg9[%c0_34, %c1_35, %c0_36, %c0_37], %59 {strides = array<i32>} : memref<1x4x8x8xbf16, #tpu.memory_space<vmem>>, vector<1x1x8x8xbf16>,
    %60 = vector.extract_strided_slice %29 {offsets = [0, 16], sizes = [8, 8], strides = [1, 1]} : vector<8x96xf32> to vector<8x8xf32>
    %61 = arith.truncf %60 : vector<8x8xf32> to vector<8x8xbf16>
    %c0_38 = arith.constant 0 : index
    %c2 = arith.constant 2 : index
    %c0_39 = arith.constant 0 : index
    %c0_40 = arith.constant 0 : index
    %62 = vector.load %arg7[%c0_38, %c2, %c0_39, %c0_40] : memref<1x4x8x8xbf16, #tpu.memory_space<vmem>>, vector<1x1x8x8xbf16>
    %63 = vector.shape_cast %62 : vector<1x1x8x8xbf16> to vector<8x8xbf16>
    %64 = vector.shape_cast %61 : vector<8x8xbf16> to vector<1x1x8x8xbf16>
    tpu.vector_store %arg7[%c0_38, %c2, %c0_39, %c0_40], %64 {strides = array<i32>} : memref<1x4x8x8xbf16, #tpu.memory_space<vmem>>, vector<1x1x8x8xbf16>,
    %65 = vector.extract_strided_slice %29 {offsets = [0, 48], sizes = [8, 8], strides = [1, 1]} : vector<8x96xf32> to vector<8x8xf32>
    %66 = arith.truncf %65 : vector<8x8xf32> to vector<8x8xbf16>
    %c0_41 = arith.constant 0 : index
    %c2_42 = arith.constant 2 : index
    %c0_43 = arith.constant 0 : index
    %c0_44 = arith.constant 0 : index
    %67 = vector.load %arg8[%c0_41, %c2_42, %c0_43, %c0_44] : memref<1x4x8x8xbf16, #tpu.memory_space<vmem>>, vector<1x1x8x8xbf16>
    %68 = vector.shape_cast %67 : vector<1x1x8x8xbf16> to vector<8x8xbf16>
    %69 = vector.shape_cast %66 : vector<8x8xbf16> to vector<1x1x8x8xbf16>
    tpu.vector_store %arg8[%c0_41, %c2_42, %c0_43, %c0_44], %69 {strides = array<i32>} : memref<1x4x8x8xbf16, #tpu.memory_space<vmem>>, vector<1x1x8x8xbf16>,
    %70 = vector.extract_strided_slice %29 {offsets = [0, 80], sizes = [8, 8], strides = [1, 1]} : vector<8x96xf32> to vector<8x8xf32>
    %71 = arith.truncf %70 : vector<8x8xf32> to vector<8x8xbf16>
    %c0_45 = arith.constant 0 : index
    %c2_46 = arith.constant 2 : index
    %c0_47 = arith.constant 0 : index
    %c0_48 = arith.constant 0 : index
    %72 = vector.load %arg9[%c0_45, %c2_46, %c0_47, %c0_48] : memref<1x4x8x8xbf16, #tpu.memory_space<vmem>>, vector<1x1x8x8xbf16>
    %73 = vector.shape_cast %72 : vector<1x1x8x8xbf16> to vector<8x8xbf16>
    %74 = vector.shape_cast %71 : vector<8x8xbf16> to vector<1x1x8x8xbf16>
    tpu.vector_store %arg9[%c0_45, %c2_46, %c0_47, %c0_48], %74 {strides = array<i32>} : memref<1x4x8x8xbf16, #tpu.memory_space<vmem>>, vector<1x1x8x8xbf16>,
    %75 = vector.extract_strided_slice %29 {offsets = [0, 24], sizes = [8, 8], strides = [1, 1]} : vector<8x96xf32> to vector<8x8xf32>
    %76 = arith.truncf %75 : vector<8x8xf32> to vector<8x8xbf16>
    %c0_49 = arith.constant 0 : index
    %c3 = arith.constant 3 : index
    %c0_50 = arith.constant 0 : index
    %c0_51 = arith.constant 0 : index
    %77 = vector.load %arg7[%c0_49, %c3, %c0_50, %c0_51] : memref<1x4x8x8xbf16, #tpu.memory_space<vmem>>, vector<1x1x8x8xbf16>
    %78 = vector.shape_cast %77 : vector<1x1x8x8xbf16> to vector<8x8xbf16>
    %79 = vector.shape_cast %76 : vector<8x8xbf16> to vector<1x1x8x8xbf16>
    tpu.vector_store %arg7[%c0_49, %c3, %c0_50, %c0_51], %79 {strides = array<i32>} : memref<1x4x8x8xbf16, #tpu.memory_space<vmem>>, vector<1x1x8x8xbf16>,
    %80 = vector.extract_strided_slice %29 {offsets = [0, 56], sizes = [8, 8], strides = [1, 1]} : vector<8x96xf32> to vector<8x8xf32>
    %81 = arith.truncf %80 : vector<8x8xf32> to vector<8x8xbf16>
    %c0_52 = arith.constant 0 : index
    %c3_53 = arith.constant 3 : index
    %c0_54 = arith.constant 0 : index
    %c0_55 = arith.constant 0 : index
    %82 = vector.load %arg8[%c0_52, %c3_53, %c0_54, %c0_55] : memref<1x4x8x8xbf16, #tpu.memory_space<vmem>>, vector<1x1x8x8xbf16>
    %83 = vector.shape_cast %82 : vector<1x1x8x8xbf16> to vector<8x8xbf16>
    %84 = vector.shape_cast %81 : vector<8x8xbf16> to vector<1x1x8x8xbf16>
    tpu.vector_store %arg8[%c0_52, %c3_53, %c0_54, %c0_55], %84 {strides = array<i32>} : memref<1x4x8x8xbf16, #tpu.memory_space<vmem>>, vector<1x1x8x8xbf16>,
    %85 = vector.extract_strided_slice %29 {offsets = [0, 88], sizes = [8, 8], strides = [1, 1]} : vector<8x96xf32> to vector<8x8xf32>
    %86 = arith.truncf %85 : vector<8x8xf32> to vector<8x8xbf16>
    %c0_56 = arith.constant 0 : index
    %c3_57 = arith.constant 3 : index
    %c0_58 = arith.constant 0 : index
    %c0_59 = arith.constant 0 : index
    %87 = vector.load %arg9[%c0_56, %c3_57, %c0_58, %c0_59] : memref<1x4x8x8xbf16, #tpu.memory_space<vmem>>, vector<1x1x8x8xbf16>
    %88 = vector.shape_cast %87 : vector<1x1x8x8xbf16> to vector<8x8xbf16>
    %89 = vector.shape_cast %86 : vector<8x8xbf16> to vector<1x1x8x8xbf16>
    tpu.vector_store %arg9[%c0_56, %c3_57, %c0_58, %c0_59], %89 {strides = array<i32>} : memref<1x4x8x8xbf16, #tpu.memory_space<vmem>>, vector<1x1x8x8xbf16>,
    return
  }
  func.func @transform_0(%arg0: i32, %arg1: i32) -> (i32, i32, i32) {
    %c0_i32 = arith.constant 0 : i32
    %c0_i32_0 = arith.constant 0 : i32
    return %arg0, %arg1, %c0_i32 : i32, i32, i32
  }
  func.func @transform_1(%arg0: i32, %arg1: i32) -> (i32, i32) {
    %c0_i32 = arith.constant 0 : i32
    %c0_i32_0 = arith.constant 0 : i32
    %c0_i32_1 = arith.constant 0 : i32
    return %c0_i32, %c0_i32_0 : i32, i32
  }
  func.func @transform_2(%arg0: i32, %arg1: i32) -> (i32, i32) {
    %c0_i32 = arith.constant 0 : i32
    %c0_i32_0 = arith.constant 0 : i32
    %c0_i32_1 = arith.constant 0 : i32
    return %c0_i32, %c0_i32_0 : i32, i32
  }
  func.func @transform_3(%arg0: i32, %arg1: i32) -> (i32, i32) {
    %c0_i32 = arith.constant 0 : i32
    %c0_i32_0 = arith.constant 0 : i32
    %c0_i32_1 = arith.constant 0 : i32
    return %c0_i32, %c0_i32_0 : i32, i32
  }
  func.func @transform_4(%arg0: i32, %arg1: i32) -> (i32, i32) {
    %c0_i32 = arith.constant 0 : i32
    %c0_i32_0 = arith.constant 0 : i32
    %c0_i32_1 = arith.constant 0 : i32
    return %c0_i32, %c0_i32_0 : i32, i32
  }
  func.func @transform_5(%arg0: i32, %arg1: i32) -> (i32, i32, i32, i32) {
    %c0_i32 = arith.constant 0 : i32
    %c0_i32_0 = arith.constant 0 : i32
    %c0_i32_1 = arith.constant 0 : i32
    return %arg0, %c0_i32, %arg1, %c0_i32_0 : i32, i32, i32, i32
  }
  func.func @transform_6(%arg0: i32, %arg1: i32) -> (i32, i32, i32, i32) {
    %c0_i32 = arith.constant 0 : i32
    %c0_i32_0 = arith.constant 0 : i32
    %c0_i32_1 = arith.constant 0 : i32
    return %arg0, %c0_i32, %arg1, %c0_i32_0 : i32, i32, i32, i32
  }
  func.func @transform_7(%arg0: i32, %arg1: i32) -> (i32, i32, i32, i32) {
    %c0_i32 = arith.constant 0 : i32
    %c0_i32_0 = arith.constant 0 : i32
    %c0_i32_1 = arith.constant 0 : i32
    return %arg0, %c0_i32, %arg1, %c0_i32_0 : i32, i32, i32, i32
  }
}

module attributes {stable_mosaic.version = 11 : i64} {
  func.func @flash_attn_kernel(%arg0: i32, %arg1: i32, %arg2: i32, %arg3: memref<1x4x8x8xbf16, #tpu.memory_space<vmem>>, %arg4: memref<1x4x8x8xbf16, #tpu.memory_space<vmem>>, %arg5: memref<1x4x8x8xbf16, #tpu.memory_space<vmem>>, %arg6: memref<1x8x32xbf16, #tpu.memory_space<vmem>>, %arg7: memref<4x8x1xf32, #tpu.memory_space<vmem>>, %arg8: memref<4x8x1xf32, #tpu.memory_space<vmem>>, %arg9: memref<4x8x8xf32, #tpu.memory_space<vmem>>) attributes {dimension_semantics = [#tpu.dimension_semantics<parallel>, #tpu.dimension_semantics<parallel>, #tpu.dimension_semantics<arbitrary>], iteration_bounds = array<i64: 2, 1, 1>, scalar_prefetch = 0 : i64, scratch_operands = 3 : i64, tpu.core_type = #tpu.core_type<tc>, window_params = [{transform_indices = @transform_0, window_bounds = array<i64: 1, 4, 8, 8>}, {transform_indices = @transform_1, window_bounds = array<i64: 1, 4, 8, 8>}, {transform_indices = @transform_2, window_bounds = array<i64: 1, 4, 8, 8>}, {transform_indices = @transform_3, window_bounds = array<i64: 1, 8, 32>}]} {
    %c0_i32 = arith.constant 0 : i32
    %0 = arith.cmpi eq, %arg2, %c0_i32 : i32
    %1 = arith.extui %0 : i1 to i32
    %c0_i32_0 = arith.constant 0 : i32
    %2 = arith.cmpi ne, %1, %c0_i32_0 : i32
    scf.if %2 {
      %cst = arith.constant 0xFF800000 : f32
      %9 = vector.broadcast %cst : f32 to vector<4x8x1xf32>
      %c0 = arith.constant 0 : index
      %c0_4 = arith.constant 0 : index
      %c0_5 = arith.constant 0 : index
      %10 = vector.load %arg7[%c0, %c0_4, %c0_5] : memref<4x8x1xf32, #tpu.memory_space<vmem>>, vector<4x8x1xf32>
      tpu.vector_store %arg7[%c0, %c0_4, %c0_5], %9 {strides = array<i32>} : memref<4x8x1xf32, #tpu.memory_space<vmem>>, vector<4x8x1xf32>,
      %cst_6 = arith.constant 0.000000e+00 : f32
      %11 = vector.broadcast %cst_6 : f32 to vector<4x8x1xf32>
      %c0_7 = arith.constant 0 : index
      %c0_8 = arith.constant 0 : index
      %c0_9 = arith.constant 0 : index
      %12 = vector.load %arg8[%c0_7, %c0_8, %c0_9] : memref<4x8x1xf32, #tpu.memory_space<vmem>>, vector<4x8x1xf32>
      tpu.vector_store %arg8[%c0_7, %c0_8, %c0_9], %11 {strides = array<i32>} : memref<4x8x1xf32, #tpu.memory_space<vmem>>, vector<4x8x1xf32>,
      %cst_10 = arith.constant 0.000000e+00 : f32
      %13 = vector.broadcast %cst_10 : f32 to vector<4x8x8xf32>
      %c0_11 = arith.constant 0 : index
      %c0_12 = arith.constant 0 : index
      %c0_13 = arith.constant 0 : index
      %14 = vector.load %arg9[%c0_11, %c0_12, %c0_13] : memref<4x8x8xf32, #tpu.memory_space<vmem>>, vector<4x8x8xf32>
      tpu.vector_store %arg9[%c0_11, %c0_12, %c0_13], %13 {strides = array<i32>} : memref<4x8x8xf32, #tpu.memory_space<vmem>>, vector<4x8x8xf32>,
    } else {
    }
    %3 = arith.cmpi sle, %arg2, %arg1 : i32
    %4 = arith.extui %3 : i1 to i32
    %c0_i32_1 = arith.constant 0 : i32
    %5 = arith.cmpi ne, %4, %c0_i32_1 : i32
    scf.if %5 {
      %c0 = arith.constant 0 : index
      %c0_4 = arith.constant 0 : index
      %c0_5 = arith.constant 0 : index
      %c0_6 = arith.constant 0 : index
      %9 = vector.load %arg3[%c0, %c0_4, %c0_5, %c0_6] : memref<1x4x8x8xbf16, #tpu.memory_space<vmem>>, vector<1x4x8x8xbf16>
      %10 = vector.shape_cast %9 : vector<1x4x8x8xbf16> to vector<4x8x8xbf16>
      %c0_7 = arith.constant 0 : index
      %c0_8 = arith.constant 0 : index
      %c0_9 = arith.constant 0 : index
      %c0_10 = arith.constant 0 : index
      %11 = vector.load %arg4[%c0_7, %c0_8, %c0_9, %c0_10] : memref<1x4x8x8xbf16, #tpu.memory_space<vmem>>, vector<1x4x8x8xbf16>
      %12 = vector.shape_cast %11 : vector<1x4x8x8xbf16> to vector<4x8x8xbf16>
      %c0_11 = arith.constant 0 : index
      %c0_12 = arith.constant 0 : index
      %c0_13 = arith.constant 0 : index
      %c0_14 = arith.constant 0 : index
      %13 = vector.load %arg5[%c0_11, %c0_12, %c0_13, %c0_14] : memref<1x4x8x8xbf16, #tpu.memory_space<vmem>>, vector<1x4x8x8xbf16>
      %14 = vector.shape_cast %13 : vector<1x4x8x8xbf16> to vector<4x8x8xbf16>
      "tpu.trace_start"() <{level = 10 : i32, message = "hqd,hkd->hqk"}> : () -> ()
      %cst = arith.constant dense<0.000000e+00> : vector<4x8x8xf32>
      %15 = tpu.matmul %10, %12, %cst {dimension_numbers = #tpu.dot_dimension_numbers<[2], [2], [1], [1], [0, 0, 0, 1, 1, 1], [0], [0]>} : vector<4x8x8xbf16>, vector<4x8x8xbf16>, vector<4x8x8xf32> -> vector<4x8x8xf32>
      "tpu.trace_stop"() : () -> ()
      %c8_i32 = arith.constant 8 : i32
      %16 = arith.muli %arg1, %c8_i32 : i32
      %17 = tpu.iota {dimensions = array<i32: 1>} : vector<1x8x8xi32>
      %18 = vector.broadcast %16 : i32 to vector<1x8x8xi32>
      %19 = arith.addi %18, %17 : vector<1x8x8xi32>
      %c8_i32_15 = arith.constant 8 : i32
      %20 = arith.muli %arg2, %c8_i32_15 : i32
      %21 = tpu.iota {dimensions = array<i32: 2>} : vector<1x8x8xi32>
      %22 = vector.broadcast %20 : i32 to vector<1x8x8xi32>
      %23 = arith.addi %22, %21 : vector<1x8x8xi32>
      %24 = arith.cmpi sgt, %23, %19 : vector<1x8x8xi32>
      %cst_16 = arith.constant -1.000000e+30 : f32
      %25 = vector.shape_cast %24 : vector<1x8x8xi1> to vector<1x8x8xi1>
      %26 = vector.broadcast %25 : vector<1x8x8xi1> to vector<4x8x8xi1>
      %27 = vector.broadcast %cst_16 : f32 to vector<4x8x8xf32>
      %28 = arith.select %26, %27, %15 : vector<4x8x8xi1>, vector<4x8x8xf32>
      %c0_17 = arith.constant 0 : index
      %c0_18 = arith.constant 0 : index
      %c0_19 = arith.constant 0 : index
      %29 = vector.load %arg7[%c0_17, %c0_18, %c0_19] : memref<4x8x1xf32, #tpu.memory_space<vmem>>, vector<4x8x1xf32>
      %cst_20 = arith.constant dense<0xFF800000> : vector<4x8xf32>
      %30 = vector.multi_reduction <maximumf>, %28, %cst_20 [2] : vector<4x8x8xf32> to vector<4x8xf32>
      %31 = vector.shape_cast %30 : vector<4x8xf32> to vector<4x8x1xf32>
      %32 = arith.maximumf %29, %31 : vector<4x8x1xf32>
      %33 = arith.subf %29, %32 : vector<4x8x1xf32>
      %34 = math.exp %33 : vector<4x8x1xf32>
      %35 = vector.broadcast %32 : vector<4x8x1xf32> to vector<4x8x8xf32>
      %36 = arith.subf %28, %35 : vector<4x8x8xf32>
      %37 = math.exp %36 : vector<4x8x8xf32>
      %c0_21 = arith.constant 0 : index
      %c0_22 = arith.constant 0 : index
      %c0_23 = arith.constant 0 : index
      %38 = vector.load %arg8[%c0_21, %c0_22, %c0_23] : memref<4x8x1xf32, #tpu.memory_space<vmem>>, vector<4x8x1xf32>
      %39 = arith.mulf %34, %38 : vector<4x8x1xf32>
      %cst_24 = arith.constant dense<0.000000e+00> : vector<4x8xf32>
      %40 = vector.multi_reduction <add>, %37, %cst_24 [2] : vector<4x8x8xf32> to vector<4x8xf32>
      %41 = vector.shape_cast %40 : vector<4x8xf32> to vector<4x8x1xf32>
      %42 = arith.addf %39, %41 : vector<4x8x1xf32>
      %c0_25 = arith.constant 0 : index
      %c0_26 = arith.constant 0 : index
      %c0_27 = arith.constant 0 : index
      %43 = vector.load %arg8[%c0_25, %c0_26, %c0_27] : memref<4x8x1xf32, #tpu.memory_space<vmem>>, vector<4x8x1xf32>
      tpu.vector_store %arg8[%c0_25, %c0_26, %c0_27], %42 {strides = array<i32>} : memref<4x8x1xf32, #tpu.memory_space<vmem>>, vector<4x8x1xf32>,
      %c0_28 = arith.constant 0 : index
      %c0_29 = arith.constant 0 : index
      %c0_30 = arith.constant 0 : index
      %44 = vector.load %arg9[%c0_28, %c0_29, %c0_30] : memref<4x8x8xf32, #tpu.memory_space<vmem>>, vector<4x8x8xf32>
      %45 = vector.broadcast %34 : vector<4x8x1xf32> to vector<4x8x8xf32>
      %46 = arith.mulf %45, %44 : vector<4x8x8xf32>
      %47 = arith.truncf %37 : vector<4x8x8xf32> to vector<4x8x8xbf16>
      "tpu.trace_start"() <{level = 10 : i32, message = "hqk,hkd->hqd"}> : () -> ()
      %cst_31 = arith.constant dense<0.000000e+00> : vector<4x8x8xf32>
      %48 = tpu.matmul %47, %14, %cst_31 {dimension_numbers = #tpu.dot_dimension_numbers<[2], [1], [1], [2], [0, 0, 0, 1, 1, 2], [0], [0]>} : vector<4x8x8xbf16>, vector<4x8x8xbf16>, vector<4x8x8xf32> -> vector<4x8x8xf32>
      "tpu.trace_stop"() : () -> ()
      %49 = arith.addf %46, %48 : vector<4x8x8xf32>
      %c0_32 = arith.constant 0 : index
      %c0_33 = arith.constant 0 : index
      %c0_34 = arith.constant 0 : index
      %50 = vector.load %arg9[%c0_32, %c0_33, %c0_34] : memref<4x8x8xf32, #tpu.memory_space<vmem>>, vector<4x8x8xf32>
      tpu.vector_store %arg9[%c0_32, %c0_33, %c0_34], %49 {strides = array<i32>} : memref<4x8x8xf32, #tpu.memory_space<vmem>>, vector<4x8x8xf32>,
      %c0_35 = arith.constant 0 : index
      %c0_36 = arith.constant 0 : index
      %c0_37 = arith.constant 0 : index
      %51 = vector.load %arg7[%c0_35, %c0_36, %c0_37] : memref<4x8x1xf32, #tpu.memory_space<vmem>>, vector<4x8x1xf32>
      tpu.vector_store %arg7[%c0_35, %c0_36, %c0_37], %32 {strides = array<i32>} : memref<4x8x1xf32, #tpu.memory_space<vmem>>, vector<4x8x1xf32>,
    } else {
    }
    %c0_i32_2 = arith.constant 0 : i32
    %6 = arith.cmpi eq, %arg2, %c0_i32_2 : i32
    %7 = arith.extui %6 : i1 to i32
    %c0_i32_3 = arith.constant 0 : i32
    %8 = arith.cmpi ne, %7, %c0_i32_3 : i32
    scf.if %8 {
      %c0 = arith.constant 0 : index
      %c0_4 = arith.constant 0 : index
      %c0_5 = arith.constant 0 : index
      %9 = vector.load %arg9[%c0, %c0_4, %c0_5] : memref<4x8x8xf32, #tpu.memory_space<vmem>>, vector<4x8x8xf32>
      %c0_6 = arith.constant 0 : index
      %c0_7 = arith.constant 0 : index
      %c0_8 = arith.constant 0 : index
      %10 = vector.load %arg8[%c0_6, %c0_7, %c0_8] : memref<4x8x1xf32, #tpu.memory_space<vmem>>, vector<4x8x1xf32>
      %11 = tpu.reciprocal %10 {approx = true} : vector<4x8x1xf32> -> vector<4x8x1xf32>
      %12 = vector.broadcast %11 : vector<4x8x1xf32> to vector<4x8x8xf32>
      %13 = arith.mulf %9, %12 : vector<4x8x8xf32>
      %14 = vector.extract_strided_slice %13 {offsets = [0, 0, 0], sizes = [1, 8, 8], strides = [1, 1, 1]} : vector<4x8x8xf32> to vector<1x8x8xf32>
      %15 = vector.shape_cast %14 : vector<1x8x8xf32> to vector<8x8xf32>
      %16 = arith.truncf %15 : vector<8x8xf32> to vector<8x8xbf16>
      %c0_9 = arith.constant 0 : index
      %c0_10 = arith.constant 0 : index
      %c0_11 = arith.constant 0 : index
      %17 = vector.load %arg6[%c0_9, %c0_10, %c0_11] : memref<1x8x32xbf16, #tpu.memory_space<vmem>>, vector<1x8x8xbf16>
      %18 = vector.shape_cast %17 : vector<1x8x8xbf16> to vector<8x8xbf16>
      %19 = vector.shape_cast %16 : vector<8x8xbf16> to vector<1x8x8xbf16>
      tpu.vector_store %arg6[%c0_9, %c0_10, %c0_11], %19 {strides = array<i32>} : memref<1x8x32xbf16, #tpu.memory_space<vmem>>, vector<1x8x8xbf16>,
      %20 = vector.extract_strided_slice %13 {offsets = [1, 0, 0], sizes = [1, 8, 8], strides = [1, 1, 1]} : vector<4x8x8xf32> to vector<1x8x8xf32>
      %21 = vector.shape_cast %20 : vector<1x8x8xf32> to vector<8x8xf32>
      %22 = arith.truncf %21 : vector<8x8xf32> to vector<8x8xbf16>
      %c0_12 = arith.constant 0 : index
      %c0_13 = arith.constant 0 : index
      %c8 = arith.constant 8 : index
      %23 = vector.load %arg6[%c0_12, %c0_13, %c8] : memref<1x8x32xbf16, #tpu.memory_space<vmem>>, vector<1x8x8xbf16>
      %24 = vector.shape_cast %23 : vector<1x8x8xbf16> to vector<8x8xbf16>
      %25 = vector.shape_cast %22 : vector<8x8xbf16> to vector<1x8x8xbf16>
      tpu.vector_store %arg6[%c0_12, %c0_13, %c8], %25 {strides = array<i32>} : memref<1x8x32xbf16, #tpu.memory_space<vmem>>, vector<1x8x8xbf16>,
      %26 = vector.extract_strided_slice %13 {offsets = [2, 0, 0], sizes = [1, 8, 8], strides = [1, 1, 1]} : vector<4x8x8xf32> to vector<1x8x8xf32>
      %27 = vector.shape_cast %26 : vector<1x8x8xf32> to vector<8x8xf32>
      %28 = arith.truncf %27 : vector<8x8xf32> to vector<8x8xbf16>
      %c0_14 = arith.constant 0 : index
      %c0_15 = arith.constant 0 : index
      %c16 = arith.constant 16 : index
      %29 = vector.load %arg6[%c0_14, %c0_15, %c16] : memref<1x8x32xbf16, #tpu.memory_space<vmem>>, vector<1x8x8xbf16>
      %30 = vector.shape_cast %29 : vector<1x8x8xbf16> to vector<8x8xbf16>
      %31 = vector.shape_cast %28 : vector<8x8xbf16> to vector<1x8x8xbf16>
      tpu.vector_store %arg6[%c0_14, %c0_15, %c16], %31 {strides = array<i32>} : memref<1x8x32xbf16, #tpu.memory_space<vmem>>, vector<1x8x8xbf16>,
      %32 = vector.extract_strided_slice %13 {offsets = [3, 0, 0], sizes = [1, 8, 8], strides = [1, 1, 1]} : vector<4x8x8xf32> to vector<1x8x8xf32>
      %33 = vector.shape_cast %32 : vector<1x8x8xf32> to vector<8x8xf32>
      %34 = arith.truncf %33 : vector<8x8xf32> to vector<8x8xbf16>
      %c0_16 = arith.constant 0 : index
      %c0_17 = arith.constant 0 : index
      %c24 = arith.constant 24 : index
      %35 = vector.load %arg6[%c0_16, %c0_17, %c24] : memref<1x8x32xbf16, #tpu.memory_space<vmem>>, vector<1x8x8xbf16>
      %36 = vector.shape_cast %35 : vector<1x8x8xbf16> to vector<8x8xbf16>
      %37 = vector.shape_cast %34 : vector<8x8xbf16> to vector<1x8x8xbf16>
      tpu.vector_store %arg6[%c0_16, %c0_17, %c24], %37 {strides = array<i32>} : memref<1x8x32xbf16, #tpu.memory_space<vmem>>, vector<1x8x8xbf16>,
    } else {
    }
    return
  }
  func.func @transform_0(%arg0: i32, %arg1: i32, %arg2: i32) -> (i32, i32, i32, i32) {
    %c0_i32 = arith.constant 0 : i32
    %c0_i32_0 = arith.constant 0 : i32
    %c0_i32_1 = arith.constant 0 : i32
    return %arg0, %c0_i32, %arg1, %c0_i32_0 : i32, i32, i32, i32
  }
  func.func @transform_1(%arg0: i32, %arg1: i32, %arg2: i32) -> (i32, i32, i32, i32) {
    %0 = arith.minsi %arg2, %arg1 : i32
    %c0_i32 = arith.constant 0 : i32
    %c0_i32_0 = arith.constant 0 : i32
    %c0_i32_1 = arith.constant 0 : i32
    return %arg0, %c0_i32, %0, %c0_i32_0 : i32, i32, i32, i32
  }
  func.func @transform_2(%arg0: i32, %arg1: i32, %arg2: i32) -> (i32, i32, i32, i32) {
    %0 = arith.minsi %arg2, %arg1 : i32
    %c0_i32 = arith.constant 0 : i32
    %c0_i32_0 = arith.constant 0 : i32
    %c0_i32_1 = arith.constant 0 : i32
    return %arg0, %c0_i32, %0, %c0_i32_0 : i32, i32, i32, i32
  }
  func.func @transform_3(%arg0: i32, %arg1: i32, %arg2: i32) -> (i32, i32, i32) {
    %c0_i32 = arith.constant 0 : i32
    %c0_i32_0 = arith.constant 0 : i32
    return %arg0, %arg1, %c0_i32 : i32, i32, i32
  }
}

</mosaic_0001>

<llo_original>
// kernel: mosaic_gpt_forward.13
$region0: #{mosaic_gpt_forward.13}
  #allocation0 [shape = 'u32[]', space=smem, size = 0x4, offset = 0x4, fixed_abs, tag = 'smem constant byte address 0x4 - core index']
  #allocation1 [shape = 'u32[72,128]{1,0:T(1,128)}', space=vmem, size = 0x9000, scoped, tag = 'internal scratch']
  %s0 = inlined_call_operand.vmem [shape: f32[2,8,32], index: 0, kind: input, shape index: {}]
  %s1 = inlined_call_operand.vmem [shape: f32[1,32], index: 1, kind: input, shape index: {}]
  %s2 = inlined_call_operand.vmem [shape: f32[1,32], index: 2, kind: input, shape index: {}]
  %s3 = inlined_call_operand.vmem [shape: bf16[32,128], index: 3, kind: input, shape index: {}]
  %s4 = inlined_call_operand.hbm [shape: f32[2,8,128], index: 4, kind: output, shape index: {}]
  %s5 = sld [smem:[#allocation0]]
  $region49: #{mosaic_gpt_forward.13} parent=0
    _
  %s7 = ssub.s32 1, %s5
  %s8 = scalar_select 0, %s7, %s5
  $region1: #{mosaic_gpt_forward.13} parent=0
    #allocation2 [shape = 'u8[8192]{0}', space=vmem, size = 0x2000, scoped, tag = 'output window, operand 0']
    #allocation3 [shape = 's32[2]{0}', space=sflag, size = 0x8, scoped, tag = 'scoped memory for mosaic_gpt_forward.13']
    %9 = vsyncpa [#allocation3], 0
    %s10 = scalar_lea.sflag [#allocation3], 1
    %11 = vsyncpa %s10, 0
    loop: start=0, step=1, limit=4
    $region2: #{mosaic_gpt_forward.13} parent=1 // loop_pre_header
      _
    $region3: #{mosaic_gpt_forward.13} parent=1 // loop_header
      %s13 = sphi 0, %s17
      %p14 = scmp.ge.s32.totalorder %s13, 4
      %s20 = sphi 0, %s39
      %s21 = sphi 0, %s35
      %s22 = sphi 0, %s31
      %s23 = sphi 0, %s20
      %s24 = sphi 0, %s21
      %s25 = sphi 0, %s22
      %s26 = sphi 0, %s23
      %s27 = sphi 0, %s24
      %s28 = sphi 0, %s25
      %s44 = sphi 0, %s46
      %s47 = sphi 0, %s44
      %s48 = sphi 0, %s47
      %s64 = sphi 0, %s48
      %s68 = sphi 0, %s68
      %s70 = sphi 0, %s68
      %s71 = sphi 0, %s70
      %s85 = sphi 0, %s71
      %s89 = sphi 0, %s89
      %s91 = sphi 0, %s89
      %s92 = sphi 0, %s91
      %s106 = sphi 0, %s92
      %s112 = sphi 0, %s114
      %s115 = sphi 0, %s112
      %s116 = sphi 0, %s115
      %s132 = sphi 0, %s116
      %s142 = sphi 0, %s144
      %s145 = sphi 0, %s142
      %s146 = sphi 0, %s145
      %s162 = sphi 0, %s146
    $region4: #{mosaic_gpt_forward.13} parent=1 // loop_header_branch
      %16 = sbr.rel (%p14) target = $region8
    $region5: #{mosaic_gpt_forward.13} parent=1 // loop_body
      %s18 = ssub.s32 %s13, 1
      %s19 = ssub.s32 %s13, 2
      %s29 = sadd.s32 1, %s22
      %p30 = scmp.ge.s32.totalorder %s29, 1
      %s31 = scalar_select %p30, 0, %s29
      %s32 = sadd.s32 1, %s21
      %s33 = scalar_select %p30, %s32, %s21
      %p34 = scmp.ge.s32.totalorder %s33, 1
      %s35 = scalar_select %p34, 0, %s33
      %s36 = sadd.s32 1, %s20
      %s37 = scalar_select %p34, %s36, %s20
      %p38 = scmp.ge.s32.totalorder %s37, 2
      %s39 = scalar_select %p38, 0, %s37
      %s40 = ssub.s32 %s20, %s39
      %s41 = ssub.s32 %s21, %s35
      %s42 = sor.u32 %s40, %s41
      %p43 = scmp.eq.s32.totalorder %s42, 0
      %s45 = sadd.s32 %s44, 1
      %s46 = scalar_select %p43, %s44, %s45
      %p49 = pneg %p43
      %p50 = scmp.eq.s32.totalorder %s13, 1
      %p51 = por %p49, %p50
      %p52 = scmp.ne.s32.totalorder %s44, %s47
      %p53 = scmp.eq.s32.totalorder %s13, 0
      %p54 = por %p52, %p53
      %p55 = scmp.ne.s32.totalorder %s44, %s47
      %p56 = scmp.eq.s32.totalorder %s18, 1
      %p57 = por %p55, %p56
      %p58 = scmp.ne.s32.totalorder %s47, %s48
      %p59 = scmp.eq.s32.totalorder %s18, 0
      %p60 = por %p58, %p59
      %p61 = scmp.ne.s32.totalorder %s47, %s48
      %p62 = scmp.eq.s32.totalorder %s19, 1
      %p63 = por %p61, %p62
      %p65 = scmp.ne.s32.totalorder %s48, %s64
      %p66 = scmp.eq.s32.totalorder %s19, 0
      %p67 = por %p65, %p66
      %s69 = sadd.s32 %s68, 1
      %p72 = scmp.eq.s32.totalorder %s13, 1
      %p73 = scmp.ne.s32.totalorder %s68, %s70
      %p74 = scmp.eq.s32.totalorder %s13, 0
      %p75 = por %p73, %p74
      %p76 = scmp.ne.s32.totalorder %s68, %s70
      %p77 = scmp.eq.s32.totalorder %s18, 1
      %p78 = por %p76, %p77
      %p79 = scmp.ne.s32.totalorder %s70, %s71
      %p80 = scmp.eq.s32.totalorder %s18, 0
      %p81 = por %p79, %p80
      %p82 = scmp.ne.s32.totalorder %s70, %s71
      %p83 = scmp.eq.s32.totalorder %s19, 1
      %p84 = por %p82, %p83
      %p86 = scmp.ne.s32.totalorder %s71, %s85
      %p87 = scmp.eq.s32.totalorder %s19, 0
      %p88 = por %p86, %p87
      %s90 = sadd.s32 %s89, 1
      %p93 = scmp.eq.s32.totalorder %s13, 1
      %p94 = scmp.ne.s32.totalorder %s89, %s91
      %p95 = scmp.eq.s32.totalorder %s13, 0
      %p96 = por %p94, %p95
      %p97 = scmp.ne.s32.totalorder %s89, %s91
      %p98 = scmp.eq.s32.totalorder %s18, 1
      %p99 = por %p97, %p98
      %p100 = scmp.ne.s32.totalorder %s91, %s92
      %p101 = scmp.eq.s32.totalorder %s18, 0
      %p102 = por %p100, %p101
      %p103 = scmp.ne.s32.totalorder %s91, %s92
      %p104 = scmp.eq.s32.totalorder %s19, 1
      %p105 = por %p103, %p104
      %p107 = scmp.ne.s32.totalorder %s92, %s106
      %p108 = scmp.eq.s32.totalorder %s19, 0
      %p109 = por %p107, %p108
      %s110 = ssub.s32 %s22, %s31
      %p111 = scmp.eq.s32.totalorder %s110, 0
      %s113 = sadd.s32 %s112, 1
      %s114 = scalar_select %p111, %s112, %s113
      %p117 = pneg %p111
      %p118 = scmp.eq.s32.totalorder %s13, 1
      %p119 = por %p117, %p118
      %p120 = scmp.ne.s32.totalorder %s112, %s115
      %p121 = scmp.eq.s32.totalorder %s13, 0
      %p122 = por %p120, %p121
      %p123 = scmp.ne.s32.totalorder %s112, %s115
      %p124 = scmp.eq.s32.totalorder %s18, 1
      %p125 = por %p123, %p124
      %p126 = scmp.ne.s32.totalorder %s115, %s116
      %p127 = scmp.eq.s32.totalorder %s18, 0
      %p128 = por %p126, %p127
      %p129 = scmp.ne.s32.totalorder %s115, %s116
      %p130 = scmp.eq.s32.totalorder %s19, 1
      %p131 = por %p129, %p130
      %p133 = scmp.ne.s32.totalorder %s116, %s132
      %p134 = scmp.eq.s32.totalorder %s19, 0
      %p135 = por %p133, %p134
      %s136 = ssub.s32 %s20, %s39
      %s137 = ssub.s32 %s21, %s35
      %s138 = sor.u32 %s136, %s137
      %s139 = ssub.s32 %s22, %s31
      %s140 = sor.u32 %s138, %s139
      %p141 = scmp.eq.s32.totalorder %s140, 0
      %s143 = sadd.s32 %s142, 1
      %s144 = scalar_select %p141, %s142, %s143
      %p147 = pneg %p141
      %p148 = scmp.eq.s32.totalorder %s13, 1
      %p149 = por %p147, %p148
      %p150 = scmp.ne.s32.totalorder %s142, %s145
      %p151 = scmp.eq.s32.totalorder %s13, 0
      %p152 = por %p150, %p151
      %p153 = scmp.ne.s32.totalorder %s142, %s145
      %p154 = scmp.eq.s32.totalorder %s18, 1
      %p155 = por %p153, %p154
      %p156 = scmp.ne.s32.totalorder %s145, %s146
      %p157 = scmp.eq.s32.totalorder %s18, 0
      %p158 = por %p156, %p157
      %p159 = scmp.ne.s32.totalorder %s145, %s146
      %p160 = scmp.eq.s32.totalorder %s19, 1
      %p161 = por %p159, %p160
      %p163 = scmp.ne.s32.totalorder %s146, %s162
      %p164 = scmp.eq.s32.totalorder %s19, 0
      %p165 = por %p163, %p164
      %p166 = scmp.le.s32.totalorder 1, %s13
      %p167 = scmp.lt.s32.totalorder %s13, 3
      %p168 = pnand %p166, %p167
      %p169 = pneg %p168
      // Predicated region
      $region9: #{mosaic_gpt_forward.13} parent=5 // pred_check
        _
      $region10: #{mosaic_gpt_forward.13} parent=5 // pred_check_branch
        %171 = sbr.rel (%p168) target = $region12
      $region11: #{mosaic_gpt_forward.13} parent=5 // pred_region
        %s172 = ssub.s32 %s13, 1
        // Predicated region
        $region13: #{mosaic_gpt_forward.13} parent=11 // pred_check
          %p173 = pneg %p81
        $region14: #{mosaic_gpt_forward.13} parent=11 // pred_check_branch
          %175 = sbr.rel (%p173) target = $region16
        $region15: #{mosaic_gpt_forward.13} parent=11 // pred_region
          _
        $region16: #{mosaic_gpt_forward.13} parent=11 // pred_fallthru
          _
        // Predicated region
        $region17: #{mosaic_gpt_forward.13} parent=11 // pred_check
          %p176 = pneg %p102
        $region18: #{mosaic_gpt_forward.13} parent=11 // pred_check_branch
          %178 = sbr.rel (%p176) target = $region20
        $region19: #{mosaic_gpt_forward.13} parent=11 // pred_region
          _
        $region20: #{mosaic_gpt_forward.13} parent=11 // pred_fallthru
          _
        // Predicated region
        $region21: #{mosaic_gpt_forward.13} parent=11 // pred_check
          %p179 = pneg %p128
        $region22: #{mosaic_gpt_forward.13} parent=11 // pred_check_branch
          %181 = sbr.rel (%p179) target = $region24
        $region23: #{mosaic_gpt_forward.13} parent=11 // pred_region
          %p182 = scmp.lt.s32.totalorder %s25, 0
          %s183 = scalar_select %p182, %s25, 0
          %s184 = smul.addr %s183, 4
          %s185 = scalar_lea.vmem %s3, %s184
        $region24: #{mosaic_gpt_forward.13} parent=11 // pred_fallthru
          _
      $region12: #{mosaic_gpt_forward.13} parent=5 // pred_fallthru
        _
      %p186 = scmp.lt.s32.totalorder %s13, 2
      // Predicated region
      $region25: #{mosaic_gpt_forward.13} parent=5 // pred_check
        %p187 = pneg %p186
      $region26: #{mosaic_gpt_forward.13} parent=5 // pred_check_branch
        %189 = sbr.rel (%p187) target = $region28
      $region27: #{mosaic_gpt_forward.13} parent=5 // pred_region
        // Predicated region
        $region29: #{mosaic_gpt_forward.13} parent=27 // pred_check
          %p190 = pneg %p54
        $region30: #{mosaic_gpt_forward.13} parent=27 // pred_check_branch
          %192 = sbr.rel (%p190) target = $region32
        $region31: #{mosaic_gpt_forward.13} parent=27 // pred_region
          %p193 = scmp.lt.s32.totalorder %s20, 1
          %s194 = scalar_select %p193, %s20, 1
          %p195 = scmp.lt.s32.totalorder %s21, 0
          %s196 = scalar_select %p195, %s21, 0
          %s197 = sadd.s32 %s196, %s194
          %s198 = smul.addr %s197, 8
          %s199 = scalar_lea.vmem %s0, %s198
        $region32: #{mosaic_gpt_forward.13} parent=27 // pred_fallthru
          _
      $region28: #{mosaic_gpt_forward.13} parent=5 // pred_fallthru
        _
      %p200 = scmp.le.s32.totalorder 1, %s13
      %p201 = scmp.lt.s32.totalorder %s13, 3
      %p202 = pnand %p200, %p201
      %p203 = pneg %p202
      // Predicated region
      $region33: #{mosaic_gpt_forward.13} parent=5 // pred_check
        _
      $region34: #{mosaic_gpt_forward.13} parent=5 // pred_check_branch
        %205 = sbr.rel (%p202) target = $region36
      $region35: #{mosaic_gpt_forward.13} parent=5 // pred_region
        %s206 = ssub.s32 %s13, 1
        %p207 = scmp.lt.s32.totalorder %s23, 1
        %s208 = scalar_select %p207, %s23, 1
        %p209 = scmp.lt.s32.totalorder %s24, 0
        %s210 = scalar_select %p209, %s24, 0
        %s211 = sadd.s32 %s210, %s208
        %s212 = smul.addr %s211, 8
        %s213 = scalar_lea.vmem %s0, %s212
        %p214 = pneg %p60
        %p215 = pneg %p57
        %p216 = pneg %p81
        %p217 = pneg %p78
        %p218 = pneg %p102
        %p219 = pneg %p99
        %p220 = scmp.lt.s32.totalorder %s25, 0
        %s221 = scalar_select %p220, %s25, 0
        %s222 = smul.addr %s221, 4
        %s223 = scalar_lea.vmem %s3, %s222
        %p224 = pneg %p128
        %p225 = pneg %p125
        %p226 = pneg %p158
        %p227 = pneg %p155
        %s228 = sand.u32 %s145, 1
        %s229 = scalar_lea.sflag [#allocation3], %s228
        %s230 = sand.u32 %s145, 1
        %s231 = smul.addr %s230, 8
        %s232 = scalar_lea.vmem [#allocation2], %s231
        %p233 = scmp.lt.s32.totalorder %s23, 1
        %s234 = scalar_select %p233, %s23, 1
        %p235 = scmp.lt.s32.totalorder %s24, 0
        %s236 = scalar_select %p235, %s24, 0
        %s237 = sadd.s32 %s236, %s234
        %s238 = smul.addr %s237, 8
        %s239 = scalar_lea.vmem %s0, %s238
        %p240 = scmp.lt.s32.totalorder %s25, 0
        %s241 = scalar_select %p240, %s25, 0
        %s242 = smul.addr %s241, 4
        %s243 = scalar_lea.vmem %s3, %s242
        %v245 = vld [vmem:[%s239] sm:$0xff]
        %v246 = vld [vmem:[%s1] sm:$0x1]
        %v247 = vld [vmem:[%s2] sm:$0x1]
        %vm248 = vcmask 261120
        %v249 = vsel %vm248, %v245, 0.0
        %250 = vadd.xlane.f32.xlu0 %v249
        %v251 = vpop.xlane.xlu0 %250
        %v252 = vrcp.pop 32.0
        %v253 = vmul.f32 32.0, %v252
        %v254 = vsub.f32 1.0, %v253
        %v255 = vmul.f32 %v252, %v254
        %v256 = vadd.f32 %v252, %v255
        %vm257 = vweird.f32 %v252
        %v258 = vsel %vm257, %v252, %v256
        %v259 = vmul.f32 %v251, %v258
        %v260 = vsub.f32 %v245, %v259
        %v261 = vmul.f32 %v260, %v260
        %v262 = vsel %vm248, %v261, 0.0
        %263 = vadd.xlane.f32.xlu0 %v262
        %v264 = vpop.xlane.xlu0 %263
        %v265 = vmul.f32 %v264, %v258
        %v266 = vadd.f32 %v265, 1e-05
        %v267 = vrsqrt.pop %v266
        %v268 = vmul.f32 %v267, %v266
        %v269 = vmul.f32 %v268, %v267
        %v270 = vmul.f32 0.5, %v269
        %v271 = vsub.f32 1.5, %v270
        %v272 = vmul.f32 %v267, %v271
        %vm273 = vweird.f32 %v266
        %vm274 = vweird.f32 %v267
        %vm275 = vmor %vm273, %vm274
        %v276 = vsel %vm275, %v267, %v272
        %v277 = vmul.f32 %v260, %v276
        %v279 = vperm.slane %v246, 0
        %v281 = vmul.f32 %v277, %v279
        %v283 = vperm.slane %v247, 0
        %v285 = vadd.f32 %v281, %v283
        %v286 = vpack.c.bf16 %v285, %v285
        %v287 = vld [vmem:[%s243] sm:$0xf]
        %v288 = vld [vmem:[%s243 + $0x4] sm:$0xf]
        %v289 = vld [vmem:[%s243 + $0x8] sm:$0xf]
        %v290 = vld [vmem:[%s243 + $0xc] sm:$0xf]
        %v295 = vunpack.c.l.b16 %v287
        %v296 = vunpack.c.l.b16 %v288
        %v297 = vunpack.c.l.b16 %v289
        %v298 = vunpack.c.l.b16 %v290
        %v299 = vpack.c.b16 %v296, %v295
        %v300 = vpack.c.b16 %v298, %v297
        %v304 = vsel %vm248, %v286, 0
        %306 = vmatpush.bf16.msra.mxu0 0
        %307 = vmatpush.bf16.msra.mxu0 0
        %308 = vmatpush.bf16.msra.mxu0 0
        %309 = vmatpush.bf16.msra.mxu0 0
        %310 = vmatpush.bf16.msra.mxu0 0
        %311 = vmatpush.bf16.msra.mxu0 0
        %312 = vmatpush.bf16.msra.mxu0 %v300
        %313 = vmatpush.bf16.msra.mxu0 %v299
        %314 = vmatmul.bf16.gmra.mxu0 %v304
        %v315 = vpop.f32.mrf.mxu0
        %v316 = vadd.f32 0.0, %v315
        %v317 = vpop.f32.mrf.mxu0
        %318 = vdwg.mxu0
        %319 = vst [vmem:[%s232] sm:$0xff] %v316
        %s320 = sand.u32 %s145, 1
        %s321 = scalar_lea.sflag [#allocation3], %s320
        %s322 = sand.u32 %s145, 1
        %s323 = smul.addr %s322, 8
        %s324 = scalar_lea.vmem [#allocation2], %s323
        // Predicated region
        $region37: #{mosaic_gpt_forward.13} parent=35 // pred_check
          %p325 = pneg %p155
        $region38: #{mosaic_gpt_forward.13} parent=35 // pred_check_branch
          %327 = sbr.rel (%p325) target = $region40
        $region39: #{mosaic_gpt_forward.13} parent=35 // pred_region
          %329 = vsyncadd %s321, 0
          %s330 = sadd.s32 %s25, %s24
          %s331 = sadd.s32 %s330, %s23
          %s332 = smul.addr %s331, 8
          %s333 = scalar_lea.hbm %s4, %s332
          %s335 = sshll.u32 %s324, 4
          %s336 = int_to_ptr.vmem [resolvable:$true] %s335
          %s337 = sshll.u32 %s333, 4
          %s338 = int_to_ptr.hbm [resolvable:$true] %s337
          %340 = dma.vmem_to_hbm [thread:$0]  %s336, 128, %s338, %s321
        $region40: #{mosaic_gpt_forward.13} parent=35 // pred_fallthru
          _
      $region36: #{mosaic_gpt_forward.13} parent=5 // pred_fallthru
        _
      %p341 = scmp.le.s32.totalorder 2, %s13
      // Predicated region
      $region41: #{mosaic_gpt_forward.13} parent=5 // pred_check
        %p342 = pneg %p341
      $region42: #{mosaic_gpt_forward.13} parent=5 // pred_check_branch
        %344 = sbr.rel (%p342) target = $region44
      $region43: #{mosaic_gpt_forward.13} parent=5 // pred_region
        %s345 = ssub.s32 %s13, 2
        // Predicated region
        $region45: #{mosaic_gpt_forward.13} parent=43 // pred_check
          %p346 = pneg %p161
        $region46: #{mosaic_gpt_forward.13} parent=43 // pred_check_branch
          %348 = sbr.rel (%p346) target = $region48
        $region47: #{mosaic_gpt_forward.13} parent=43 // pred_region
          %s349 = sand.u32 %s146, 1
          %s350 = scalar_lea.sflag [#allocation3], %s349
          %s351 = sand.u32 %s146, 1
          %s352 = smul.addr %s351, 8
          %s353 = scalar_lea.vmem [#allocation2], %s352
          %355 = dma.done %s350, 128
        $region48: #{mosaic_gpt_forward.13} parent=43 // pred_fallthru
          _
      $region44: #{mosaic_gpt_forward.13} parent=5 // pred_fallthru
        _
    $region6: #{mosaic_gpt_forward.13} parent=1 // loop_footer
      %s17 = sadd.s32 1, %s13
    $region7: #{mosaic_gpt_forward.13} parent=1 // loop_footer_branch
      %12 = sbr.rel target = $region3
    $region8: #{mosaic_gpt_forward.13} parent=1 // loop_exit
      _
    %356 = vsyncpa [#allocation3], 1
    %s357 = scalar_lea.sflag [#allocation3], 1
    %358 = vsyncpa %s357, 1

// kernel: mosaic_gpt_forward.7
$region0: #{mosaic_gpt_forward.7}
  #allocation0 [shape = 'u32[]', space=smem, size = 0x4, offset = 0x4, fixed_abs, tag = 'smem constant byte address 0x4 - core index']
  #allocation1 [shape = 'u32[72,128]{1,0:T(1,128)}', space=vmem, size = 0x9000, scoped, tag = 'internal scratch']
  %s0 = inlined_call_operand.vmem [shape: f32[2,8,32], index: 0, kind: input, shape index: {}]
  %s1 = inlined_call_operand.vmem [shape: f32[1,32], index: 1, kind: input, shape index: {}]
  %s2 = inlined_call_operand.vmem [shape: f32[1,32], index: 2, kind: input, shape index: {}]
  %s3 = inlined_call_operand.vmem [shape: bf16[32,96], index: 3, kind: input, shape index: {}]
  %s4 = inlined_call_operand.vmem [shape: f32[1,96], index: 4, kind: input, shape index: {}]
  %s5 = inlined_call_operand.vmem [shape: bf16[2,4,8,8], index: 5, kind: output, shape index: {0}]
  %s6 = inlined_call_operand.vmem [shape: bf16[2,4,8,8], index: 6, kind: output, shape index: {1}]
  %s7 = inlined_call_operand.vmem [shape: bf16[2,4,8,8], index: 7, kind: output, shape index: {2}]
  %8 = xla_tuple %s5, %s6, %s7
  %s9 = sld [smem:[#allocation0]]
  $region69: #{mosaic_gpt_forward.7} parent=0
    _
  %s11 = ssub.s32 1, %s9
  %s12 = scalar_select 0, %s11, %s9
  loop: start=0, step=1, limit=4
  $region2: #{mosaic_gpt_forward.7} parent=0 // loop_pre_header
    _
  $region3: #{mosaic_gpt_forward.7} parent=0 // loop_header
    %s14 = sphi 0, %s18
    %p15 = scmp.ge.s32.totalorder %s14, 4
    %s21 = sphi 0, %s33
    %s22 = sphi 0, %s29
    %s23 = sphi 0, %s21
    %s24 = sphi 0, %s22
    %s25 = sphi 0, %s23
    %s26 = sphi 0, %s24
    %s38 = sphi 0, %s40
    %s41 = sphi 0, %s38
    %s42 = sphi 0, %s41
    %s58 = sphi 0, %s42
    %s62 = sphi 0, %s62
    %s64 = sphi 0, %s62
    %s65 = sphi 0, %s64
    %s79 = sphi 0, %s65
    %s83 = sphi 0, %s83
    %s85 = sphi 0, %s83
    %s86 = sphi 0, %s85
    %s100 = sphi 0, %s86
    %s104 = sphi 0, %s104
    %s106 = sphi 0, %s104
    %s107 = sphi 0, %s106
    %s121 = sphi 0, %s107
    %s125 = sphi 0, %s125
    %s127 = sphi 0, %s125
    %s128 = sphi 0, %s127
    %s142 = sphi 0, %s128
    %s150 = sphi 0, %s152
    %s153 = sphi 0, %s150
    %s154 = sphi 0, %s153
    %s170 = sphi 0, %s154
    %s178 = sphi 0, %s180
    %s181 = sphi 0, %s178
    %s182 = sphi 0, %s181
    %s198 = sphi 0, %s182
    %s206 = sphi 0, %s208
    %s209 = sphi 0, %s206
    %s210 = sphi 0, %s209
    %s226 = sphi 0, %s210
  $region4: #{mosaic_gpt_forward.7} parent=0 // loop_header_branch
    %17 = sbr.rel (%p15) target = $region8
  $region5: #{mosaic_gpt_forward.7} parent=0 // loop_body
    %s19 = ssub.s32 %s14, 1
    %s20 = ssub.s32 %s14, 2
    %s27 = sadd.s32 1, %s22
    %p28 = scmp.ge.s32.totalorder %s27, 1
    %s29 = scalar_select %p28, 0, %s27
    %s30 = sadd.s32 1, %s21
    %s31 = scalar_select %p28, %s30, %s21
    %p32 = scmp.ge.s32.totalorder %s31, 2
    %s33 = scalar_select %p32, 0, %s31
    %s34 = ssub.s32 %s21, %s33
    %s35 = ssub.s32 %s22, %s29
    %s36 = sor.u32 %s34, %s35
    %p37 = scmp.eq.s32.totalorder %s36, 0
    %s39 = sadd.s32 %s38, 1
    %s40 = scalar_select %p37, %s38, %s39
    %p43 = pneg %p37
    %p44 = scmp.eq.s32.totalorder %s14, 1
    %p45 = por %p43, %p44
    %p46 = scmp.ne.s32.totalorder %s38, %s41
    %p47 = scmp.eq.s32.totalorder %s14, 0
    %p48 = por %p46, %p47
    %p49 = scmp.ne.s32.totalorder %s38, %s41
    %p50 = scmp.eq.s32.totalorder %s19, 1
    %p51 = por %p49, %p50
    %p52 = scmp.ne.s32.totalorder %s41, %s42
    %p53 = scmp.eq.s32.totalorder %s19, 0
    %p54 = por %p52, %p53
    %p55 = scmp.ne.s32.totalorder %s41, %s42
    %p56 = scmp.eq.s32.totalorder %s20, 1
    %p57 = por %p55, %p56
    %p59 = scmp.ne.s32.totalorder %s42, %s58
    %p60 = scmp.eq.s32.totalorder %s20, 0
    %p61 = por %p59, %p60
    %s63 = sadd.s32 %s62, 1
    %p66 = scmp.eq.s32.totalorder %s14, 1
    %p67 = scmp.ne.s32.totalorder %s62, %s64
    %p68 = scmp.eq.s32.totalorder %s14, 0
    %p69 = por %p67, %p68
    %p70 = scmp.ne.s32.totalorder %s62, %s64
    %p71 = scmp.eq.s32.totalorder %s19, 1
    %p72 = por %p70, %p71
    %p73 = scmp.ne.s32.totalorder %s64, %s65
    %p74 = scmp.eq.s32.totalorder %s19, 0
    %p75 = por %p73, %p74
    %p76 = scmp.ne.s32.totalorder %s64, %s65
    %p77 = scmp.eq.s32.totalorder %s20, 1
    %p78 = por %p76, %p77
    %p80 = scmp.ne.s32.totalorder %s65, %s79
    %p81 = scmp.eq.s32.totalorder %s20, 0
    %p82 = por %p80, %p81
    %s84 = sadd.s32 %s83, 1
    %p87 = scmp.eq.s32.totalorder %s14, 1
    %p88 = scmp.ne.s32.totalorder %s83, %s85
    %p89 = scmp.eq.s32.totalorder %s14, 0
    %p90 = por %p88, %p89
    %p91 = scmp.ne.s32.totalorder %s83, %s85
    %p92 = scmp.eq.s32.totalorder %s19, 1
    %p93 = por %p91, %p92
    %p94 = scmp.ne.s32.totalorder %s85, %s86
    %p95 = scmp.eq.s32.totalorder %s19, 0
    %p96 = por %p94, %p95
    %p97 = scmp.ne.s32.totalorder %s85, %s86
    %p98 = scmp.eq.s32.totalorder %s20, 1
    %p99 = por %p97, %p98
    %p101 = scmp.ne.s32.totalorder %s86, %s100
    %p102 = scmp.eq.s32.totalorder %s20, 0
    %p103 = por %p101, %p102
    %s105 = sadd.s32 %s104, 1
    %p108 = scmp.eq.s32.totalorder %s14, 1
    %p109 = scmp.ne.s32.totalorder %s104, %s106
    %p110 = scmp.eq.s32.totalorder %s14, 0
    %p111 = por %p109, %p110
    %p112 = scmp.ne.s32.totalorder %s104, %s106
    %p113 = scmp.eq.s32.totalorder %s19, 1
    %p114 = por %p112, %p113
    %p115 = scmp.ne.s32.totalorder %s106, %s107
    %p116 = scmp.eq.s32.totalorder %s19, 0
    %p117 = por %p115, %p116
    %p118 = scmp.ne.s32.totalorder %s106, %s107
    %p119 = scmp.eq.s32.totalorder %s20, 1
    %p120 = por %p118, %p119
    %p122 = scmp.ne.s32.totalorder %s107, %s121
    %p123 = scmp.eq.s32.totalorder %s20, 0
    %p124 = por %p122, %p123
    %s126 = sadd.s32 %s125, 1
    %p129 = scmp.eq.s32.totalorder %s14, 1
    %p130 = scmp.ne.s32.totalorder %s125, %s127
    %p131 = scmp.eq.s32.totalorder %s14, 0
    %p132 = por %p130, %p131
    %p133 = scmp.ne.s32.totalorder %s125, %s127
    %p134 = scmp.eq.s32.totalorder %s19, 1
    %p135 = por %p133, %p134
    %p136 = scmp.ne.s32.totalorder %s127, %s128
    %p137 = scmp.eq.s32.totalorder %s19, 0
    %p138 = por %p136, %p137
    %p139 = scmp.ne.s32.totalorder %s127, %s128
    %p140 = scmp.eq.s32.totalorder %s20, 1
    %p141 = por %p139, %p140
    %p143 = scmp.ne.s32.totalorder %s128, %s142
    %p144 = scmp.eq.s32.totalorder %s20, 0
    %p145 = por %p143, %p144
    %s146 = ssub.s32 %s21, %s33
    %s147 = ssub.s32 %s22, %s29
    %s148 = sor.u32 %s146, %s147
    %p149 = scmp.eq.s32.totalorder %s148, 0
    %s151 = sadd.s32 %s150, 1
    %s152 = scalar_select %p149, %s150, %s151
    %p155 = pneg %p149
    %p156 = scmp.eq.s32.totalorder %s14, 1
    %p157 = por %p155, %p156
    %p158 = scmp.ne.s32.totalorder %s150, %s153
    %p159 = scmp.eq.s32.totalorder %s14, 0
    %p160 = por %p158, %p159
    %p161 = scmp.ne.s32.totalorder %s150, %s153
    %p162 = scmp.eq.s32.totalorder %s19, 1
    %p163 = por %p161, %p162
    %p164 = scmp.ne.s32.totalorder %s153, %s154
    %p165 = scmp.eq.s32.totalorder %s19, 0
    %p166 = por %p164, %p165
    %p167 = scmp.ne.s32.totalorder %s153, %s154
    %p168 = scmp.eq.s32.totalorder %s20, 1
    %p169 = por %p167, %p168
    %p171 = scmp.ne.s32.totalorder %s154, %s170
    %p172 = scmp.eq.s32.totalorder %s20, 0
    %p173 = por %p171, %p172
    %s174 = ssub.s32 %s21, %s33
    %s175 = ssub.s32 %s22, %s29
    %s176 = sor.u32 %s174, %s175
    %p177 = scmp.eq.s32.totalorder %s176, 0
    %s179 = sadd.s32 %s178, 1
    %s180 = scalar_select %p177, %s178, %s179
    %p183 = pneg %p177
    %p184 = scmp.eq.s32.totalorder %s14, 1
    %p185 = por %p183, %p184
    %p186 = scmp.ne.s32.totalorder %s178, %s181
    %p187 = scmp.eq.s32.totalorder %s14, 0
    %p188 = por %p186, %p187
    %p189 = scmp.ne.s32.totalorder %s178, %s181
    %p190 = scmp.eq.s32.totalorder %s19, 1
    %p191 = por %p189, %p190
    %p192 = scmp.ne.s32.totalorder %s181, %s182
    %p193 = scmp.eq.s32.totalorder %s19, 0
    %p194 = por %p192, %p193
    %p195 = scmp.ne.s32.totalorder %s181, %s182
    %p196 = scmp.eq.s32.totalorder %s20, 1
    %p197 = por %p195, %p196
    %p199 = scmp.ne.s32.totalorder %s182, %s198
    %p200 = scmp.eq.s32.totalorder %s20, 0
    %p201 = por %p199, %p200
    %s202 = ssub.s32 %s21, %s33
    %s203 = ssub.s32 %s22, %s29
    %s204 = sor.u32 %s202, %s203
    %p205 = scmp.eq.s32.totalorder %s204, 0
    %s207 = sadd.s32 %s206, 1
    %s208 = scalar_select %p205, %s206, %s207
    %p211 = pneg %p205
    %p212 = scmp.eq.s32.totalorder %s14, 1
    %p213 = por %p211, %p212
    %p214 = scmp.ne.s32.totalorder %s206, %s209
    %p215 = scmp.eq.s32.totalorder %s14, 0
    %p216 = por %p214, %p215
    %p217 = scmp.ne.s32.totalorder %s206, %s209
    %p218 = scmp.eq.s32.totalorder %s19, 1
    %p219 = por %p217, %p218
    %p220 = scmp.ne.s32.totalorder %s209, %s210
    %p221 = scmp.eq.s32.totalorder %s19, 0
    %p222 = por %p220, %p221
    %p223 = scmp.ne.s32.totalorder %s209, %s210
    %p224 = scmp.eq.s32.totalorder %s20, 1
    %p225 = por %p223, %p224
    %p227 = scmp.ne.s32.totalorder %s210, %s226
    %p228 = scmp.eq.s32.totalorder %s20, 0
    %p229 = por %p227, %p228
    %p230 = scmp.le.s32.totalorder 1, %s14
    %p231 = scmp.lt.s32.totalorder %s14, 3
    %p232 = pnand %p230, %p231
    %p233 = pneg %p232
    // Predicated region
    $region9: #{mosaic_gpt_forward.7} parent=5 // pred_check
      _
    $region10: #{mosaic_gpt_forward.7} parent=5 // pred_check_branch
      %235 = sbr.rel (%p232) target = $region12
    $region11: #{mosaic_gpt_forward.7} parent=5 // pred_region
      %s236 = ssub.s32 %s14, 1
      // Predicated region
      $region13: #{mosaic_gpt_forward.7} parent=11 // pred_check
        %p237 = pneg %p75
      $region14: #{mosaic_gpt_forward.7} parent=11 // pred_check_branch
        %239 = sbr.rel (%p237) target = $region16
      $region15: #{mosaic_gpt_forward.7} parent=11 // pred_region
        _
      $region16: #{mosaic_gpt_forward.7} parent=11 // pred_fallthru
        _
      // Predicated region
      $region17: #{mosaic_gpt_forward.7} parent=11 // pred_check
        %p240 = pneg %p96
      $region18: #{mosaic_gpt_forward.7} parent=11 // pred_check_branch
        %242 = sbr.rel (%p240) target = $region20
      $region19: #{mosaic_gpt_forward.7} parent=11 // pred_region
        _
      $region20: #{mosaic_gpt_forward.7} parent=11 // pred_fallthru
        _
      // Predicated region
      $region21: #{mosaic_gpt_forward.7} parent=11 // pred_check
        %p243 = pneg %p117
      $region22: #{mosaic_gpt_forward.7} parent=11 // pred_check_branch
        %245 = sbr.rel (%p243) target = $region24
      $region23: #{mosaic_gpt_forward.7} parent=11 // pred_region
        _
      $region24: #{mosaic_gpt_forward.7} parent=11 // pred_fallthru
        _
      // Predicated region
      $region25: #{mosaic_gpt_forward.7} parent=11 // pred_check
        %p246 = pneg %p138
      $region26: #{mosaic_gpt_forward.7} parent=11 // pred_check_branch
        %248 = sbr.rel (%p246) target = $region28
      $region27: #{mosaic_gpt_forward.7} parent=11 // pred_region
        _
      $region28: #{mosaic_gpt_forward.7} parent=11 // pred_fallthru
        _
    $region12: #{mosaic_gpt_forward.7} parent=5 // pred_fallthru
      _
    %p249 = scmp.lt.s32.totalorder %s14, 2
    // Predicated region
    $region29: #{mosaic_gpt_forward.7} parent=5 // pred_check
      %p250 = pneg %p249
    $region30: #{mosaic_gpt_forward.7} parent=5 // pred_check_branch
      %252 = sbr.rel (%p250) target = $region32
    $region31: #{mosaic_gpt_forward.7} parent=5 // pred_region
      // Predicated region
      $region33: #{mosaic_gpt_forward.7} parent=31 // pred_check
        %p253 = pneg %p48
      $region34: #{mosaic_gpt_forward.7} parent=31 // pred_check_branch
        %255 = sbr.rel (%p253) target = $region36
      $region35: #{mosaic_gpt_forward.7} parent=31 // pred_region
        %p256 = scmp.lt.s32.totalorder %s21, 1
        %s257 = scalar_select %p256, %s21, 1
        %p258 = scmp.lt.s32.totalorder %s22, 0
        %s259 = scalar_select %p258, %s22, 0
        %s260 = sadd.s32 %s259, %s257
        %s261 = smul.addr %s260, 8
        %s262 = scalar_lea.vmem %s0, %s261
      $region36: #{mosaic_gpt_forward.7} parent=31 // pred_fallthru
        _
    $region32: #{mosaic_gpt_forward.7} parent=5 // pred_fallthru
      _
    %p263 = scmp.le.s32.totalorder 1, %s14
    %p264 = scmp.lt.s32.totalorder %s14, 3
    %p265 = pnand %p263, %p264
    %p266 = pneg %p265
    // Predicated region
    $region37: #{mosaic_gpt_forward.7} parent=5 // pred_check
      _
    $region38: #{mosaic_gpt_forward.7} parent=5 // pred_check_branch
      %268 = sbr.rel (%p265) target = $region40
    $region39: #{mosaic_gpt_forward.7} parent=5 // pred_region
      %s269 = ssub.s32 %s14, 1
      %p270 = scmp.lt.s32.totalorder %s23, 1
      %s271 = scalar_select %p270, %s23, 1
      %p272 = scmp.lt.s32.totalorder %s24, 0
      %s273 = scalar_select %p272, %s24, 0
      %s274 = sadd.s32 %s273, %s271
      %s275 = smul.addr %s274, 8
      %s276 = scalar_lea.vmem %s0, %s275
      %p277 = pneg %p54
      %p278 = pneg %p51
      %p279 = pneg %p75
      %p280 = pneg %p72
      %p281 = pneg %p96
      %p282 = pneg %p93
      %p283 = pneg %p117
      %p284 = pneg %p114
      %p285 = pneg %p138
      %p286 = pneg %p135
      %p287 = pneg %p166
      %p288 = pneg %p163
      %p289 = scmp.lt.s32.totalorder %s23, 1
      %s290 = scalar_select %p289, %s23, 1
      %p291 = scmp.lt.s32.totalorder %s24, 0
      %s292 = scalar_select %p291, %s24, 0
      %s293 = smul.addr %s290, 4
      %s294 = sadd.s32 %s292, %s293
      %s295 = smul.addr %s294, 4
      %s296 = scalar_lea.vmem %s5, %s295
      %p297 = pneg %p194
      %p298 = pneg %p191
      %p299 = scmp.lt.s32.totalorder %s23, 1
      %s300 = scalar_select %p299, %s23, 1
      %p301 = scmp.lt.s32.totalorder %s24, 0
      %s302 = scalar_select %p301, %s24, 0
      %s303 = smul.addr %s300, 4
      %s304 = sadd.s32 %s302, %s303
      %s305 = smul.addr %s304, 4
      %s306 = scalar_lea.vmem %s6, %s305
      %p307 = pneg %p222
      %p308 = pneg %p219
      %p309 = scmp.lt.s32.totalorder %s23, 1
      %s310 = scalar_select %p309, %s23, 1
      %p311 = scmp.lt.s32.totalorder %s24, 0
      %s312 = scalar_select %p311, %s24, 0
      %s313 = smul.addr %s310, 4
      %s314 = sadd.s32 %s312, %s313
      %s315 = smul.addr %s314, 4
      %s316 = scalar_lea.vmem %s7, %s315
      %p317 = scmp.lt.s32.totalorder %s23, 1
      %s318 = scalar_select %p317, %s23, 1
      %p319 = scmp.lt.s32.totalorder %s24, 0
      %s320 = scalar_select %p319, %s24, 0
      %s321 = sadd.s32 %s320, %s318
      %s322 = smul.addr %s321, 8
      %s323 = scalar_lea.vmem %s0, %s322
      %p324 = scmp.lt.s32.totalorder %s23, 1
      %s325 = scalar_select %p324, %s23, 1
      %p326 = scmp.lt.s32.totalorder %s24, 0
      %s327 = scalar_select %p326, %s24, 0
      %s328 = smul.addr %s325, 4
      %s329 = sadd.s32 %s327, %s328
      %s330 = smul.addr %s329, 4
      %s331 = scalar_lea.vmem %s5, %s330
      %p332 = scmp.lt.s32.totalorder %s23, 1
      %s333 = scalar_select %p332, %s23, 1
      %p334 = scmp.lt.s32.totalorder %s24, 0
      %s335 = scalar_select %p334, %s24, 0
      %s336 = smul.addr %s333, 4
      %s337 = sadd.s32 %s335, %s336
      %s338 = smul.addr %s337, 4
      %s339 = scalar_lea.vmem %s6, %s338
      %p340 = scmp.lt.s32.totalorder %s23, 1
      %s341 = scalar_select %p340, %s23, 1
      %p342 = scmp.lt.s32.totalorder %s24, 0
      %s343 = scalar_select %p342, %s24, 0
      %s344 = smul.addr %s341, 4
      %s345 = sadd.s32 %s343, %s344
      %s346 = smul.addr %s345, 4
      %s347 = scalar_lea.vmem %s7, %s346
      %v349 = vld [vmem:[%s323] sm:$0xff]
      %v350 = vld [vmem:[%s1] sm:$0x1]
      %v351 = vld [vmem:[%s2] sm:$0x1]
      %vm352 = vcmask 261120
      %v353 = vsel %vm352, %v349, 0.0
      %354 = vadd.xlane.f32.xlu0 %v353
      %v355 = vpop.xlane.xlu0 %354
      %v356 = vrcp.pop 32.0
      %v357 = vmul.f32 32.0, %v356
      %v358 = vsub.f32 1.0, %v357
      %v359 = vmul.f32 %v356, %v358
      %v360 = vadd.f32 %v356, %v359
      %vm361 = vweird.f32 %v356
      %v362 = vsel %vm361, %v356, %v360
      %v363 = vmul.f32 %v355, %v362
      %v364 = vsub.f32 %v349, %v363
      %v365 = vmul.f32 %v364, %v364
      %v366 = vsel %vm352, %v365, 0.0
      %367 = vadd.xlane.f32.xlu0 %v366
      %v368 = vpop.xlane.xlu0 %367
      %v369 = vmul.f32 %v368, %v362
      %v370 = vadd.f32 %v369, 1e-05
      %v371 = vrsqrt.pop %v370
      %v372 = vmul.f32 %v371, %v370
      %v373 = vmul.f32 %v372, %v371
      %v374 = vmul.f32 0.5, %v373
      %v375 = vsub.f32 1.5, %v374
      %v376 = vmul.f32 %v371, %v375
      %vm377 = vweird.f32 %v370
      %vm378 = vweird.f32 %v371
      %vm379 = vmor %vm377, %vm378
      %v380 = vsel %vm379, %v371, %v376
      %v381 = vmul.f32 %v364, %v380
      %v383 = vperm.slane %v350, 0
      %v385 = vmul.f32 %v381, %v383
      %v387 = vperm.slane %v351, 0
      %v389 = vadd.f32 %v385, %v387
      %v390 = vpack.c.bf16 %v389, %v389
      %v391 = vld [vmem:[%s3] sm:$0xf]
      %v392 = vld [vmem:[%s3 + $0x4] sm:$0xf]
      %v393 = vld [vmem:[%s3 + $0x8] sm:$0xf]
      %v394 = vld [vmem:[%s3 + $0xc] sm:$0xf]
      %v395 = vld [vmem:[%s4] sm:$0x1]
      %v397 = vperm.slane %v395, 0
      %v403 = vunpack.c.l.b16 %v391
      %v404 = vunpack.c.l.b16 %v392
      %v405 = vunpack.c.l.b16 %v393
      %v406 = vunpack.c.l.b16 %v394
      %v407 = vpack.c.b16 %v404, %v403
      %v408 = vpack.c.b16 %v406, %v405
      %v412 = vsel %vm352, %v390, 0
      %414 = vmatpush.bf16.msra.mxu0 0
      %415 = vmatpush.bf16.msra.mxu0 0
      %416 = vmatpush.bf16.msra.mxu0 0
      %417 = vmatpush.bf16.msra.mxu0 0
      %418 = vmatpush.bf16.msra.mxu0 0
      %419 = vmatpush.bf16.msra.mxu0 0
      %420 = vmatpush.bf16.msra.mxu0 %v408
      %421 = vmatpush.bf16.msra.mxu0 %v407
      %422 = vmatmul.bf16.gmra.mxu0 %v412
      %v423 = vpop.f32.mrf.mxu0
      %v424 = vadd.f32 %v397, %v423
      %v425 = vpop.f32.mrf.mxu0
      %426 = vdwg.mxu0
      %v427 = vpack.c.bf16 %v424, %v424
      %vm428 = vcmask 60416
      %429 = vst.msk [vmem:[%s331] sm:$0xf] %vm428, %v427
      %431 = vrot.lane.b32.xlu0 %v427, 96
      %v432 = vpop.permute.xlu0 %431
      %434 = vst.msk [vmem:[%s339] sm:$0xf] %vm428, %v432
      %435 = vrot.lane.b32.xlu0 %v427, 64
      %v436 = vpop.permute.xlu0 %435
      %438 = vst.msk [vmem:[%s347] sm:$0xf] %vm428, %v436
      %439 = vrot.lane.b32.xlu0 %v427, 120
      %v440 = vpop.permute.xlu0 %439
      %s442 = scalar_lea.vmem %s331, 4
      %443 = vst.msk [vmem:[%s442] sm:$0xf] %vm428, %v440
      %444 = vrot.lane.b32.xlu0 %v427, 88
      %v445 = vpop.permute.xlu0 %444
      %s447 = scalar_lea.vmem %s339, 4
      %448 = vst.msk [vmem:[%s447] sm:$0xf] %vm428, %v445
      %449 = vrot.lane.b32.xlu0 %v427, 56
      %v450 = vpop.permute.xlu0 %449
      %s452 = scalar_lea.vmem %s347, 4
      %453 = vst.msk [vmem:[%s452] sm:$0xf] %vm428, %v450
      %454 = vrot.lane.b32.xlu0 %v427, 112
      %v455 = vpop.permute.xlu0 %454
      %s457 = scalar_lea.vmem %s331, 8
      %458 = vst.msk [vmem:[%s457] sm:$0xf] %vm428, %v455
      %459 = vrot.lane.b32.xlu0 %v427, 80
      %v460 = vpop.permute.xlu0 %459
      %s462 = scalar_lea.vmem %s339, 8
      %463 = vst.msk [vmem:[%s462] sm:$0xf] %vm428, %v460
      %464 = vrot.lane.b32.xlu0 %v427, 48
      %v465 = vpop.permute.xlu0 %464
      %s467 = scalar_lea.vmem %s347, 8
      %468 = vst.msk [vmem:[%s467] sm:$0xf] %vm428, %v465
      %469 = vrot.lane.b32.xlu0 %v427, 104
      %v470 = vpop.permute.xlu0 %469
      %s472 = scalar_lea.vmem %s331, 12
      %473 = vst.msk [vmem:[%s472] sm:$0xf] %vm428, %v470
      %474 = vrot.lane.b32.xlu0 %v427, 72
      %v475 = vpop.permute.xlu0 %474
      %s477 = scalar_lea.vmem %s339, 12
      %478 = vst.msk [vmem:[%s477] sm:$0xf] %vm428, %v475
      %479 = vrot.lane.b32.xlu0 %v427, 40
      %v480 = vpop.permute.xlu0 %479
      %s482 = scalar_lea.vmem %s347, 12
      %483 = vst.msk [vmem:[%s482] sm:$0xf] %vm428, %v480
      %p484 = scmp.lt.s32.totalorder %s23, 1
      %s485 = scalar_select %p484, %s23, 1
      %p486 = scmp.lt.s32.totalorder %s24, 0
      %s487 = scalar_select %p486, %s24, 0
      %s488 = smul.addr %s485, 4
      %s489 = sadd.s32 %s487, %s488
      %s490 = smul.addr %s489, 4
      %s491 = scalar_lea.vmem %s5, %s490
      %p492 = scmp.lt.s32.totalorder %s23, 1
      %s493 = scalar_select %p492, %s23, 1
      %p494 = scmp.lt.s32.totalorder %s24, 0
      %s495 = scalar_select %p494, %s24, 0
      %s496 = smul.addr %s493, 4
      %s497 = sadd.s32 %s495, %s496
      %s498 = smul.addr %s497, 4
      %s499 = scalar_lea.vmem %s6, %s498
      %p500 = scmp.lt.s32.totalorder %s23, 1
      %s501 = scalar_select %p500, %s23, 1
      %p502 = scmp.lt.s32.totalorder %s24, 0
      %s503 = scalar_select %p502, %s24, 0
      %s504 = smul.addr %s501, 4
      %s505 = sadd.s32 %s503, %s504
      %s506 = smul.addr %s505, 4
      %s507 = scalar_lea.vmem %s7, %s506
      // Predicated region
      $region41: #{mosaic_gpt_forward.7} parent=39 // pred_check
        %p508 = pneg %p163
      $region42: #{mosaic_gpt_forward.7} parent=39 // pred_check_branch
        %510 = sbr.rel (%p508) target = $region44
      $region43: #{mosaic_gpt_forward.7} parent=39 // pred_region
        _
      $region44: #{mosaic_gpt_forward.7} parent=39 // pred_fallthru
        _
      // Predicated region
      $region45: #{mosaic_gpt_forward.7} parent=39 // pred_check
        %p511 = pneg %p191
      $region46: #{mosaic_gpt_forward.7} parent=39 // pred_check_branch
        %513 = sbr.rel (%p511) target = $region48
      $region47: #{mosaic_gpt_forward.7} parent=39 // pred_region
        _
      $region48: #{mosaic_gpt_forward.7} parent=39 // pred_fallthru
        _
      // Predicated region
      $region49: #{mosaic_gpt_forward.7} parent=39 // pred_check
        %p514 = pneg %p219
      $region50: #{mosaic_gpt_forward.7} parent=39 // pred_check_branch
        %516 = sbr.rel (%p514) target = $region52
      $region51: #{mosaic_gpt_forward.7} parent=39 // pred_region
        _
      $region52: #{mosaic_gpt_forward.7} parent=39 // pred_fallthru
        _
    $region40: #{mosaic_gpt_forward.7} parent=5 // pred_fallthru
      _
    %p517 = scmp.le.s32.totalorder 2, %s14
    // Predicated region
    $region53: #{mosaic_gpt_forward.7} parent=5 // pred_check
      %p518 = pneg %p517
    $region54: #{mosaic_gpt_forward.7} parent=5 // pred_check_branch
      %520 = sbr.rel (%p518) target = $region56
    $region55: #{mosaic_gpt_forward.7} parent=5 // pred_region
      %s521 = ssub.s32 %s14, 2
      // Predicated region
      $region57: #{mosaic_gpt_forward.7} parent=55 // pred_check
        %p522 = pneg %p169
      $region58: #{mosaic_gpt_forward.7} parent=55 // pred_check_branch
        %524 = sbr.rel (%p522) target = $region60
      $region59: #{mosaic_gpt_forward.7} parent=55 // pred_region
        %p525 = scmp.lt.s32.totalorder %s25, 1
        %s526 = scalar_select %p525, %s25, 1
        %p527 = scmp.lt.s32.totalorder %s26, 0
        %s528 = scalar_select %p527, %s26, 0
        %s529 = smul.addr %s526, 4
        %s530 = sadd.s32 %s528, %s529
        %s531 = smul.addr %s530, 4
        %s532 = scalar_lea.vmem %s5, %s531
      $region60: #{mosaic_gpt_forward.7} parent=55 // pred_fallthru
        _
      // Predicated region
      $region61: #{mosaic_gpt_forward.7} parent=55 // pred_check
        %p533 = pneg %p197
      $region62: #{mosaic_gpt_forward.7} parent=55 // pred_check_branch
        %535 = sbr.rel (%p533) target = $region64
      $region63: #{mosaic_gpt_forward.7} parent=55 // pred_region
        %p536 = scmp.lt.s32.totalorder %s25, 1
        %s537 = scalar_select %p536, %s25, 1
        %p538 = scmp.lt.s32.totalorder %s26, 0
        %s539 = scalar_select %p538, %s26, 0
        %s540 = smul.addr %s537, 4
        %s541 = sadd.s32 %s539, %s540
        %s542 = smul.addr %s541, 4
        %s543 = scalar_lea.vmem %s6, %s542
      $region64: #{mosaic_gpt_forward.7} parent=55 // pred_fallthru
        _
      // Predicated region
      $region65: #{mosaic_gpt_forward.7} parent=55 // pred_check
        %p544 = pneg %p225
      $region66: #{mosaic_gpt_forward.7} parent=55 // pred_check_branch
        %546 = sbr.rel (%p544) target = $region68
      $region67: #{mosaic_gpt_forward.7} parent=55 // pred_region
        %p547 = scmp.lt.s32.totalorder %s25, 1
        %s548 = scalar_select %p547, %s25, 1
        %p549 = scmp.lt.s32.totalorder %s26, 0
        %s550 = scalar_select %p549, %s26, 0
        %s551 = smul.addr %s548, 4
        %s552 = sadd.s32 %s550, %s551
        %s553 = smul.addr %s552, 4
        %s554 = scalar_lea.vmem %s7, %s553
      $region68: #{mosaic_gpt_forward.7} parent=55 // pred_fallthru
        _
    $region56: #{mosaic_gpt_forward.7} parent=5 // pred_fallthru
      _
  $region6: #{mosaic_gpt_forward.7} parent=0 // loop_footer
    %s18 = sadd.s32 1, %s14
  $region7: #{mosaic_gpt_forward.7} parent=0 // loop_footer_branch
    %13 = sbr.rel target = $region3
  $region8: #{mosaic_gpt_forward.7} parent=0 // loop_exit
    _

// kernel: mosaic_gpt_forward.9
$region0: #{mosaic_gpt_forward.9}
  #allocation0 [shape = 'u32[]', space=smem, size = 0x4, offset = 0x4, fixed_abs, tag = 'smem constant byte address 0x4 - core index']
  #allocation1 [shape = 'u32[72,128]{1,0:T(1,128)}', space=vmem, size = 0x9000, scoped, tag = 'internal scratch']
  %s0 = inlined_call_operand.vmem [shape: f32[2,8,32], index: 0, kind: input, shape index: {}]
  %s1 = inlined_call_operand.vmem [shape: bf16[2,8,32], index: 1, kind: input, shape index: {}]
  %s2 = inlined_call_operand.vmem [shape: bf16[32,32], index: 2, kind: input, shape index: {}]
  %s3 = inlined_call_operand.vmem [shape: f32[1,32], index: 3, kind: input, shape index: {}]
  %s4 = inlined_call_operand.vmem [shape: f32[1,32], index: 4, kind: input, shape index: {}]
  %s5 = inlined_call_operand.vmem [shape: f32[1,32], index: 5, kind: input, shape index: {}]
  %s6 = inlined_call_operand.vmem [shape: bf16[32,128], index: 6, kind: input, shape index: {}]
  %s7 = inlined_call_operand.vmem [shape: f32[1,128], index: 7, kind: input, shape index: {}]
  %s8 = inlined_call_operand.vmem [shape: bf16[128,32], index: 8, kind: input, shape index: {}]
  %s9 = inlined_call_operand.vmem [shape: f32[1,32], index: 9, kind: input, shape index: {}]
  %s10 = inlined_call_operand.vmem [shape: f32[2,8,32], index: 10, kind: output, shape index: {}]
  %s11 = sld [smem:[#allocation0]]
  $region73: #{mosaic_gpt_forward.9} parent=0
    _
  %s13 = ssub.s32 1, %s11
  %s14 = scalar_select 0, %s13, %s11
  loop: start=0, step=1, limit=4
  $region2: #{mosaic_gpt_forward.9} parent=0 // loop_pre_header
    _
  $region3: #{mosaic_gpt_forward.9} parent=0 // loop_header
    %s16 = sphi 0, %s20
    %p17 = scmp.ge.s32.totalorder %s16, 4
    %s23 = sphi 0, %s35
    %s24 = sphi 0, %s31
    %s25 = sphi 0, %s23
    %s26 = sphi 0, %s24
    %s27 = sphi 0, %s25
    %s28 = sphi 0, %s26
    %s40 = sphi 0, %s42
    %s43 = sphi 0, %s40
    %s44 = sphi 0, %s43
    %s60 = sphi 0, %s44
    %s68 = sphi 0, %s70
    %s71 = sphi 0, %s68
    %s72 = sphi 0, %s71
    %s88 = sphi 0, %s72
    %s92 = sphi 0, %s92
    %s94 = sphi 0, %s92
    %s95 = sphi 0, %s94
    %s109 = sphi 0, %s95
    %s113 = sphi 0, %s113
    %s115 = sphi 0, %s113
    %s116 = sphi 0, %s115
    %s130 = sphi 0, %s116
    %s134 = sphi 0, %s134
    %s136 = sphi 0, %s134
    %s137 = sphi 0, %s136
    %s151 = sphi 0, %s137
    %s155 = sphi 0, %s155
    %s157 = sphi 0, %s155
    %s158 = sphi 0, %s157
    %s172 = sphi 0, %s158
    %s176 = sphi 0, %s176
    %s178 = sphi 0, %s176
    %s179 = sphi 0, %s178
    %s193 = sphi 0, %s179
    %s197 = sphi 0, %s197
    %s199 = sphi 0, %s197
    %s200 = sphi 0, %s199
    %s214 = sphi 0, %s200
    %s218 = sphi 0, %s218
    %s220 = sphi 0, %s218
    %s221 = sphi 0, %s220
    %s235 = sphi 0, %s221
    %s239 = sphi 0, %s239
    %s241 = sphi 0, %s239
    %s242 = sphi 0, %s241
    %s256 = sphi 0, %s242
    %s264 = sphi 0, %s266
    %s267 = sphi 0, %s264
    %s268 = sphi 0, %s267
    %s284 = sphi 0, %s268
  $region4: #{mosaic_gpt_forward.9} parent=0 // loop_header_branch
    %19 = sbr.rel (%p17) target = $region8
  $region5: #{mosaic_gpt_forward.9} parent=0 // loop_body
    %s21 = ssub.s32 %s16, 1
    %s22 = ssub.s32 %s16, 2
    %s29 = sadd.s32 1, %s24
    %p30 = scmp.ge.s32.totalorder %s29, 1
    %s31 = scalar_select %p30, 0, %s29
    %s32 = sadd.s32 1, %s23
    %s33 = scalar_select %p30, %s32, %s23
    %p34 = scmp.ge.s32.totalorder %s33, 2
    %s35 = scalar_select %p34, 0, %s33
    %s36 = ssub.s32 %s23, %s35
    %s37 = ssub.s32 %s24, %s31
    %s38 = sor.u32 %s36, %s37
    %p39 = scmp.eq.s32.totalorder %s38, 0
    %s41 = sadd.s32 %s40, 1
    %s42 = scalar_select %p39, %s40, %s41
    %p45 = pneg %p39
    %p46 = scmp.eq.s32.totalorder %s16, 1
    %p47 = por %p45, %p46
    %p48 = scmp.ne.s32.totalorder %s40, %s43
    %p49 = scmp.eq.s32.totalorder %s16, 0
    %p50 = por %p48, %p49
    %p51 = scmp.ne.s32.totalorder %s40, %s43
    %p52 = scmp.eq.s32.totalorder %s21, 1
    %p53 = por %p51, %p52
    %p54 = scmp.ne.s32.totalorder %s43, %s44
    %p55 = scmp.eq.s32.totalorder %s21, 0
    %p56 = por %p54, %p55
    %p57 = scmp.ne.s32.totalorder %s43, %s44
    %p58 = scmp.eq.s32.totalorder %s22, 1
    %p59 = por %p57, %p58
    %p61 = scmp.ne.s32.totalorder %s44, %s60
    %p62 = scmp.eq.s32.totalorder %s22, 0
    %p63 = por %p61, %p62
    %s64 = ssub.s32 %s23, %s35
    %s65 = ssub.s32 %s24, %s31
    %s66 = sor.u32 %s64, %s65
    %p67 = scmp.eq.s32.totalorder %s66, 0
    %s69 = sadd.s32 %s68, 1
    %s70 = scalar_select %p67, %s68, %s69
    %p73 = pneg %p67
    %p74 = scmp.eq.s32.totalorder %s16, 1
    %p75 = por %p73, %p74
    %p76 = scmp.ne.s32.totalorder %s68, %s71
    %p77 = scmp.eq.s32.totalorder %s16, 0
    %p78 = por %p76, %p77
    %p79 = scmp.ne.s32.totalorder %s68, %s71
    %p80 = scmp.eq.s32.totalorder %s21, 1
    %p81 = por %p79, %p80
    %p82 = scmp.ne.s32.totalorder %s71, %s72
    %p83 = scmp.eq.s32.totalorder %s21, 0
    %p84 = por %p82, %p83
    %p85 = scmp.ne.s32.totalorder %s71, %s72
    %p86 = scmp.eq.s32.totalorder %s22, 1
    %p87 = por %p85, %p86
    %p89 = scmp.ne.s32.totalorder %s72, %s88
    %p90 = scmp.eq.s32.totalorder %s22, 0
    %p91 = por %p89, %p90
    %s93 = sadd.s32 %s92, 1
    %p96 = scmp.eq.s32.totalorder %s16, 1
    %p97 = scmp.ne.s32.totalorder %s92, %s94
    %p98 = scmp.eq.s32.totalorder %s16, 0
    %p99 = por %p97, %p98
    %p100 = scmp.ne.s32.totalorder %s92, %s94
    %p101 = scmp.eq.s32.totalorder %s21, 1
    %p102 = por %p100, %p101
    %p103 = scmp.ne.s32.totalorder %s94, %s95
    %p104 = scmp.eq.s32.totalorder %s21, 0
    %p105 = por %p103, %p104
    %p106 = scmp.ne.s32.totalorder %s94, %s95
    %p107 = scmp.eq.s32.totalorder %s22, 1
    %p108 = por %p106, %p107
    %p110 = scmp.ne.s32.totalorder %s95, %s109
    %p111 = scmp.eq.s32.totalorder %s22, 0
    %p112 = por %p110, %p111
    %s114 = sadd.s32 %s113, 1
    %p117 = scmp.eq.s32.totalorder %s16, 1
    %p118 = scmp.ne.s32.totalorder %s113, %s115
    %p119 = scmp.eq.s32.totalorder %s16, 0
    %p120 = por %p118, %p119
    %p121 = scmp.ne.s32.totalorder %s113, %s115
    %p122 = scmp.eq.s32.totalorder %s21, 1
    %p123 = por %p121, %p122
    %p124 = scmp.ne.s32.totalorder %s115, %s116
    %p125 = scmp.eq.s32.totalorder %s21, 0
    %p126 = por %p124, %p125
    %p127 = scmp.ne.s32.totalorder %s115, %s116
    %p128 = scmp.eq.s32.totalorder %s22, 1
    %p129 = por %p127, %p128
    %p131 = scmp.ne.s32.totalorder %s116, %s130
    %p132 = scmp.eq.s32.totalorder %s22, 0
    %p133 = por %p131, %p132
    %s135 = sadd.s32 %s134, 1
    %p138 = scmp.eq.s32.totalorder %s16, 1
    %p139 = scmp.ne.s32.totalorder %s134, %s136
    %p140 = scmp.eq.s32.totalorder %s16, 0
    %p141 = por %p139, %p140
    %p142 = scmp.ne.s32.totalorder %s134, %s136
    %p143 = scmp.eq.s32.totalorder %s21, 1
    %p144 = por %p142, %p143
    %p145 = scmp.ne.s32.totalorder %s136, %s137
    %p146 = scmp.eq.s32.totalorder %s21, 0
    %p147 = por %p145, %p146
    %p148 = scmp.ne.s32.totalorder %s136, %s137
    %p149 = scmp.eq.s32.totalorder %s22, 1
    %p150 = por %p148, %p149
    %p152 = scmp.ne.s32.totalorder %s137, %s151
    %p153 = scmp.eq.s32.totalorder %s22, 0
    %p154 = por %p152, %p153
    %s156 = sadd.s32 %s155, 1
    %p159 = scmp.eq.s32.totalorder %s16, 1
    %p160 = scmp.ne.s32.totalorder %s155, %s157
    %p161 = scmp.eq.s32.totalorder %s16, 0
    %p162 = por %p160, %p161
    %p163 = scmp.ne.s32.totalorder %s155, %s157
    %p164 = scmp.eq.s32.totalorder %s21, 1
    %p165 = por %p163, %p164
    %p166 = scmp.ne.s32.totalorder %s157, %s158
    %p167 = scmp.eq.s32.totalorder %s21, 0
    %p168 = por %p166, %p167
    %p169 = scmp.ne.s32.totalorder %s157, %s158
    %p170 = scmp.eq.s32.totalorder %s22, 1
    %p171 = por %p169, %p170
    %p173 = scmp.ne.s32.totalorder %s158, %s172
    %p174 = scmp.eq.s32.totalorder %s22, 0
    %p175 = por %p173, %p174
    %s177 = sadd.s32 %s176, 1
    %p180 = scmp.eq.s32.totalorder %s16, 1
    %p181 = scmp.ne.s32.totalorder %s176, %s178
    %p182 = scmp.eq.s32.totalorder %s16, 0
    %p183 = por %p181, %p182
    %p184 = scmp.ne.s32.totalorder %s176, %s178
    %p185 = scmp.eq.s32.totalorder %s21, 1
    %p186 = por %p184, %p185
    %p187 = scmp.ne.s32.totalorder %s178, %s179
    %p188 = scmp.eq.s32.totalorder %s21, 0
    %p189 = por %p187, %p188
    %p190 = scmp.ne.s32.totalorder %s178, %s179
    %p191 = scmp.eq.s32.totalorder %s22, 1
    %p192 = por %p190, %p191
    %p194 = scmp.ne.s32.totalorder %s179, %s193
    %p195 = scmp.eq.s32.totalorder %s22, 0
    %p196 = por %p194, %p195
    %s198 = sadd.s32 %s197, 1
    %p201 = scmp.eq.s32.totalorder %s16, 1
    %p202 = scmp.ne.s32.totalorder %s197, %s199
    %p203 = scmp.eq.s32.totalorder %s16, 0
    %p204 = por %p202, %p203
    %p205 = scmp.ne.s32.totalorder %s197, %s199
    %p206 = scmp.eq.s32.totalorder %s21, 1
    %p207 = por %p205, %p206
    %p208 = scmp.ne.s32.totalorder %s199, %s200
    %p209 = scmp.eq.s32.totalorder %s21, 0
    %p210 = por %p208, %p209
    %p211 = scmp.ne.s32.totalorder %s199, %s200
    %p212 = scmp.eq.s32.totalorder %s22, 1
    %p213 = por %p211, %p212
    %p215 = scmp.ne.s32.totalorder %s200, %s214
    %p216 = scmp.eq.s32.totalorder %s22, 0
    %p217 = por %p215, %p216
    %s219 = sadd.s32 %s218, 1
    %p222 = scmp.eq.s32.totalorder %s16, 1
    %p223 = scmp.ne.s32.totalorder %s218, %s220
    %p224 = scmp.eq.s32.totalorder %s16, 0
    %p225 = por %p223, %p224
    %p226 = scmp.ne.s32.totalorder %s218, %s220
    %p227 = scmp.eq.s32.totalorder %s21, 1
    %p228 = por %p226, %p227
    %p229 = scmp.ne.s32.totalorder %s220, %s221
    %p230 = scmp.eq.s32.totalorder %s21, 0
    %p231 = por %p229, %p230
    %p232 = scmp.ne.s32.totalorder %s220, %s221
    %p233 = scmp.eq.s32.totalorder %s22, 1
    %p234 = por %p232, %p233
    %p236 = scmp.ne.s32.totalorder %s221, %s235
    %p237 = scmp.eq.s32.totalorder %s22, 0
    %p238 = por %p236, %p237
    %s240 = sadd.s32 %s239, 1
    %p243 = scmp.eq.s32.totalorder %s16, 1
    %p244 = scmp.ne.s32.totalorder %s239, %s241
    %p245 = scmp.eq.s32.totalorder %s16, 0
    %p246 = por %p244, %p245
    %p247 = scmp.ne.s32.totalorder %s239, %s241
    %p248 = scmp.eq.s32.totalorder %s21, 1
    %p249 = por %p247, %p248
    %p250 = scmp.ne.s32.totalorder %s241, %s242
    %p251 = scmp.eq.s32.totalorder %s21, 0
    %p252 = por %p250, %p251
    %p253 = scmp.ne.s32.totalorder %s241, %s242
    %p254 = scmp.eq.s32.totalorder %s22, 1
    %p255 = por %p253, %p254
    %p257 = scmp.ne.s32.totalorder %s242, %s256
    %p258 = scmp.eq.s32.totalorder %s22, 0
    %p259 = por %p257, %p258
    %s260 = ssub.s32 %s23, %s35
    %s261 = ssub.s32 %s24, %s31
    %s262 = sor.u32 %s260, %s261
    %p263 = scmp.eq.s32.totalorder %s262, 0
    %s265 = sadd.s32 %s264, 1
    %s266 = scalar_select %p263, %s264, %s265
    %p269 = pneg %p263
    %p270 = scmp.eq.s32.totalorder %s16, 1
    %p271 = por %p269, %p270
    %p272 = scmp.ne.s32.totalorder %s264, %s267
    %p273 = scmp.eq.s32.totalorder %s16, 0
    %p274 = por %p272, %p273
    %p275 = scmp.ne.s32.totalorder %s264, %s267
    %p276 = scmp.eq.s32.totalorder %s21, 1
    %p277 = por %p275, %p276
    %p278 = scmp.ne.s32.totalorder %s267, %s268
    %p279 = scmp.eq.s32.totalorder %s21, 0
    %p280 = por %p278, %p279
    %p281 = scmp.ne.s32.totalorder %s267, %s268
    %p282 = scmp.eq.s32.totalorder %s22, 1
    %p283 = por %p281, %p282
    %p285 = scmp.ne.s32.totalorder %s268, %s284
    %p286 = scmp.eq.s32.totalorder %s22, 0
    %p287 = por %p285, %p286
    %p288 = scmp.le.s32.totalorder 1, %s16
    %p289 = scmp.lt.s32.totalorder %s16, 3
    %p290 = pnand %p288, %p289
    %p291 = pneg %p290
    // Predicated region
    $region9: #{mosaic_gpt_forward.9} parent=5 // pred_check
      _
    $region10: #{mosaic_gpt_forward.9} parent=5 // pred_check_branch
      %293 = sbr.rel (%p290) target = $region12
    $region11: #{mosaic_gpt_forward.9} parent=5 // pred_region
      %s294 = ssub.s32 %s16, 1
      // Predicated region
      $region13: #{mosaic_gpt_forward.9} parent=11 // pred_check
        %p295 = pneg %p105
      $region14: #{mosaic_gpt_forward.9} parent=11 // pred_check_branch
        %297 = sbr.rel (%p295) target = $region16
      $region15: #{mosaic_gpt_forward.9} parent=11 // pred_region
        _
      $region16: #{mosaic_gpt_forward.9} parent=11 // pred_fallthru
        _
      // Predicated region
      $region17: #{mosaic_gpt_forward.9} parent=11 // pred_check
        %p298 = pneg %p126
      $region18: #{mosaic_gpt_forward.9} parent=11 // pred_check_branch
        %300 = sbr.rel (%p298) target = $region20
      $region19: #{mosaic_gpt_forward.9} parent=11 // pred_region
        _
      $region20: #{mosaic_gpt_forward.9} parent=11 // pred_fallthru
        _
      // Predicated region
      $region21: #{mosaic_gpt_forward.9} parent=11 // pred_check
        %p301 = pneg %p147
      $region22: #{mosaic_gpt_forward.9} parent=11 // pred_check_branch
        %303 = sbr.rel (%p301) target = $region24
      $region23: #{mosaic_gpt_forward.9} parent=11 // pred_region
        _
      $region24: #{mosaic_gpt_forward.9} parent=11 // pred_fallthru
        _
      // Predicated region
      $region25: #{mosaic_gpt_forward.9} parent=11 // pred_check
        %p304 = pneg %p168
      $region26: #{mosaic_gpt_forward.9} parent=11 // pred_check_branch
        %306 = sbr.rel (%p304) target = $region28
      $region27: #{mosaic_gpt_forward.9} parent=11 // pred_region
        _
      $region28: #{mosaic_gpt_forward.9} parent=11 // pred_fallthru
        _
      // Predicated region
      $region29: #{mosaic_gpt_forward.9} parent=11 // pred_check
        %p307 = pneg %p189
      $region30: #{mosaic_gpt_forward.9} parent=11 // pred_check_branch
        %309 = sbr.rel (%p307) target = $region32
      $region31: #{mosaic_gpt_forward.9} parent=11 // pred_region
        _
      $region32: #{mosaic_gpt_forward.9} parent=11 // pred_fallthru
        _
      // Predicated region
      $region33: #{mosaic_gpt_forward.9} parent=11 // pred_check
        %p310 = pneg %p210
      $region34: #{mosaic_gpt_forward.9} parent=11 // pred_check_branch
        %312 = sbr.rel (%p310) target = $region36
      $region35: #{mosaic_gpt_forward.9} parent=11 // pred_region
        _
      $region36: #{mosaic_gpt_forward.9} parent=11 // pred_fallthru
        _
      // Predicated region
      $region37: #{mosaic_gpt_forward.9} parent=11 // pred_check
        %p313 = pneg %p231
      $region38: #{mosaic_gpt_forward.9} parent=11 // pred_check_branch
        %315 = sbr.rel (%p313) target = $region40
      $region39: #{mosaic_gpt_forward.9} parent=11 // pred_region
        _
      $region40: #{mosaic_gpt_forward.9} parent=11 // pred_fallthru
        _
      // Predicated region
      $region41: #{mosaic_gpt_forward.9} parent=11 // pred_check
        %p316 = pneg %p252
      $region42: #{mosaic_gpt_forward.9} parent=11 // pred_check_branch
        %318 = sbr.rel (%p316) target = $region44
      $region43: #{mosaic_gpt_forward.9} parent=11 // pred_region
        _
      $region44: #{mosaic_gpt_forward.9} parent=11 // pred_fallthru
        _
    $region12: #{mosaic_gpt_forward.9} parent=5 // pred_fallthru
      _
    %p319 = scmp.lt.s32.totalorder %s16, 2
    // Predicated region
    $region45: #{mosaic_gpt_forward.9} parent=5 // pred_check
      %p320 = pneg %p319
    $region46: #{mosaic_gpt_forward.9} parent=5 // pred_check_branch
      %322 = sbr.rel (%p320) target = $region48
    $region47: #{mosaic_gpt_forward.9} parent=5 // pred_region
      // Predicated region
      $region49: #{mosaic_gpt_forward.9} parent=47 // pred_check
        %p323 = pneg %p50
      $region50: #{mosaic_gpt_forward.9} parent=47 // pred_check_branch
        %325 = sbr.rel (%p323) target = $region52
      $region51: #{mosaic_gpt_forward.9} parent=47 // pred_region
        %p326 = scmp.lt.s32.totalorder %s23, 1
        %s327 = scalar_select %p326, %s23, 1
        %p328 = scmp.lt.s32.totalorder %s24, 0
        %s329 = scalar_select %p328, %s24, 0
        %s330 = sadd.s32 %s329, %s327
        %s331 = smul.addr %s330, 8
        %s332 = scalar_lea.vmem %s0, %s331
      $region52: #{mosaic_gpt_forward.9} parent=47 // pred_fallthru
        _
      // Predicated region
      $region53: #{mosaic_gpt_forward.9} parent=47 // pred_check
        %p333 = pneg %p78
      $region54: #{mosaic_gpt_forward.9} parent=47 // pred_check_branch
        %335 = sbr.rel (%p333) target = $region56
      $region55: #{mosaic_gpt_forward.9} parent=47 // pred_region
        %p336 = scmp.lt.s32.totalorder %s23, 1
        %s337 = scalar_select %p336, %s23, 1
        %p338 = scmp.lt.s32.totalorder %s24, 0
        %s339 = scalar_select %p338, %s24, 0
        %s340 = sadd.s32 %s339, %s337
        %s341 = smul.addr %s340, 4
        %s342 = scalar_lea.vmem %s1, %s341
      $region56: #{mosaic_gpt_forward.9} parent=47 // pred_fallthru
        _
    $region48: #{mosaic_gpt_forward.9} parent=5 // pred_fallthru
      _
    %p343 = scmp.le.s32.totalorder 1, %s16
    %p344 = scmp.lt.s32.totalorder %s16, 3
    %p345 = pnand %p343, %p344
    %p346 = pneg %p345
    // Predicated region
    $region57: #{mosaic_gpt_forward.9} parent=5 // pred_check
      _
    $region58: #{mosaic_gpt_forward.9} parent=5 // pred_check_branch
      %348 = sbr.rel (%p345) target = $region60
    $region59: #{mosaic_gpt_forward.9} parent=5 // pred_region
      %s349 = ssub.s32 %s16, 1
      %p350 = scmp.lt.s32.totalorder %s25, 1
      %s351 = scalar_select %p350, %s25, 1
      %p352 = scmp.lt.s32.totalorder %s26, 0
      %s353 = scalar_select %p352, %s26, 0
      %s354 = sadd.s32 %s353, %s351
      %s355 = smul.addr %s354, 8
      %s356 = scalar_lea.vmem %s0, %s355
      %p357 = pneg %p56
      %p358 = pneg %p53
      %p359 = scmp.lt.s32.totalorder %s25, 1
      %s360 = scalar_select %p359, %s25, 1
      %p361 = scmp.lt.s32.totalorder %s26, 0
      %s362 = scalar_select %p361, %s26, 0
      %s363 = sadd.s32 %s362, %s360
      %s364 = smul.addr %s363, 4
      %s365 = scalar_lea.vmem %s1, %s364
      %p366 = pneg %p84
      %p367 = pneg %p81
      %p368 = pneg %p105
      %p369 = pneg %p102
      %p370 = pneg %p126
      %p371 = pneg %p123
      %p372 = pneg %p147
      %p373 = pneg %p144
      %p374 = pneg %p168
      %p375 = pneg %p165
      %p376 = pneg %p189
      %p377 = pneg %p186
      %p378 = pneg %p210
      %p379 = pneg %p207
      %p380 = pneg %p231
      %p381 = pneg %p228
      %p382 = pneg %p252
      %p383 = pneg %p249
      %p384 = pneg %p280
      %p385 = pneg %p277
      %p386 = scmp.lt.s32.totalorder %s25, 1
      %s387 = scalar_select %p386, %s25, 1
      %p388 = scmp.lt.s32.totalorder %s26, 0
      %s389 = scalar_select %p388, %s26, 0
      %s390 = sadd.s32 %s389, %s387
      %s391 = smul.addr %s390, 8
      %s392 = scalar_lea.vmem %s10, %s391
      %p393 = scmp.lt.s32.totalorder %s25, 1
      %s394 = scalar_select %p393, %s25, 1
      %p395 = scmp.lt.s32.totalorder %s26, 0
      %s396 = scalar_select %p395, %s26, 0
      %s397 = sadd.s32 %s396, %s394
      %s398 = smul.addr %s397, 8
      %s399 = scalar_lea.vmem %s0, %s398
      %p400 = scmp.lt.s32.totalorder %s25, 1
      %s401 = scalar_select %p400, %s25, 1
      %p402 = scmp.lt.s32.totalorder %s26, 0
      %s403 = scalar_select %p402, %s26, 0
      %s404 = sadd.s32 %s403, %s401
      %s405 = smul.addr %s404, 4
      %s406 = scalar_lea.vmem %s1, %s405
      %p407 = scmp.lt.s32.totalorder %s25, 1
      %s408 = scalar_select %p407, %s25, 1
      %p409 = scmp.lt.s32.totalorder %s26, 0
      %s410 = scalar_select %p409, %s26, 0
      %s411 = sadd.s32 %s410, %s408
      %s412 = smul.addr %s411, 8
      %s413 = scalar_lea.vmem %s10, %s412
      %v415 = vld [vmem:[%s399] sm:$0xff]
      %v416 = vld [vmem:[%s406] sm:$0xf]
      %v417 = vld [vmem:[%s2] sm:$0xf]
      %v418 = vld [vmem:[%s2 + $0x4] sm:$0xf]
      %v419 = vld [vmem:[%s2 + $0x8] sm:$0xf]
      %v420 = vld [vmem:[%s2 + $0xc] sm:$0xf]
      %v421 = vld [vmem:[%s3] sm:$0x1]
      %v423 = vperm.slane %v421, 0
      %v429 = vunpack.c.l.b16 %v417
      %v430 = vunpack.c.l.b16 %v418
      %v431 = vunpack.c.l.b16 %v419
      %v432 = vunpack.c.l.b16 %v420
      %v433 = vpack.c.b16 %v430, %v429
      %v434 = vpack.c.b16 %v432, %v431
      %vm437 = vcmask 261120
      %v439 = vsel %vm437, %v416, 0
      %441 = vmatpush.bf16.msra.mxu0 0
      %442 = vmatpush.bf16.msra.mxu0 0
      %443 = vmatpush.bf16.msra.mxu0 0
      %444 = vmatpush.bf16.msra.mxu0 0
      %445 = vmatpush.bf16.msra.mxu0 0
      %446 = vmatpush.bf16.msra.mxu0 0
      %447 = vmatpush.bf16.msra.mxu0 %v434
      %448 = vmatpush.bf16.msra.mxu0 %v433
      %449 = vmatmul.bf16.gmra.mxu0 %v439
      %v450 = vpop.f32.mrf.mxu0
      %v451 = vadd.f32 %v423, %v450
      %v452 = vpop.f32.mrf.mxu0
      %453 = vdwg.mxu0
      %v454 = vadd.f32 %v415, %v451
      %v455 = vld [vmem:[%s4] sm:$0x1]
      %v456 = vld [vmem:[%s5] sm:$0x1]
      %v457 = vsel %vm437, %v454, 0.0
      %458 = vadd.xlane.f32.xlu0 %v457
      %v459 = vpop.xlane.xlu0 %458
      %v460 = vrcp.pop 32.0
      %v461 = vmul.f32 32.0, %v460
      %v462 = vsub.f32 1.0, %v461
      %v463 = vmul.f32 %v460, %v462
      %v464 = vadd.f32 %v460, %v463
      %vm465 = vweird.f32 %v460
      %v466 = vsel %vm465, %v460, %v464
      %v467 = vmul.f32 %v459, %v466
      %v468 = vsub.f32 %v454, %v467
      %v469 = vmul.f32 %v468, %v468
      %v470 = vsel %vm437, %v469, 0.0
      %471 = vadd.xlane.f32.xlu0 %v470
      %v472 = vpop.xlane.xlu0 %471
      %v473 = vmul.f32 %v472, %v466
      %v474 = vadd.f32 %v473, 1e-05
      %v475 = vrsqrt.pop %v474
      %v476 = vmul.f32 %v475, %v474
      %v477 = vmul.f32 %v476, %v475
      %v478 = vmul.f32 0.5, %v477
      %v479 = vsub.f32 1.5, %v478
      %v480 = vmul.f32 %v475, %v479
      %vm481 = vweird.f32 %v474
      %vm482 = vweird.f32 %v475
      %vm483 = vmor %vm481, %vm482
      %v484 = vsel %vm483, %v475, %v480
      %v485 = vmul.f32 %v468, %v484
      %v487 = vperm.slane %v455, 0
      %v489 = vmul.f32 %v485, %v487
      %v491 = vperm.slane %v456, 0
      %v493 = vadd.f32 %v489, %v491
      %v494 = vpack.c.bf16 %v493, %v493
      %v495 = vld [vmem:[%s6] sm:$0xf]
      %v496 = vld [vmem:[%s6 + $0x4] sm:$0xf]
      %v497 = vld [vmem:[%s6 + $0x8] sm:$0xf]
      %v498 = vld [vmem:[%s6 + $0xc] sm:$0xf]
      %v499 = vld [vmem:[%s7] sm:$0x1]
      %v501 = vperm.slane %v499, 0
      %v507 = vunpack.c.l.b16 %v495
      %v508 = vunpack.c.l.b16 %v496
      %v509 = vunpack.c.l.b16 %v497
      %v510 = vunpack.c.l.b16 %v498
      %v511 = vpack.c.b16 %v508, %v507
      %v512 = vpack.c.b16 %v510, %v509
      %v516 = vsel %vm437, %v494, 0
      %518 = vmatpush.bf16.msra.mxu0 0
      %519 = vmatpush.bf16.msra.mxu0 0
      %520 = vmatpush.bf16.msra.mxu0 0
      %521 = vmatpush.bf16.msra.mxu0 0
      %522 = vmatpush.bf16.msra.mxu0 0
      %523 = vmatpush.bf16.msra.mxu0 0
      %524 = vmatpush.bf16.msra.mxu0 %v512
      %525 = vmatpush.bf16.msra.mxu0 %v511
      %526 = vmatmul.bf16.gmra.mxu0 %v516
      %v527 = vpop.f32.mrf.mxu0
      %v528 = vadd.f32 %v501, %v527
      %v529 = vpop.f32.mrf.mxu0
      %530 = vdwg.mxu0
      %v531 = vmul.f32 %v528, 0.5
      %v532 = vmul.f32 %v528, 0.70710677
      %v533 = vmul.f32 %v532, %v532
      %v534 = vmin.f32 16.0, %v533
      %v535 = vmul.f32 %v534, 2.1237322e-06
      %v536 = vadd.f32 %v535, 0.00028619796
      %v537 = vmul.f32 %v534, %v536
      %v538 = vadd.f32 %v537, 0.0036580483
      %v539 = vmul.f32 %v534, %v538
      %v540 = vadd.f32 %v539, 0.05243302
      %v541 = vmul.f32 %v534, %v540
      %v542 = vadd.f32 %v541, 0.18741608
      %v543 = vmul.f32 %v534, %v542
      %v544 = vadd.f32 %v543, 1.1283791
      %v545 = vmul.f32 %v532, %v544
      %v546 = vmul.f32 %v534, 3.8918573e-05
      %v547 = vadd.f32 %v546, 0.001143296
      %v548 = vmul.f32 %v534, %v547
      %v549 = vadd.f32 %v548, 0.014752088
      %v550 = vmul.f32 %v534, %v549
      %v551 = vadd.f32 %v550, 0.112945676
      %v552 = vmul.f32 %v534, %v551
      %v553 = vadd.f32 %v552, 0.4994258
      %v554 = vmul.f32 %v534, %v553
      %v555 = vadd.f32 %v554, 1.0
      %v556 = vrcp.pop %v555
      %v557 = vmul.f32 %v555, %v556
      %v558 = vsub.f32 1.0, %v557
      %v559 = vmul.f32 %v556, %v558
      %v560 = vadd.f32 %v556, %v559
      %vm561 = vweird.f32 %v555
      %vm562 = vweird.f32 %v556
      %vm563 = vmor %vm561, %vm562
      %v564 = vsel %vm563, %v556, %v560
      %v565 = vand.u32 2147483647, %v555
      %vm566 = vcmp.eq.f32.partialorder %v565, 8.507059e+37
      %v567 = vand.u32 %v555, 2147483648
      %v568 = vor.u32 1.1754944e-38, %v567
      %v569 = vsel %vm566, %v568, %v564
      %v570 = vmul.f32 %v545, %v569
      %v571 = vmin.f32 %v570, 1.0
      %v572 = vmax.f32 %v571, -1.0
      %v573 = vadd.f32 %v572, 1.0
      %v574 = vmul.f32 %v531, %v573
      %v575 = vpack.c.bf16 %v574, %v574
      %v576 = vld [vmem:[%s8] sm:$0xf]
      %v577 = vld [vmem:[%s8 + $0x4] sm:$0xf]
      %v578 = vld [vmem:[%s8 + $0x8] sm:$0xf]
      %v579 = vld [vmem:[%s8 + $0xc] sm:$0xf]
      %v580 = vld [vmem:[%s8 + $0x10] sm:$0xf]
      %v581 = vld [vmem:[%s8 + $0x14] sm:$0xf]
      %v582 = vld [vmem:[%s8 + $0x18] sm:$0xf]
      %v583 = vld [vmem:[%s8 + $0x1c] sm:$0xf]
      %v584 = vld [vmem:[%s8 + $0x20] sm:$0xf]
      %v585 = vld [vmem:[%s8 + $0x24] sm:$0xf]
      %v586 = vld [vmem:[%s8 + $0x28] sm:$0xf]
      %v587 = vld [vmem:[%s8 + $0x2c] sm:$0xf]
      %v588 = vld [vmem:[%s8 + $0x30] sm:$0xf]
      %v589 = vld [vmem:[%s8 + $0x34] sm:$0xf]
      %v590 = vld [vmem:[%s8 + $0x38] sm:$0xf]
      %v591 = vld [vmem:[%s8 + $0x3c] sm:$0xf]
      %v592 = vld [vmem:[%s9] sm:$0x1]
      %v594 = vperm.slane %v592, 0
      %v612 = vunpack.c.l.b16 %v576
      %v613 = vunpack.c.l.b16 %v577
      %v614 = vunpack.c.l.b16 %v578
      %v615 = vunpack.c.l.b16 %v579
      %v616 = vunpack.c.l.b16 %v580
      %v617 = vunpack.c.l.b16 %v581
      %v618 = vunpack.c.l.b16 %v582
      %v619 = vunpack.c.l.b16 %v583
      %v620 = vunpack.c.l.b16 %v584
      %v621 = vunpack.c.l.b16 %v585
      %v622 = vunpack.c.l.b16 %v586
      %v623 = vunpack.c.l.b16 %v587
      %v624 = vunpack.c.l.b16 %v588
      %v625 = vunpack.c.l.b16 %v589
      %v626 = vunpack.c.l.b16 %v590
      %v627 = vunpack.c.l.b16 %v591
      %v628 = vpack.c.b16 %v613, %v612
      %v629 = vpack.c.b16 %v615, %v614
      %v630 = vpack.c.b16 %v617, %v616
      %v631 = vpack.c.b16 %v619, %v618
      %v632 = vpack.c.b16 %v621, %v620
      %v633 = vpack.c.b16 %v623, %v622
      %v634 = vpack.c.b16 %v625, %v624
      %v635 = vpack.c.b16 %v627, %v626
      %644 = vmatpush.bf16.msra.mxu0 %v635
      %645 = vmatpush.bf16.msra.mxu0 %v634
      %646 = vmatpush.bf16.msra.mxu0 %v633
      %647 = vmatpush.bf16.msra.mxu0 %v632
      %648 = vmatpush.bf16.msra.mxu0 %v631
      %649 = vmatpush.bf16.msra.mxu0 %v630
      %650 = vmatpush.bf16.msra.mxu0 %v629
      %651 = vmatpush.bf16.msra.mxu0 %v628
      %652 = vmatmul.bf16.gmra.mxu0 %v575
      %v653 = vpop.f32.mrf.mxu0
      %v654 = vadd.f32 %v594, %v653
      %v655 = vpop.f32.mrf.mxu0
      %656 = vdwg.mxu0
      %v657 = vadd.f32 %v454, %v654
      %658 = vst.msk [vmem:[%s413] sm:$0xff] %vm437, %v657
      %p659 = scmp.lt.s32.totalorder %s25, 1
      %s660 = scalar_select %p659, %s25, 1
      %p661 = scmp.lt.s32.totalorder %s26, 0
      %s662 = scalar_select %p661, %s26, 0
      %s663 = sadd.s32 %s662, %s660
      %s664 = smul.addr %s663, 8
      %s665 = scalar_lea.vmem %s10, %s664
      // Predicated region
      $region61: #{mosaic_gpt_forward.9} parent=59 // pred_check
        %p666 = pneg %p277
      $region62: #{mosaic_gpt_forward.9} parent=59 // pred_check_branch
        %668 = sbr.rel (%p666) target = $region64
      $region63: #{mosaic_gpt_forward.9} parent=59 // pred_region
        _
      $region64: #{mosaic_gpt_forward.9} parent=59 // pred_fallthru
        _
    $region60: #{mosaic_gpt_forward.9} parent=5 // pred_fallthru
      _
    %p669 = scmp.le.s32.totalorder 2, %s16
    // Predicated region
    $region65: #{mosaic_gpt_forward.9} parent=5 // pred_check
      %p670 = pneg %p669
    $region66: #{mosaic_gpt_forward.9} parent=5 // pred_check_branch
      %672 = sbr.rel (%p670) target = $region68
    $region67: #{mosaic_gpt_forward.9} parent=5 // pred_region
      %s673 = ssub.s32 %s16, 2
      // Predicated region
      $region69: #{mosaic_gpt_forward.9} parent=67 // pred_check
        %p674 = pneg %p283
      $region70: #{mosaic_gpt_forward.9} parent=67 // pred_check_branch
        %676 = sbr.rel (%p674) target = $region72
      $region71: #{mosaic_gpt_forward.9} parent=67 // pred_region
        %p677 = scmp.lt.s32.totalorder %s27, 1
        %s678 = scalar_select %p677, %s27, 1
        %p679 = scmp.lt.s32.totalorder %s28, 0
        %s680 = scalar_select %p679, %s28, 0
        %s681 = sadd.s32 %s680, %s678
        %s682 = smul.addr %s681, 8
        %s683 = scalar_lea.vmem %s10, %s682
      $region72: #{mosaic_gpt_forward.9} parent=67 // pred_fallthru
        _
    $region68: #{mosaic_gpt_forward.9} parent=5 // pred_fallthru
      _
  $region6: #{mosaic_gpt_forward.9} parent=0 // loop_footer
    %s20 = sadd.s32 1, %s16
  $region7: #{mosaic_gpt_forward.9} parent=0 // loop_footer_branch
    %15 = sbr.rel target = $region3
  $region8: #{mosaic_gpt_forward.9} parent=0 // loop_exit
    _

// kernel: mosaic_gpt_forward.8
$region0: #{mosaic_gpt_forward.8}
  #allocation0 [shape = 'u32[]', space=smem, size = 0x4, offset = 0x4, fixed_abs, tag = 'smem constant byte address 0x4 - core index']
  #allocation1 [shape = 'u32[72,128]{1,0:T(1,128)}', space=vmem, size = 0x9000, scoped, tag = 'internal scratch']
  #allocation2 [shape = 'f32[4,8,1]{2,1,0:T(8,128)}', space=vmem, size = 0x4000, scoped, tag = 'scratch operand']
  #allocation3 [shape = 'f32[4,8,1]{2,1,0:T(8,128)}', space=vmem, size = 0x4000, scoped, tag = 'scratch operand']
  #allocation4 [shape = 'f32[4,8,8]{2,1,0:T(8,128)}', space=vmem, size = 0x4000, scoped, tag = 'scratch operand']
  %s0 = inlined_call_operand.vmem [shape: bf16[2,4,8,8], index: 0, kind: input, shape index: {}]
  %s1 = inlined_call_operand.vmem [shape: bf16[2,4,8,8], index: 1, kind: input, shape index: {}]
  %s2 = inlined_call_operand.vmem [shape: bf16[2,4,8,8], index: 2, kind: input, shape index: {}]
  %s3 = inlined_call_operand.vmem [shape: bf16[2,8,32], index: 3, kind: output, shape index: {}]
  %s4 = sld [smem:[#allocation0]]
  $region57: #{mosaic_gpt_forward.8} parent=0
    _
  %s6 = ssub.s32 1, %s4
  %s7 = scalar_select 0, %s6, %s4
  loop: start=0, step=1, limit=4
  $region2: #{mosaic_gpt_forward.8} parent=0 // loop_pre_header
    _
  $region3: #{mosaic_gpt_forward.8} parent=0 // loop_header
    %s9 = sphi 0, %s13
    %p10 = scmp.ge.s32.totalorder %s9, 4
    %s16 = sphi 0, %s35
    %s17 = sphi 0, %s31
    %s18 = sphi 0, %s27
    %s19 = sphi 0, %s16
    %s20 = sphi 0, %s17
    %s21 = sphi 0, %s18
    %s22 = sphi 0, %s19
    %s23 = sphi 0, %s20
    %s24 = sphi 0, %s21
    %s40 = sphi 0, %s42
    %s43 = sphi 0, %s40
    %s44 = sphi 0, %s43
    %s60 = sphi 0, %s44
    %s72 = sphi 0, %s74
    %s75 = sphi 0, %s72
    %s76 = sphi 0, %s75
    %s92 = sphi 0, %s76
    %s104 = sphi 0, %s106
    %s107 = sphi 0, %s104
    %s108 = sphi 0, %s107
    %s124 = sphi 0, %s108
    %s132 = sphi 0, %s134
    %s135 = sphi 0, %s132
    %s136 = sphi 0, %s135
    %s152 = sphi 0, %s136
  $region4: #{mosaic_gpt_forward.8} parent=0 // loop_header_branch
    %12 = sbr.rel (%p10) target = $region8
  $region5: #{mosaic_gpt_forward.8} parent=0 // loop_body
    %s14 = ssub.s32 %s9, 1
    %s15 = ssub.s32 %s9, 2
    %s25 = sadd.s32 1, %s18
    %p26 = scmp.ge.s32.totalorder %s25, 1
    %s27 = scalar_select %p26, 0, %s25
    %s28 = sadd.s32 1, %s17
    %s29 = scalar_select %p26, %s28, %s17
    %p30 = scmp.ge.s32.totalorder %s29, 1
    %s31 = scalar_select %p30, 0, %s29
    %s32 = sadd.s32 1, %s16
    %s33 = scalar_select %p30, %s32, %s16
    %p34 = scmp.ge.s32.totalorder %s33, 2
    %s35 = scalar_select %p34, 0, %s33
    %s36 = ssub.s32 %s16, %s35
    %s37 = ssub.s32 %s17, %s31
    %s38 = sor.u32 %s36, %s37
    %p39 = scmp.eq.s32.totalorder %s38, 0
    %s41 = sadd.s32 %s40, 1
    %s42 = scalar_select %p39, %s40, %s41
    %p45 = pneg %p39
    %p46 = scmp.eq.s32.totalorder %s9, 1
    %p47 = por %p45, %p46
    %p48 = scmp.ne.s32.totalorder %s40, %s43
    %p49 = scmp.eq.s32.totalorder %s9, 0
    %p50 = por %p48, %p49
    %p51 = scmp.ne.s32.totalorder %s40, %s43
    %p52 = scmp.eq.s32.totalorder %s14, 1
    %p53 = por %p51, %p52
    %p54 = scmp.ne.s32.totalorder %s43, %s44
    %p55 = scmp.eq.s32.totalorder %s14, 0
    %p56 = por %p54, %p55
    %p57 = scmp.ne.s32.totalorder %s43, %s44
    %p58 = scmp.eq.s32.totalorder %s15, 1
    %p59 = por %p57, %p58
    %p61 = scmp.ne.s32.totalorder %s44, %s60
    %p62 = scmp.eq.s32.totalorder %s15, 0
    %p63 = por %p61, %p62
    %p64 = scmp.lt.s32.totalorder %s18, %s17
    %s65 = scalar_select %p64, %s18, %s17
    %p66 = scmp.lt.s32.totalorder %s27, %s31
    %s67 = scalar_select %p66, %s27, %s31
    %s68 = ssub.s32 %s16, %s35
    %s69 = ssub.s32 %s65, %s67
    %s70 = sor.u32 %s68, %s69
    %p71 = scmp.eq.s32.totalorder %s70, 0
    %s73 = sadd.s32 %s72, 1
    %s74 = scalar_select %p71, %s72, %s73
    %p77 = pneg %p71
    %p78 = scmp.eq.s32.totalorder %s9, 1
    %p79 = por %p77, %p78
    %p80 = scmp.ne.s32.totalorder %s72, %s75
    %p81 = scmp.eq.s32.totalorder %s9, 0
    %p82 = por %p80, %p81
    %p83 = scmp.ne.s32.totalorder %s72, %s75
    %p84 = scmp.eq.s32.totalorder %s14, 1
    %p85 = por %p83, %p84
    %p86 = scmp.ne.s32.totalorder %s75, %s76
    %p87 = scmp.eq.s32.totalorder %s14, 0
    %p88 = por %p86, %p87
    %p89 = scmp.ne.s32.totalorder %s75, %s76
    %p90 = scmp.eq.s32.totalorder %s15, 1
    %p91 = por %p89, %p90
    %p93 = scmp.ne.s32.totalorder %s76, %s92
    %p94 = scmp.eq.s32.totalorder %s15, 0
    %p95 = por %p93, %p94
    %p96 = scmp.lt.s32.totalorder %s18, %s17
    %s97 = scalar_select %p96, %s18, %s17
    %p98 = scmp.lt.s32.totalorder %s27, %s31
    %s99 = scalar_select %p98, %s27, %s31
    %s100 = ssub.s32 %s16, %s35
    %s101 = ssub.s32 %s97, %s99
    %s102 = sor.u32 %s100, %s101
    %p103 = scmp.eq.s32.totalorder %s102, 0
    %s105 = sadd.s32 %s104, 1
    %s106 = scalar_select %p103, %s104, %s105
    %p109 = pneg %p103
    %p110 = scmp.eq.s32.totalorder %s9, 1
    %p111 = por %p109, %p110
    %p112 = scmp.ne.s32.totalorder %s104, %s107
    %p113 = scmp.eq.s32.totalorder %s9, 0
    %p114 = por %p112, %p113
    %p115 = scmp.ne.s32.totalorder %s104, %s107
    %p116 = scmp.eq.s32.totalorder %s14, 1
    %p117 = por %p115, %p116
    %p118 = scmp.ne.s32.totalorder %s107, %s108
    %p119 = scmp.eq.s32.totalorder %s14, 0
    %p120 = por %p118, %p119
    %p121 = scmp.ne.s32.totalorder %s107, %s108
    %p122 = scmp.eq.s32.totalorder %s15, 1
    %p123 = por %p121, %p122
    %p125 = scmp.ne.s32.totalorder %s108, %s124
    %p126 = scmp.eq.s32.totalorder %s15, 0
    %p127 = por %p125, %p126
    %s128 = ssub.s32 %s16, %s35
    %s129 = ssub.s32 %s17, %s31
    %s130 = sor.u32 %s128, %s129
    %p131 = scmp.eq.s32.totalorder %s130, 0
    %s133 = sadd.s32 %s132, 1
    %s134 = scalar_select %p131, %s132, %s133
    %p137 = pneg %p131
    %p138 = scmp.eq.s32.totalorder %s9, 1
    %p139 = por %p137, %p138
    %p140 = scmp.ne.s32.totalorder %s132, %s135
    %p141 = scmp.eq.s32.totalorder %s9, 0
    %p142 = por %p140, %p141
    %p143 = scmp.ne.s32.totalorder %s132, %s135
    %p144 = scmp.eq.s32.totalorder %s14, 1
    %p145 = por %p143, %p144
    %p146 = scmp.ne.s32.totalorder %s135, %s136
    %p147 = scmp.eq.s32.totalorder %s14, 0
    %p148 = por %p146, %p147
    %p149 = scmp.ne.s32.totalorder %s135, %s136
    %p150 = scmp.eq.s32.totalorder %s15, 1
    %p151 = por %p149, %p150
    %p153 = scmp.ne.s32.totalorder %s136, %s152
    %p154 = scmp.eq.s32.totalorder %s15, 0
    %p155 = por %p153, %p154
    %p156 = scmp.le.s32.totalorder 1, %s9
    %p157 = scmp.lt.s32.totalorder %s9, 3
    %p158 = pnand %p156, %p157
    %p159 = pneg %p158
    // Predicated region
    $region9: #{mosaic_gpt_forward.8} parent=5 // pred_check
      _
    $region10: #{mosaic_gpt_forward.8} parent=5 // pred_check_branch
      %161 = sbr.rel (%p158) target = $region12
    $region11: #{mosaic_gpt_forward.8} parent=5 // pred_region
      %s162 = ssub.s32 %s9, 1
    $region12: #{mosaic_gpt_forward.8} parent=5 // pred_fallthru
      _
    %p163 = scmp.lt.s32.totalorder %s9, 2
    // Predicated region
    $region13: #{mosaic_gpt_forward.8} parent=5 // pred_check
      %p164 = pneg %p163
    $region14: #{mosaic_gpt_forward.8} parent=5 // pred_check_branch
      %166 = sbr.rel (%p164) target = $region16
    $region15: #{mosaic_gpt_forward.8} parent=5 // pred_region
      // Predicated region
      $region17: #{mosaic_gpt_forward.8} parent=15 // pred_check
        %p167 = pneg %p50
      $region18: #{mosaic_gpt_forward.8} parent=15 // pred_check_branch
        %169 = sbr.rel (%p167) target = $region20
      $region19: #{mosaic_gpt_forward.8} parent=15 // pred_region
        %p170 = scmp.lt.s32.totalorder %s16, 1
        %s171 = scalar_select %p170, %s16, 1
        %p172 = scmp.lt.s32.totalorder %s17, 0
        %s173 = scalar_select %p172, %s17, 0
        %s174 = smul.addr %s171, 4
        %s175 = sadd.s32 %s173, %s174
        %s176 = smul.addr %s175, 4
        %s177 = scalar_lea.vmem %s0, %s176
      $region20: #{mosaic_gpt_forward.8} parent=15 // pred_fallthru
        _
      // Predicated region
      $region21: #{mosaic_gpt_forward.8} parent=15 // pred_check
        %p178 = pneg %p82
      $region22: #{mosaic_gpt_forward.8} parent=15 // pred_check_branch
        %180 = sbr.rel (%p178) target = $region24
      $region23: #{mosaic_gpt_forward.8} parent=15 // pred_region
        %p181 = scmp.lt.s32.totalorder %s18, %s17
        %s182 = scalar_select %p181, %s18, %s17
        %p183 = scmp.lt.s32.totalorder %s16, 1
        %s184 = scalar_select %p183, %s16, 1
        %p185 = scmp.lt.s32.totalorder %s182, 0
        %s186 = scalar_select %p185, %s182, 0
        %s187 = smul.addr %s184, 4
        %s188 = sadd.s32 %s186, %s187
        %s189 = smul.addr %s188, 4
        %s190 = scalar_lea.vmem %s1, %s189
        %p191 = scmp.lt.s32.totalorder %s18, %s17
        %s192 = scalar_select %p191, %s18, %s17
      $region24: #{mosaic_gpt_forward.8} parent=15 // pred_fallthru
        _
      // Predicated region
      $region25: #{mosaic_gpt_forward.8} parent=15 // pred_check
        %p193 = pneg %p114
      $region26: #{mosaic_gpt_forward.8} parent=15 // pred_check_branch
        %195 = sbr.rel (%p193) target = $region28
      $region27: #{mosaic_gpt_forward.8} parent=15 // pred_region
        %p196 = scmp.lt.s32.totalorder %s18, %s17
        %s197 = scalar_select %p196, %s18, %s17
        %p198 = scmp.lt.s32.totalorder %s16, 1
        %s199 = scalar_select %p198, %s16, 1
        %p200 = scmp.lt.s32.totalorder %s197, 0
        %s201 = scalar_select %p200, %s197, 0
        %s202 = smul.addr %s199, 4
        %s203 = sadd.s32 %s201, %s202
        %s204 = smul.addr %s203, 4
        %s205 = scalar_lea.vmem %s2, %s204
        %p206 = scmp.lt.s32.totalorder %s18, %s17
        %s207 = scalar_select %p206, %s18, %s17
      $region28: #{mosaic_gpt_forward.8} parent=15 // pred_fallthru
        _
    $region16: #{mosaic_gpt_forward.8} parent=5 // pred_fallthru
      _
    %p208 = scmp.le.s32.totalorder 1, %s9
    %p209 = scmp.lt.s32.totalorder %s9, 3
    %p210 = pnand %p208, %p209
    %p211 = pneg %p210
    // Predicated region
    $region29: #{mosaic_gpt_forward.8} parent=5 // pred_check
      _
    $region30: #{mosaic_gpt_forward.8} parent=5 // pred_check_branch
      %213 = sbr.rel (%p210) target = $region32
    $region31: #{mosaic_gpt_forward.8} parent=5 // pred_region
      %s214 = ssub.s32 %s9, 1
      %p215 = scmp.lt.s32.totalorder %s19, 1
      %s216 = scalar_select %p215, %s19, 1
      %p217 = scmp.lt.s32.totalorder %s20, 0
      %s218 = scalar_select %p217, %s20, 0
      %s219 = smul.addr %s216, 4
      %s220 = sadd.s32 %s218, %s219
      %s221 = smul.addr %s220, 4
      %s222 = scalar_lea.vmem %s0, %s221
      %p223 = pneg %p56
      %p224 = pneg %p53
      %p225 = scmp.lt.s32.totalorder %s21, %s20
      %s226 = scalar_select %p225, %s21, %s20
      %p227 = scmp.lt.s32.totalorder %s19, 1
      %s228 = scalar_select %p227, %s19, 1
      %p229 = scmp.lt.s32.totalorder %s226, 0
      %s230 = scalar_select %p229, %s226, 0
      %s231 = smul.addr %s228, 4
      %s232 = sadd.s32 %s230, %s231
      %s233 = smul.addr %s232, 4
      %s234 = scalar_lea.vmem %s1, %s233
      %p235 = pneg %p88
      %p236 = pneg %p85
      %p237 = scmp.lt.s32.totalorder %s21, %s20
      %s238 = scalar_select %p237, %s21, %s20
      %p239 = scmp.lt.s32.totalorder %s19, 1
      %s240 = scalar_select %p239, %s19, 1
      %p241 = scmp.lt.s32.totalorder %s238, 0
      %s242 = scalar_select %p241, %s238, 0
      %s243 = smul.addr %s240, 4
      %s244 = sadd.s32 %s242, %s243
      %s245 = smul.addr %s244, 4
      %s246 = scalar_lea.vmem %s2, %s245
      %p247 = pneg %p120
      %p248 = pneg %p117
      %p249 = pneg %p148
      %p250 = pneg %p145
      %p251 = scmp.lt.s32.totalorder %s19, 1
      %s252 = scalar_select %p251, %s19, 1
      %p253 = scmp.lt.s32.totalorder %s20, 0
      %s254 = scalar_select %p253, %s20, 0
      %s255 = sadd.s32 %s254, %s252
      %s256 = smul.addr %s255, 4
      %s257 = scalar_lea.vmem %s3, %s256
      %p258 = scmp.lt.s32.totalorder %s19, 1
      %s259 = scalar_select %p258, %s19, 1
      %p260 = scmp.lt.s32.totalorder %s20, 0
      %s261 = scalar_select %p260, %s20, 0
      %s262 = smul.addr %s259, 4
      %s263 = sadd.s32 %s261, %s262
      %s264 = smul.addr %s263, 4
      %s265 = scalar_lea.vmem %s0, %s264
      %p266 = scmp.lt.s32.totalorder %s21, %s20
      %s267 = scalar_select %p266, %s21, %s20
      %p268 = scmp.lt.s32.totalorder %s19, 1
      %s269 = scalar_select %p268, %s19, 1
      %p270 = scmp.lt.s32.totalorder %s267, 0
      %s271 = scalar_select %p270, %s267, 0
      %s272 = smul.addr %s269, 4
      %s273 = sadd.s32 %s271, %s272
      %s274 = smul.addr %s273, 4
      %s275 = scalar_lea.vmem %s1, %s274
      %p276 = scmp.lt.s32.totalorder %s21, %s20
      %s277 = scalar_select %p276, %s21, %s20
      %p278 = scmp.lt.s32.totalorder %s21, %s20
      %s279 = scalar_select %p278, %s21, %s20
      %p280 = scmp.lt.s32.totalorder %s19, 1
      %s281 = scalar_select %p280, %s19, 1
      %p282 = scmp.lt.s32.totalorder %s279, 0
      %s283 = scalar_select %p282, %s279, 0
      %s284 = smul.addr %s281, 4
      %s285 = sadd.s32 %s283, %s284
      %s286 = smul.addr %s285, 4
      %s287 = scalar_lea.vmem %s2, %s286
      %p288 = scmp.lt.s32.totalorder %s21, %s20
      %s289 = scalar_select %p288, %s21, %s20
      %p290 = scmp.lt.s32.totalorder %s19, 1
      %s291 = scalar_select %p290, %s19, 1
      %p292 = scmp.lt.s32.totalorder %s20, 0
      %s293 = scalar_select %p292, %s20, 0
      %s294 = sadd.s32 %s293, %s291
      %s295 = smul.addr %s294, 4
      %s296 = scalar_lea.vmem %s3, %s295
      %p298 = scmp.eq.s32.totalorder %s21, 0
      // Predicated region
      $region33: #{mosaic_gpt_forward.8} parent=31 // pred_check
        %p299 = pneg %p298
      $region34: #{mosaic_gpt_forward.8} parent=31 // pred_check_branch
        %301 = sbr.rel (%p299) target = $region36
      $region35: #{mosaic_gpt_forward.8} parent=31 // pred_region
        %vm302 = vcmask 7168
        %303 = vst.msk [vmem:[#allocation2] sm:$0xff] %vm302, -inf
        %304 = vst.msk [vmem:[#allocation2 + $0x8] sm:$0xff] %vm302, -inf
        %305 = vst.msk [vmem:[#allocation2 + $0x10] sm:$0xff] %vm302, -inf
        %306 = vst.msk [vmem:[#allocation2 + $0x18] sm:$0xff] %vm302, -inf
        %307 = vst.msk [vmem:[#allocation3] sm:$0xff] %vm302, 0.0
        %308 = vst.msk [vmem:[#allocation3 + $0x8] sm:$0xff] %vm302, 0.0
        %309 = vst.msk [vmem:[#allocation3 + $0x10] sm:$0xff] %vm302, 0.0
        %310 = vst.msk [vmem:[#allocation3 + $0x18] sm:$0xff] %vm302, 0.0
        %vm311 = vcmask 64512
        %312 = vst.msk [vmem:[#allocation4] sm:$0xff] %vm311, 0.0
        %313 = vst.msk [vmem:[#allocation4 + $0x8] sm:$0xff] %vm311, 0.0
        %314 = vst.msk [vmem:[#allocation4 + $0x10] sm:$0xff] %vm311, 0.0
        %315 = vst.msk [vmem:[#allocation4 + $0x18] sm:$0xff] %vm311, 0.0
      $region36: #{mosaic_gpt_forward.8} parent=31 // pred_fallthru
        _
      %p316 = scmp.le.s32.totalorder %s21, %s20
      // Predicated region
      $region37: #{mosaic_gpt_forward.8} parent=31 // pred_check
        %p317 = pneg %p316
      $region38: #{mosaic_gpt_forward.8} parent=31 // pred_check_branch
        %319 = sbr.rel (%p317) target = $region40
      $region39: #{mosaic_gpt_forward.8} parent=31 // pred_region
        %v320 = vld [vmem:[%s265] sm:$0xf]
        %v321 = vld [vmem:[%s265 + $0x4] sm:$0xf]
        %v322 = vld [vmem:[%s265 + $0x8] sm:$0xf]
        %v323 = vld [vmem:[%s265 + $0xc] sm:$0xf]
        %v324 = vld [vmem:[%s275] sm:$0xf]
        %v325 = vld [vmem:[%s275 + $0x4] sm:$0xf]
        %v326 = vld [vmem:[%s275 + $0x8] sm:$0xf]
        %v327 = vld [vmem:[%s275 + $0xc] sm:$0xf]
        %v328 = vld [vmem:[%s287] sm:$0xf]
        %v329 = vld [vmem:[%s287 + $0x4] sm:$0xf]
        %v330 = vld [vmem:[%s287 + $0x8] sm:$0xf]
        %v331 = vld [vmem:[%s287 + $0xc] sm:$0xf]
        %vm332 = vcmask 64512
        %v334 = vsel %vm332, %v320, 0
        %v337 = vsel %vm332, %v324, 0
        %339 = vmatpush.bf16.xpose.msra.mxu0 0
        %340 = vmatpush.bf16.xpose.msra.mxu0 0
        %341 = vmatpush.bf16.xpose.msra.mxu0 0
        %342 = vmatpush.bf16.xpose.msra.mxu0 0
        %343 = vmatpush.bf16.xpose.msra.mxu0 0
        %344 = vmatpush.bf16.xpose.msra.mxu0 0
        %345 = vmatpush.bf16.xpose.msra.mxu0 0
        %346 = vmatpush.bf16.xpose.msra.mxu0 %v337
        %347 = vmatmul.bf16.gmra.mxu0 %v334
        %v348 = vpop.f32.mrf.mxu0
        %v349 = vadd.f32 0.0, %v348
        %v350 = vpop.f32.mrf.mxu0
        %351 = vdwg.mxu0
        %v353 = vsel %vm332, %v321, 0
        %v356 = vsel %vm332, %v325, 0
        %358 = vmatpush.bf16.xpose.msra.mxu0 0
        %359 = vmatpush.bf16.xpose.msra.mxu0 0
        %360 = vmatpush.bf16.xpose.msra.mxu0 0
        %361 = vmatpush.bf16.xpose.msra.mxu0 0
        %362 = vmatpush.bf16.xpose.msra.mxu0 0
        %363 = vmatpush.bf16.xpose.msra.mxu0 0
        %364 = vmatpush.bf16.xpose.msra.mxu0 0
        %365 = vmatpush.bf16.xpose.msra.mxu0 %v356
        %366 = vmatmul.bf16.gmra.mxu0 %v353
        %v367 = vpop.f32.mrf.mxu0
        %v368 = vadd.f32 0.0, %v367
        %v369 = vpop.f32.mrf.mxu0
        %370 = vdwg.mxu0
        %v372 = vsel %vm332, %v322, 0
        %v375 = vsel %vm332, %v326, 0
        %377 = vmatpush.bf16.xpose.msra.mxu0 0
        %378 = vmatpush.bf16.xpose.msra.mxu0 0
        %379 = vmatpush.bf16.xpose.msra.mxu0 0
        %380 = vmatpush.bf16.xpose.msra.mxu0 0
        %381 = vmatpush.bf16.xpose.msra.mxu0 0
        %382 = vmatpush.bf16.xpose.msra.mxu0 0
        %383 = vmatpush.bf16.xpose.msra.mxu0 0
        %384 = vmatpush.bf16.xpose.msra.mxu0 %v375
        %385 = vmatmul.bf16.gmra.mxu0 %v372
        %v386 = vpop.f32.mrf.mxu0
        %v387 = vadd.f32 0.0, %v386
        %v388 = vpop.f32.mrf.mxu0
        %389 = vdwg.mxu0
        %v391 = vsel %vm332, %v323, 0
        %v394 = vsel %vm332, %v327, 0
        %396 = vmatpush.bf16.xpose.msra.mxu0 0
        %397 = vmatpush.bf16.xpose.msra.mxu0 0
        %398 = vmatpush.bf16.xpose.msra.mxu0 0
        %399 = vmatpush.bf16.xpose.msra.mxu0 0
        %400 = vmatpush.bf16.xpose.msra.mxu0 0
        %401 = vmatpush.bf16.xpose.msra.mxu0 0
        %402 = vmatpush.bf16.xpose.msra.mxu0 0
        %403 = vmatpush.bf16.xpose.msra.mxu0 %v394
        %404 = vmatmul.bf16.gmra.mxu0 %v391
        %v405 = vpop.f32.mrf.mxu0
        %v406 = vadd.f32 0.0, %v405
        %v407 = vpop.f32.mrf.mxu0
        %408 = vdwg.mxu0
        %s409 = smul.u32 %s20, 8
        %v410 = vlaneseq
        %v411 = vshrl.u32 %v410, 7
        %v412 = vstv %s409
        %v413 = vadd.s32 %v412, %v411
        %s414 = smul.u32 %s21, 8
        %v415 = vlaneseq
        %v416 = vand.u32 %v415, 127
        %v417 = vstv %s414
        %v418 = vadd.s32 %v417, %v416
        %vm419 = vcmp.gt.s32.totalorder %v418, %v413
        %v420 = vsel %vm419, 1, 0
        %vm421 = vcmp.eq.s32.totalorder %v420, 1
        %v422 = vsel %vm421, -1e+30, %v349
        %v423 = vsel %vm421, -1e+30, %v368
        %v424 = vsel %vm421, -1e+30, %v387
        %v425 = vsel %vm421, -1e+30, %v406
        %v426 = vld [vmem:[#allocation2] sm:$0xff]
        %v427 = vld [vmem:[#allocation2 + $0x8] sm:$0xff]
        %v428 = vld [vmem:[#allocation2 + $0x10] sm:$0xff]
        %v429 = vld [vmem:[#allocation2 + $0x18] sm:$0xff]
        %v430 = vsel %vm332, %v422, -inf
        %431 = vmax.xlane.f32.xlu0 %v430
        %v432 = vpop.xlane.xlu0 %431
        %v433 = vsel %vm332, %v423, -inf
        %434 = vmax.xlane.f32.xlu0 %v433
        %v435 = vpop.xlane.xlu0 %434
        %v436 = vsel %vm332, %v424, -inf
        %437 = vmax.xlane.f32.xlu0 %v436
        %v438 = vpop.xlane.xlu0 %437
        %v439 = vsel %vm332, %v425, -inf
        %440 = vmax.xlane.f32.xlu0 %v439
        %v441 = vpop.xlane.xlu0 %440
        %v442 = vmax.f32 %v426, %v432
        %v443 = vmax.f32 %v427, %v435
        %v444 = vmax.f32 %v428, %v438
        %v445 = vmax.f32 %v429, %v441
        %v446 = vsub.f32 %v426, %v442
        %v447 = vsub.f32 %v427, %v443
        %v448 = vsub.f32 %v428, %v444
        %v449 = vsub.f32 %v429, %v445
        %v450 = vmul.f32 %v446, 1.442695
        %v451 = vpow.pop %v450
        %v452 = vmul.f32 %v447, 1.442695
        %v453 = vpow.pop %v452
        %v454 = vmul.f32 %v448, 1.442695
        %v455 = vpow.pop %v454
        %v456 = vmul.f32 %v449, 1.442695
        %v457 = vpow.pop %v456
        %459 = vset.pattern.permute.xlu0 0
        %460 = vperm.xlu0 %459, %v442
        %v461 = vpop.permute.xlu0 %460
        %464 = vset.pattern.permute.xlu0 0
        %465 = vperm.xlu0 %464, %v443
        %v466 = vpop.permute.xlu0 %465
        %469 = vset.pattern.permute.xlu0 0
        %470 = vperm.xlu0 %469, %v444
        %v471 = vpop.permute.xlu0 %470
        %474 = vset.pattern.permute.xlu0 0
        %475 = vperm.xlu0 %474, %v445
        %v476 = vpop.permute.xlu0 %475
        %v478 = vsub.f32 %v422, %v461
        %v479 = vsub.f32 %v423, %v466
        %v480 = vsub.f32 %v424, %v471
        %v481 = vsub.f32 %v425, %v476
        %v482 = vmul.f32 %v478, 1.442695
        %v483 = vpow.pop %v482
        %v484 = vmul.f32 %v479, 1.442695
        %v485 = vpow.pop %v484
        %v486 = vmul.f32 %v480, 1.442695
        %v487 = vpow.pop %v486
        %v488 = vmul.f32 %v481, 1.442695
        %v489 = vpow.pop %v488
        %v490 = vld [vmem:[#allocation3] sm:$0xff]
        %v491 = vld [vmem:[#allocation3 + $0x8] sm:$0xff]
        %v492 = vld [vmem:[#allocation3 + $0x10] sm:$0xff]
        %v493 = vld [vmem:[#allocation3 + $0x18] sm:$0xff]
        %v494 = vmul.f32 %v451, %v490
        %v495 = vmul.f32 %v453, %v491
        %v496 = vmul.f32 %v455, %v492
        %v497 = vmul.f32 %v457, %v493
        %v498 = vsel %vm332, %v483, 0.0
        %499 = vadd.xlane.f32.xlu0 %v498
        %v500 = vpop.xlane.xlu0 %499
        %v501 = vsel %vm332, %v485, 0.0
        %502 = vadd.xlane.f32.xlu0 %v501
        %v503 = vpop.xlane.xlu0 %502
        %v504 = vsel %vm332, %v487, 0.0
        %505 = vadd.xlane.f32.xlu0 %v504
        %v506 = vpop.xlane.xlu0 %505
        %v507 = vsel %vm332, %v489, 0.0
        %508 = vadd.xlane.f32.xlu0 %v507
        %v509 = vpop.xlane.xlu0 %508
        %v510 = vadd.f32 %v494, %v500
        %v511 = vadd.f32 %v495, %v503
        %v512 = vadd.f32 %v496, %v506
        %v513 = vadd.f32 %v497, %v509
        %vm514 = vcmask 7168
        %515 = vst.msk [vmem:[#allocation3] sm:$0xff] %vm514, %v510
        %516 = vst.msk [vmem:[#allocation3 + $0x8] sm:$0xff] %vm514, %v511
        %517 = vst.msk [vmem:[#allocation3 + $0x10] sm:$0xff] %vm514, %v512
        %518 = vst.msk [vmem:[#allocation3 + $0x18] sm:$0xff] %vm514, %v513
        %v519 = vld [vmem:[#allocation4] sm:$0xff]
        %v520 = vld [vmem:[#allocation4 + $0x8] sm:$0xff]
        %v521 = vld [vmem:[#allocation4 + $0x10] sm:$0xff]
        %v522 = vld [vmem:[#allocation4 + $0x18] sm:$0xff]
        %524 = vset.pattern.permute.xlu0 0
        %525 = vperm.xlu0 %524, %v451
        %v526 = vpop.permute.xlu0 %525
        %529 = vset.pattern.permute.xlu0 0
        %530 = vperm.xlu0 %529, %v453
        %v531 = vpop.permute.xlu0 %530
        %534 = vset.pattern.permute.xlu0 0
        %535 = vperm.xlu0 %534, %v455
        %v536 = vpop.permute.xlu0 %535
        %539 = vset.pattern.permute.xlu0 0
        %540 = vperm.xlu0 %539, %v457
        %v541 = vpop.permute.xlu0 %540
        %v543 = vmul.f32 %v526, %v519
        %v544 = vmul.f32 %v531, %v520
        %v545 = vmul.f32 %v536, %v521
        %v546 = vmul.f32 %v541, %v522
        %v547 = vpack.c.bf16 %v483, %v483
        %v548 = vpack.c.bf16 %v485, %v485
        %v549 = vpack.c.bf16 %v487, %v487
        %v550 = vpack.c.bf16 %v489, %v489
        %v552 = vsel %vm332, %v547, 0
        %vm554 = vcmask 1043456
        %v556 = vsel %vm554, %v328, 0
        %558 = vmatpush.bf16.msra.mxu0 0
        %559 = vmatpush.bf16.msra.mxu0 0
        %560 = vmatpush.bf16.msra.mxu0 0
        %561 = vmatpush.bf16.msra.mxu0 0
        %562 = vmatpush.bf16.msra.mxu0 0
        %563 = vmatpush.bf16.msra.mxu0 0
        %564 = vmatpush.bf16.msra.mxu0 0
        %565 = vmatpush.bf16.msra.mxu0 %v556
        %566 = vmatmul.bf16.gmra.mxu0 %v552
        %v567 = vpop.f32.mrf.mxu0
        %v568 = vadd.f32 0.0, %v567
        %v569 = vpop.f32.mrf.mxu0
        %570 = vdwg.mxu0
        %v572 = vsel %vm332, %v548, 0
        %v575 = vsel %vm554, %v329, 0
        %577 = vmatpush.bf16.msra.mxu0 0
        %578 = vmatpush.bf16.msra.mxu0 0
        %579 = vmatpush.bf16.msra.mxu0 0
        %580 = vmatpush.bf16.msra.mxu0 0
        %581 = vmatpush.bf16.msra.mxu0 0
        %582 = vmatpush.bf16.msra.mxu0 0
        %583 = vmatpush.bf16.msra.mxu0 0
        %584 = vmatpush.bf16.msra.mxu0 %v575
        %585 = vmatmul.bf16.gmra.mxu0 %v572
        %v586 = vpop.f32.mrf.mxu0
        %v587 = vadd.f32 0.0, %v586
        %v588 = vpop.f32.mrf.mxu0
        %589 = vdwg.mxu0
        %v591 = vsel %vm332, %v549, 0
        %v594 = vsel %vm554, %v330, 0
        %596 = vmatpush.bf16.msra.mxu0 0
        %597 = vmatpush.bf16.msra.mxu0 0
        %598 = vmatpush.bf16.msra.mxu0 0
        %599 = vmatpush.bf16.msra.mxu0 0
        %600 = vmatpush.bf16.msra.mxu0 0
        %601 = vmatpush.bf16.msra.mxu0 0
        %602 = vmatpush.bf16.msra.mxu0 0
        %603 = vmatpush.bf16.msra.mxu0 %v594
        %604 = vmatmul.bf16.gmra.mxu0 %v591
        %v605 = vpop.f32.mrf.mxu0
        %v606 = vadd.f32 0.0, %v605
        %v607 = vpop.f32.mrf.mxu0
        %608 = vdwg.mxu0
        %v610 = vsel %vm332, %v550, 0
        %v613 = vsel %vm554, %v331, 0
        %615 = vmatpush.bf16.msra.mxu0 0
        %616 = vmatpush.bf16.msra.mxu0 0
        %617 = vmatpush.bf16.msra.mxu0 0
        %618 = vmatpush.bf16.msra.mxu0 0
        %619 = vmatpush.bf16.msra.mxu0 0
        %620 = vmatpush.bf16.msra.mxu0 0
        %621 = vmatpush.bf16.msra.mxu0 0
        %622 = vmatpush.bf16.msra.mxu0 %v613
        %623 = vmatmul.bf16.gmra.mxu0 %v610
        %v624 = vpop.f32.mrf.mxu0
        %v625 = vadd.f32 0.0, %v624
        %v626 = vpop.f32.mrf.mxu0
        %627 = vdwg.mxu0
        %v628 = vadd.f32 %v543, %v568
        %v629 = vadd.f32 %v544, %v587
        %v630 = vadd.f32 %v545, %v606
        %v631 = vadd.f32 %v546, %v625
        %632 = vst.msk [vmem:[#allocation4] sm:$0xff] %vm332, %v628
        %633 = vst.msk [vmem:[#allocation4 + $0x8] sm:$0xff] %vm332, %v629
        %634 = vst.msk [vmem:[#allocation4 + $0x10] sm:$0xff] %vm332, %v630
        %635 = vst.msk [vmem:[#allocation4 + $0x18] sm:$0xff] %vm332, %v631
        %636 = vst.msk [vmem:[#allocation2] sm:$0xff] %vm514, %v442
        %637 = vst.msk [vmem:[#allocation2 + $0x8] sm:$0xff] %vm514, %v443
        %638 = vst.msk [vmem:[#allocation2 + $0x10] sm:$0xff] %vm514, %v444
        %639 = vst.msk [vmem:[#allocation2 + $0x18] sm:$0xff] %vm514, %v445
      $region40: #{mosaic_gpt_forward.8} parent=31 // pred_fallthru
        _
      // Predicated region
      $region41: #{mosaic_gpt_forward.8} parent=31 // pred_check
        %p640 = pneg %p298
      $region42: #{mosaic_gpt_forward.8} parent=31 // pred_check_branch
        %642 = sbr.rel (%p640) target = $region44
      $region43: #{mosaic_gpt_forward.8} parent=31 // pred_region
        %v643 = vld [vmem:[#allocation4] sm:$0xff]
        %v644 = vld [vmem:[#allocation4 + $0x8] sm:$0xff]
        %v645 = vld [vmem:[#allocation4 + $0x10] sm:$0xff]
        %v646 = vld [vmem:[#allocation4 + $0x18] sm:$0xff]
        %v647 = vld [vmem:[#allocation3] sm:$0xff]
        %v648 = vld [vmem:[#allocation3 + $0x8] sm:$0xff]
        %v649 = vld [vmem:[#allocation3 + $0x10] sm:$0xff]
        %v650 = vld [vmem:[#allocation3 + $0x18] sm:$0xff]
        %v651 = vrcp.pop %v647
        %v652 = vrcp.pop %v648
        %v653 = vrcp.pop %v649
        %v654 = vrcp.pop %v650
        %656 = vset.pattern.permute.xlu0 0
        %657 = vperm.xlu0 %656, %v651
        %v658 = vpop.permute.xlu0 %657
        %661 = vset.pattern.permute.xlu0 0
        %662 = vperm.xlu0 %661, %v652
        %v663 = vpop.permute.xlu0 %662
        %666 = vset.pattern.permute.xlu0 0
        %667 = vperm.xlu0 %666, %v653
        %v668 = vpop.permute.xlu0 %667
        %671 = vset.pattern.permute.xlu0 0
        %672 = vperm.xlu0 %671, %v654
        %v673 = vpop.permute.xlu0 %672
        %v675 = vmul.f32 %v643, %v658
        %v676 = vmul.f32 %v644, %v663
        %v677 = vmul.f32 %v645, %v668
        %v678 = vmul.f32 %v646, %v673
        %v679 = vpack.c.bf16 %v675, %v675
        %vm680 = vcmask 60416
        %681 = vst.msk [vmem:[%s296] sm:$0xf] %vm680, %v679
        %v682 = vpack.c.bf16 %v676, %v676
        %684 = vrot.lane.b32.xlu0 %v682, 8
        %v685 = vpop.permute.xlu0 %684
        %vm687 = vcmask 126016
        %688 = vst.msk [vmem:[%s296] sm:$0xf] %vm687, %v685
        %v689 = vpack.c.bf16 %v677, %v677
        %691 = vrot.lane.b32.xlu0 %v689, 16
        %v692 = vpop.permute.xlu0 %691
        %vm694 = vcmask 191616
        %695 = vst.msk [vmem:[%s296] sm:$0xf] %vm694, %v692
        %v696 = vpack.c.bf16 %v678, %v678
        %698 = vrot.lane.b32.xlu0 %v696, 24
        %v699 = vpop.permute.xlu0 %698
        %vm701 = vcmask 257216
        %702 = vst.msk [vmem:[%s296] sm:$0xf] %vm701, %v699
      $region44: #{mosaic_gpt_forward.8} parent=31 // pred_fallthru
        _
      %p703 = scmp.lt.s32.totalorder %s19, 1
      %s704 = scalar_select %p703, %s19, 1
      %p705 = scmp.lt.s32.totalorder %s20, 0
      %s706 = scalar_select %p705, %s20, 0
      %s707 = sadd.s32 %s706, %s704
      %s708 = smul.addr %s707, 4
      %s709 = scalar_lea.vmem %s3, %s708
      // Predicated region
      $region45: #{mosaic_gpt_forward.8} parent=31 // pred_check
        %p710 = pneg %p145
      $region46: #{mosaic_gpt_forward.8} parent=31 // pred_check_branch
        %712 = sbr.rel (%p710) target = $region48
      $region47: #{mosaic_gpt_forward.8} parent=31 // pred_region
        _
      $region48: #{mosaic_gpt_forward.8} parent=31 // pred_fallthru
        _
    $region32: #{mosaic_gpt_forward.8} parent=5 // pred_fallthru
      _
    %p713 = scmp.le.s32.totalorder 2, %s9
    // Predicated region
    $region49: #{mosaic_gpt_forward.8} parent=5 // pred_check
      %p714 = pneg %p713
    $region50: #{mosaic_gpt_forward.8} parent=5 // pred_check_branch
      %716 = sbr.rel (%p714) target = $region52
    $region51: #{mosaic_gpt_forward.8} parent=5 // pred_region
      %s717 = ssub.s32 %s9, 2
      // Predicated region
      $region53: #{mosaic_gpt_forward.8} parent=51 // pred_check
        %p718 = pneg %p151
      $region54: #{mosaic_gpt_forward.8} parent=51 // pred_check_branch
        %720 = sbr.rel (%p718) target = $region56
      $region55: #{mosaic_gpt_forward.8} parent=51 // pred_region
        %p721 = scmp.lt.s32.totalorder %s22, 1
        %s722 = scalar_select %p721, %s22, 1
        %p723 = scmp.lt.s32.totalorder %s23, 0
        %s724 = scalar_select %p723, %s23, 0
        %s725 = sadd.s32 %s724, %s722
        %s726 = smul.addr %s725, 4
        %s727 = scalar_lea.vmem %s3, %s726
      $region56: #{mosaic_gpt_forward.8} parent=51 // pred_fallthru
        _
    $region52: #{mosaic_gpt_forward.8} parent=5 // pred_fallthru
      _
  $region6: #{mosaic_gpt_forward.8} parent=0 // loop_footer
    %s13 = sadd.s32 1, %s9
  $region7: #{mosaic_gpt_forward.8} parent=0 // loop_footer_branch
    %8 = sbr.rel target = $region3
  $region8: #{mosaic_gpt_forward.8} parent=0 // loop_exit
    _

</llo_original>
